<compile_context>
chip_gen: v5e
topology: v5e:2x2
jax: 0.10.0
libtpu: 0.0.40
codegen_flags: <defaults>
</compile_context>

<pallas_src>
import functools

import jax
import jax.numpy as jnp
from jax import lax
from jax.experimental import pallas as pl
from jax.experimental.pallas import tpu as pltpu
import numpy as np

N_ADJ = 4
KS = 2 * N_ADJ + 1          # 9
DILS = (1, 1, 1, 2, 2, 4, 4)
FUSION_DIM = 256            # fixed in the PyTorch module


# --------------------------- pltpu.roll direction ---------------------------

@functools.lru_cache(maxsize=1)
def _roll_mode():
    """Probe pltpu.roll's rotation direction once (tiny throwaway kernel).

    Returns (use_roll, roll_like_jnp).  If the probe fails for any reason we
    fall back to slice+concatenate shifts (always correct, slightly slower).
    """
    def probe_kernel(o_ref):
        xi = lax.broadcasted_iota(jnp.int32, (8, 128), 1)
        ri = pltpu.roll(xi, 1, axis=1)
        rf = pltpu.roll(xi.astype(jnp.float32), 1, axis=1)
        rb = pltpu.roll(xi.astype(jnp.bfloat16), 1, axis=1)
        o_ref[...] = ri + rf.astype(jnp.int32) + rb.astype(jnp.int32)

    try:
        r = pl.pallas_call(
            probe_kernel,
            out_shape=jax.ShapeDtypeStruct((8, 128), jnp.int32))()
        v = int(np.asarray(jax.block_until_ready(r))[0, 0])
        if v == 3 * 127:      # out[0] == x[-1]  -> jnp.roll semantics
            return True, True
        if v == 3 * 1:        # out[0] == x[+1]  -> opposite direction
            return True, False
    except Exception:
        pass
    return False, True


def _shift_cols(x, s, use_roll, roll_like_jnp):
    """out[:, j] = x[:, (j + s) % n]  (columns live on lanes)."""
    n = x.shape[-1]
    m = s % n
    if m == 0:
        return x
    if use_roll:
        amt = (n - m) if roll_like_jnp else m      # XLU lane rotate
        return pltpu.roll(x, amt, axis=1)
    # fallback: two static lane slices + concat (always correct)
    return jnp.concatenate([x[:, m:], x[:, :m]], axis=1)


# --------------------------------- kernel ----------------------------------

def snake_kernel(x_ref,
                 wh_ref, bh_ref, sch_ref, shh_ref,
                 wr_ref, br_ref, scr_ref, shr_ref,
                 wf_ref, bf_ref,
                 wp1g_ref, wp1s_ref, bp1_ref,
                 wp2_ref, bp2_ref, wp3_ref, bp3_ref,
                 o_ref, *, bpg, L, use_roll, roll_like_jnp):
    x = x_ref[0]                                   # (C_feat, L*bpg) bf16

    def shift(v, s):
        return _shift_cols(v, s, use_roll, roll_like_jnp)

    def circ_conv(v_bf16, w, dil):
        # Stack the 9 circular taps along sublanes (the matmul K dim) and do a
        # single MXU matmul.  Tap shifts go through the (otherwise idle) XLU;
        # no tap ever touches HBM and the 9-way reduction stays inside the MXU.
        taps = [shift(v_bf16, (k - N_ADJ) * dil * bpg) for k in range(KS)]
        stacked = jnp.concatenate(taps, axis=0)            # (KS*Cin, L*bpg) bf16
        return jnp.dot(w, stacked, preferred_element_type=jnp.float32)

    # head block: circular conv -> relu -> (inference) batchnorm
    h = circ_conv(x, wh_ref[...], 1)
    h = jnp.maximum(h + bh_ref[...], 0.0) * sch_ref[...] + shh_ref[...]

    states = [h]
    cur = h
    for i, dil in enumerate(DILS):                 # unrolled at trace time
        y = circ_conv(cur.astype(jnp.bfloat16), wr_ref[i], dil)
        y = jnp.maximum(y + br_ref[i], 0.0) * scr_ref[i] + shr_ref[i]
        cur = y + cur                              # residual (f32)
        states.append(cur)

    # One aligned sublane concat + K-accumulated matmuls: the MXU does the
    # 8-state reduction internally instead of 8 read-modify-write passes over
    # a 256 x (L*bpg) f32 accumulator.
    state = jnp.concatenate(states, axis=0).astype(jnp.bfloat16)   # (8S, L*bpg)

    # fusion 1x1 conv, then per-circle global max via a log2(L) roll/max fold
    back = jnp.dot(wf_ref[...], state,
                   preferred_element_type=jnp.float32) + bf_ref[...]
    g = back
    amt = bpg                                      # same-circle columns are bpg apart
    for _ in range((L - 1).bit_length()):
        g = jnp.maximum(g, shift(g, amt))
        amt *= 2
    gexp = g.astype(jnp.bfloat16)                  # per-circle max, already "broadcast"

    # prediction head with wp1 split into [global | state] halves: no 512-row
    # concat and no explicit broadcast materialization of the global max.
    p = (jnp.dot(wp1g_ref[...], gexp, preferred_element_type=jnp.float32)
         + jnp.dot(wp1s_ref[...], state, preferred_element_type=jnp.float32)
         + bp1_ref[...])
    p = jnp.maximum(p, 0.0).astype(jnp.bfloat16)
    p = jnp.dot(wp2_ref[...], p, preferred_element_type=jnp.float32) + bp2_ref[...]
    p = jnp.maximum(p, 0.0).astype(jnp.bfloat16)
    p = jnp.dot(wp3_ref[...], p, preferred_element_type=jnp.float32) + bp3_ref[...]

    o_ref[0] = p.astype(o_ref.dtype)


# -------------------------------- wrapper -----------------------------------

def snake_net_forward(x, params):
    B, c_feat, L = x.shape
    S = params["w_head"].shape[0]
    n_res = len(DILS)

    # Wrap-once assumption of the circular-shift formulation (same as reference).
    assert L >= N_ADJ * max(DILS), "need L >= n_adj * max(dilation)"

    # Fold enough batch elements into the lane dim to reach >=128 lanes per grid
    # step; remaining groups stay on a "parallel" grid axis (so v7x's second
    # TensorCore still gets work when B is large; one step on 1-TC chips at B=2).
    bpg = min(B, max(1, -(-128 // L)))
    while B % bpg:
        bpg -= 1
    G = B // bpg
    Lb = L * bpg

    # interleaved layout: column = l * bpg + b   (b within the group)
    xg = (x.reshape(G, bpg, c_feat, L)
           .transpose(0, 2, 3, 1)
           .reshape(G, c_feat, Lb)
           .astype(jnp.bfloat16))

    eps = 1e-5

    def bn_fold(g, b, m, v):
        sc = g / jnp.sqrt(v + eps)
        return sc, b - m * sc

    sch, shh = bn_fold(params["bn_h_g"], params["bn_h_b"],
                       params["bn_h_m"], params["bn_h_v"])
    scr, shr = bn_fold(params["bn_r_g"], params["bn_r_b"],
                       params["bn_r_m"], params["bn_r_v"])

    bf16, f32 = jnp.bfloat16, jnp.float32
    # Flatten the 9 conv taps into the matmul K dim:  W_flat[o, k*Cin + c] = W[o, c, k]
    w_head = (jnp.transpose(params["w_head"], (0, 2, 1))          # (S, KS, Cf)
              .reshape(S, KS * c_feat).astype(bf16))
    w_res = (jnp.transpose(params["w_res"], (0, 1, 3, 2))          # (R, S, KS, S)
             .reshape(n_res, S, KS * S).astype(bf16))
    w_fus = params["w_fus"][:, :, 0].astype(bf16)
    wp1 = params["w_p1"][:, :, 0]
    wp1_g = wp1[:, :FUSION_DIM].astype(bf16)
    wp1_s = wp1[:, FUSION_DIM:].astype(bf16)
    wp2 = params["w_p2"][:, :, 0].astype(bf16)
    wp3 = params["w_p3"][:, :, 0].astype(bf16)

    args = (
        xg,
        w_head, params["b_head"].reshape(S, 1).astype(f32),
        sch.reshape(S, 1), shh.reshape(S, 1),
        w_res, params["b_res"].reshape(n_res, S, 1).astype(f32),
        scr.reshape(n_res, S, 1), shr.reshape(n_res, S, 1),
        w_fus, params["b_fus"].reshape(FUSION_DIM, 1).astype(f32),
        wp1_g, wp1_s, params["b_p1"].reshape(-1, 1).astype(f32),
        wp2, params["b_p2"].reshape(-1, 1).astype(f32),
        wp3, params["b_p3"].reshape(-1, 1).astype(f32),
    )

    def const_spec(a):
        r = a.ndim
        return pl.BlockSpec(a.shape, lambda g, _r=r: (0,) * _r)
    # TODO(synk): pipeline_mode=pl.Buffered(1) on these constant-index weight
    # specs would drop their double buffers (~0.6 MB); negligible at this size.

    in_specs = [pl.BlockSpec((1, c_feat, Lb), lambda g: (g, 0, 0))]
    in_specs += [const_spec(a) for a in args[1:]]

    use_roll, roll_like_jnp = _roll_mode()
    kernel = functools.partial(snake_kernel, bpg=bpg, L=L,
                               use_roll=use_roll, roll_like_jnp=roll_like_jnp)

    out = pl.pallas_call(
        kernel,
        out_shape=jax.ShapeDtypeStruct((G, 2, Lb), jnp.float32),
        grid=(G,),
        in_specs=in_specs,
        out_specs=pl.BlockSpec((1, 2, Lb), lambda g: (g, 0, 0)),
        compiler_params=pltpu.CompilerParams(
            dimension_semantics=("parallel",),
            vmem_limit_bytes=32 * 1024 * 1024),
    )(*args)

    # un-interleave back to (B, 2, L)
    return (out.reshape(G, 2, L, bpg)
               .transpose(0, 3, 1, 2)
               .reshape(B, 2, L))


# ----------------------------- pure-JAX reference ---------------------------

def ref_forward(x, params):
    eps = 1e-5

    def block(x, W, b, g, bb, m, v, dil):
        pad = N_ADJ * dil
        xp = jnp.concatenate([x[..., -pad:], x, x[..., :pad]], axis=-1)
        y = lax.conv_general_dilated(
            xp, W, window_strides=(1,), padding="VALID", rhs_dilation=(dil,),
            dimension_numbers=("NCH", "OIH", "NCH"))
        y = y + b[None, :, None]
        y = jnp.maximum(y, 0.0)
        scale = g / jnp.sqrt(v + eps)
        shift = bb - m * scale
        return y * scale[None, :, None] + shift[None, :, None]

    h = block(x, params["w_head"], params["b_head"], params["bn_h_g"],
              params["bn_h_b"], params["bn_h_m"], params["bn_h_v"], 1)
    states = [h]
    cur = h
    for i, dil in enumerate(DILS):
        y = block(cur, params["w_res"][i], params["b_res"][i], params["bn_r_g"][i],
                  params["bn_r_b"][i], params["bn_r_m"][i], params["bn_r_v"][i], dil)
        cur = y + cur
        states.append(cur)
    state = jnp.concatenate(states, axis=1)

    def conv1(x, W, b):
        return jnp.einsum("oc,bcl->bol", W[:, :, 0], x) + b[None, :, None]

    back = conv1(state, params["w_fus"], params["b_fus"])
    gmax = jnp.max(back, axis=2, keepdims=True)
    gexp = jnp.broadcast_to(gmax, (gmax.shape[0], gmax.shape[1], state.shape[2]))
    full = jnp.concatenate([gexp, state], axis=1)
    p = jnp.maximum(conv1(full, params["w_p1"], params["b_p1"]), 0.0)
    p = jnp.maximum(conv1(p, params["w_p2"], params["b_p2"]), 0.0)
    return conv1(p, params["w_p3"], params["b_p3"])


# ----------------------------------- main ------------------------------------

def make_params(key, state_dim, feature_dim):
    c_feat = feature_dim + 2
    S = state_dim
    n_res = len(DILS)
    cat_dim = S * (n_res + 1)
    ks = jax.random.split(key, 32)
    it = iter(ks)

    def conv_w(k, co, ci, kw):
        return (jax.random.normal(k, (co, ci, kw), jnp.float32) /
                np.sqrt(ci * kw)).astype(jnp.float32)

    def vec(k, n, scale=0.1):
        return scale * jax.random.normal(k, (n,), jnp.float32)

    p = {}
    p["w_head"] = conv_w(next(it), S, c_feat, KS)
    p["b_head"] = vec(next(it), S)
    p["bn_h_g"] = 1.0 + vec(next(it), S)
    p["bn_h_b"] = vec(next(it), S)
    p["bn_h_m"] = vec(next(it), S)
    p["bn_h_v"] = jax.random.uniform(next(it), (S,), jnp.float32, 0.5, 1.5)

    p["w_res"] = jnp.stack([conv_w(next(it), S, S, KS) for _ in range(n_res)])
    p["b_res"] = jnp.stack([vec(next(it), S) for _ in range(n_res)])
    p["bn_r_g"] = 1.0 + 0.1 * jax.random.normal(next(it), (n_res, S), jnp.float32)
    p["bn_r_b"] = 0.1 * jax.random.normal(next(it), (n_res, S), jnp.float32)
    p["bn_r_m"] = 0.1 * jax.random.normal(next(it), (n_res, S), jnp.float32)
    p["bn_r_v"] = jax.random.uniform(next(it), (n_res, S), jnp.float32, 0.5, 1.5)

    p["w_fus"] = conv_w(next(it), FUSION_DIM, cat_dim, 1)
    p["b_fus"] = vec(next(it), FUSION_DIM)
    p["w_p1"] = conv_w(next(it), 256, cat_dim + FUSION_DIM, 1)
    p["b_p1"] = vec(next(it), 256)
    p["w_p2"] = conv_w(next(it), 64, 256, 1)
    p["b_p2"] = vec(next(it), 64)
    p["w_p3"] = conv_w(next(it), 2, 64, 1)
    p["b_p3"] = vec(next(it), 2)
    return p


if __name__ == "__main__":
    state_dim = 32
    feature_dim = 30          # module input channels = feature_dim + 2 = 32
    B, L = 2, 64              # L must satisfy L >= n_adj * max(dilation) = 16

    key = jax.random.PRNGKey(0)
    kx, kp = jax.random.split(key)
    x = jax.random.normal(kx, (B, feature_dim + 2, L), jnp.float32)
    params = make_params(kp, state_dim, feature_dim)

    out = jax.block_until_ready(snake_net_forward(x, params))
    ref = jax.block_until_ready(ref_forward(x, params))

    assert out.shape == (B, 2, L)
    # bf16 matmul inputs with f32 accumulation -> slightly looser tolerance.
    np.testing.assert_allclose(np.asarray(out), np.asarray(ref),
                               rtol=5e-2, atol=5e-2)
    print("KERNEL_OK")
</pallas_src>

<mosaic_0001>
module attributes {stable_mosaic.version = 11 : i64} {
  func.func @snake_kernel(%arg0: i32, %arg1: memref<1x32x128xbf16, #tpu.memory_space<vmem>>, %arg2: memref<32x288xbf16, #tpu.memory_space<vmem>>, %arg3: memref<32x1xf32, #tpu.memory_space<vmem>>, %arg4: memref<32x1xf32, #tpu.memory_space<vmem>>, %arg5: memref<32x1xf32, #tpu.memory_space<vmem>>, %arg6: memref<7x32x288xbf16, #tpu.memory_space<vmem>>, %arg7: memref<7x32x1xf32, #tpu.memory_space<vmem>>, %arg8: memref<7x32x1xf32, #tpu.memory_space<vmem>>, %arg9: memref<7x32x1xf32, #tpu.memory_space<vmem>>, %arg10: memref<256x256xbf16, #tpu.memory_space<vmem>>, %arg11: memref<256x1xf32, #tpu.memory_space<vmem>>, %arg12: memref<256x256xbf16, #tpu.memory_space<vmem>>, %arg13: memref<256x256xbf16, #tpu.memory_space<vmem>>, %arg14: memref<256x1xf32, #tpu.memory_space<vmem>>, %arg15: memref<64x256xbf16, #tpu.memory_space<vmem>>, %arg16: memref<64x1xf32, #tpu.memory_space<vmem>>, %arg17: memref<2x64xbf16, #tpu.memory_space<vmem>>, %arg18: memref<2x1xf32, #tpu.memory_space<vmem>>, %arg19: memref<1x2x128xf32, #tpu.memory_space<vmem>>) attributes {dimension_semantics = [#tpu.dimension_semantics<parallel>], iteration_bounds = array<i64: 1>, scalar_prefetch = 0 : i64, scratch_operands = 0 : i64, tpu.core_type = #tpu.core_type<tc>, window_params = [{transform_indices = @transform_0, window_bounds = array<i64: 1, 32, 128>}, {pipeline_mode = #tpu.pipeline_mode<synchronous>, transform_indices = @transform_1, window_bounds = array<i64: 32, 288>}, {pipeline_mode = #tpu.pipeline_mode<synchronous>, transform_indices = @transform_2, window_bounds = array<i64: 32, 1>}, {pipeline_mode = #tpu.pipeline_mode<synchronous>, transform_indices = @transform_3, window_bounds = array<i64: 32, 1>}, {pipeline_mode = #tpu.pipeline_mode<synchronous>, transform_indices = @transform_4, window_bounds = array<i64: 32, 1>}, {pipeline_mode = #tpu.pipeline_mode<synchronous>, transform_indices = @transform_5, window_bounds = array<i64: 7, 32, 288>}, {pipeline_mode = #tpu.pipeline_mode<synchronous>, transform_indices = @transform_6, window_bounds = array<i64: 7, 32, 1>}, {pipeline_mode = #tpu.pipeline_mode<synchronous>, transform_indices = @transform_7, window_bounds = array<i64: 7, 32, 1>}, {pipeline_mode = #tpu.pipeline_mode<synchronous>, transform_indices = @transform_8, window_bounds = array<i64: 7, 32, 1>}, {pipeline_mode = #tpu.pipeline_mode<synchronous>, transform_indices = @transform_9, window_bounds = array<i64: 256, 256>}, {pipeline_mode = #tpu.pipeline_mode<synchronous>, transform_indices = @transform_10, window_bounds = array<i64: 256, 1>}, {pipeline_mode = #tpu.pipeline_mode<synchronous>, transform_indices = @transform_11, window_bounds = array<i64: 256, 256>}, {pipeline_mode = #tpu.pipeline_mode<synchronous>, transform_indices = @transform_12, window_bounds = array<i64: 256, 256>}, {pipeline_mode = #tpu.pipeline_mode<synchronous>, transform_indices = @transform_13, window_bounds = array<i64: 256, 1>}, {pipeline_mode = #tpu.pipeline_mode<synchronous>, transform_indices = @transform_14, window_bounds = array<i64: 64, 256>}, {pipeline_mode = #tpu.pipeline_mode<synchronous>, transform_indices = @transform_15, window_bounds = array<i64: 64, 1>}, {pipeline_mode = #tpu.pipeline_mode<synchronous>, transform_indices = @transform_16, window_bounds = array<i64: 2, 64>}, {pipeline_mode = #tpu.pipeline_mode<synchronous>, transform_indices = @transform_17, window_bounds = array<i64: 2, 1>}, {transform_indices = @transform_18, window_bounds = array<i64: 1, 2, 128>}]} {
    %c0 = arith.constant 0 : index
    %c0_0 = arith.constant 0 : index
    %c0_1 = arith.constant 0 : index
    %0 = vector.load %arg1[%c0, %c0_0, %c0_1] : memref<1x32x128xbf16, #tpu.memory_space<vmem>>, vector<1x32x128xbf16>
    %1 = vector.shape_cast %0 : vector<1x32x128xbf16> to vector<32x128xbf16>
    %c0_2 = arith.constant 0 : index
    %c0_3 = arith.constant 0 : index
    %2 = vector.load %arg2[%c0_2, %c0_3] : memref<32x288xbf16, #tpu.memory_space<vmem>>, vector<32x288xbf16>
    %3 = vector.extract_strided_slice %1 {offsets = [0, 120], sizes = [32, 8], strides = [1, 1]} : vector<32x128xbf16> to vector<32x8xbf16>
    %4 = vector.extract_strided_slice %1 {offsets = [0, 0], sizes = [32, 120], strides = [1, 1]} : vector<32x128xbf16> to vector<32x120xbf16>
    %5 = tpu.concatenate %3, %4 in 1 : vector<32x8xbf16>, vector<32x120xbf16> -> vector<32x128xbf16>
    %6 = vector.extract_strided_slice %1 {offsets = [0, 122], sizes = [32, 6], strides = [1, 1]} : vector<32x128xbf16> to vector<32x6xbf16>
    %7 = vector.extract_strided_slice %1 {offsets = [0, 0], sizes = [32, 122], strides = [1, 1]} : vector<32x128xbf16> to vector<32x122xbf16>
    %8 = tpu.concatenate %6, %7 in 1 : vector<32x6xbf16>, vector<32x122xbf16> -> vector<32x128xbf16>
    %9 = vector.extract_strided_slice %1 {offsets = [0, 124], sizes = [32, 4], strides = [1, 1]} : vector<32x128xbf16> to vector<32x4xbf16>
    %10 = vector.extract_strided_slice %1 {offsets = [0, 0], sizes = [32, 124], strides = [1, 1]} : vector<32x128xbf16> to vector<32x124xbf16>
    %11 = tpu.concatenate %9, %10 in 1 : vector<32x4xbf16>, vector<32x124xbf16> -> vector<32x128xbf16>
    %12 = vector.extract_strided_slice %1 {offsets = [0, 126], sizes = [32, 2], strides = [1, 1]} : vector<32x128xbf16> to vector<32x2xbf16>
    %13 = vector.extract_strided_slice %1 {offsets = [0, 0], sizes = [32, 126], strides = [1, 1]} : vector<32x128xbf16> to vector<32x126xbf16>
    %14 = tpu.concatenate %12, %13 in 1 : vector<32x2xbf16>, vector<32x126xbf16> -> vector<32x128xbf16>
    %15 = vector.extract_strided_slice %1 {offsets = [0, 2], sizes = [32, 126], strides = [1, 1]} : vector<32x128xbf16> to vector<32x126xbf16>
    %16 = vector.extract_strided_slice %1 {offsets = [0, 0], sizes = [32, 2], strides = [1, 1]} : vector<32x128xbf16> to vector<32x2xbf16>
    %17 = tpu.concatenate %15, %16 in 1 : vector<32x126xbf16>, vector<32x2xbf16> -> vector<32x128xbf16>
    %18 = vector.extract_strided_slice %1 {offsets = [0, 4], sizes = [32, 124], strides = [1, 1]} : vector<32x128xbf16> to vector<32x124xbf16>
    %19 = vector.extract_strided_slice %1 {offsets = [0, 0], sizes = [32, 4], strides = [1, 1]} : vector<32x128xbf16> to vector<32x4xbf16>
    %20 = tpu.concatenate %18, %19 in 1 : vector<32x124xbf16>, vector<32x4xbf16> -> vector<32x128xbf16>
    %21 = vector.extract_strided_slice %1 {offsets = [0, 6], sizes = [32, 122], strides = [1, 1]} : vector<32x128xbf16> to vector<32x122xbf16>
    %22 = vector.extract_strided_slice %1 {offsets = [0, 0], sizes = [32, 6], strides = [1, 1]} : vector<32x128xbf16> to vector<32x6xbf16>
    %23 = tpu.concatenate %21, %22 in 1 : vector<32x122xbf16>, vector<32x6xbf16> -> vector<32x128xbf16>
    %24 = vector.extract_strided_slice %1 {offsets = [0, 8], sizes = [32, 120], strides = [1, 1]} : vector<32x128xbf16> to vector<32x120xbf16>
    %25 = vector.extract_strided_slice %1 {offsets = [0, 0], sizes = [32, 8], strides = [1, 1]} : vector<32x128xbf16> to vector<32x8xbf16>
    %26 = tpu.concatenate %24, %25 in 1 : vector<32x120xbf16>, vector<32x8xbf16> -> vector<32x128xbf16>
    %27 = tpu.concatenate %5, %8, %11, %14, %1, %17, %20, %23, %26 in 0 : vector<32x128xbf16>, vector<32x128xbf16>, vector<32x128xbf16>, vector<32x128xbf16>, vector<32x128xbf16>, vector<32x128xbf16>, vector<32x128xbf16>, vector<32x128xbf16>, vector<32x128xbf16> -> vector<288x128xbf16>
    %cst = arith.constant dense<0.000000e+00> : vector<32x128xf32>
    %28 = tpu.matmul %2, %27, %cst {dimension_numbers = #tpu.dot_dimension_numbers<[1], [0], [0], [1], [0, 0, 1, 1], [], []>} : vector<32x288xbf16>, vector<288x128xbf16>, vector<32x128xf32> -> vector<32x128xf32>
    %c0_4 = arith.constant 0 : index
    %c0_5 = arith.constant 0 : index
    %29 = vector.load %arg3[%c0_4, %c0_5] : memref<32x1xf32, #tpu.memory_space<vmem>>, vector<32x1xf32>
    %30 = vector.broadcast %29 : vector<32x1xf32> to vector<32x128xf32>
    %31 = arith.addf %28, %30 : vector<32x128xf32>
    %cst_6 = arith.constant 0.000000e+00 : f32
    %32 = vector.broadcast %cst_6 : f32 to vector<32x128xf32>
    %33 = arith.maximumf %31, %32 : vector<32x128xf32>
    %c0_7 = arith.constant 0 : index
    %c0_8 = arith.constant 0 : index
    %34 = vector.load %arg4[%c0_7, %c0_8] : memref<32x1xf32, #tpu.memory_space<vmem>>, vector<32x1xf32>
    %35 = vector.broadcast %34 : vector<32x1xf32> to vector<32x128xf32>
    %36 = arith.mulf %33, %35 : vector<32x128xf32>
    %c0_9 = arith.constant 0 : index
    %c0_10 = arith.constant 0 : index
    %37 = vector.load %arg5[%c0_9, %c0_10] : memref<32x1xf32, #tpu.memory_space<vmem>>, vector<32x1xf32>
    %38 = vector.broadcast %37 : vector<32x1xf32> to vector<32x128xf32>
    %39 = arith.addf %36, %38 : vector<32x128xf32>
    %40 = arith.truncf %39 : vector<32x128xf32> to vector<32x128xbf16>
    %c0_11 = arith.constant 0 : index
    %c0_12 = arith.constant 0 : index
    %c0_13 = arith.constant 0 : index
    %41 = vector.load %arg6[%c0_11, %c0_12, %c0_13] : memref<7x32x288xbf16, #tpu.memory_space<vmem>>, vector<1x32x288xbf16>
    %42 = vector.shape_cast %41 : vector<1x32x288xbf16> to vector<32x288xbf16>
    %43 = vector.extract_strided_slice %40 {offsets = [0, 120], sizes = [32, 8], strides = [1, 1]} : vector<32x128xbf16> to vector<32x8xbf16>
    %44 = vector.extract_strided_slice %40 {offsets = [0, 0], sizes = [32, 120], strides = [1, 1]} : vector<32x128xbf16> to vector<32x120xbf16>
    %45 = tpu.concatenate %43, %44 in 1 : vector<32x8xbf16>, vector<32x120xbf16> -> vector<32x128xbf16>
    %46 = vector.extract_strided_slice %40 {offsets = [0, 122], sizes = [32, 6], strides = [1, 1]} : vector<32x128xbf16> to vector<32x6xbf16>
    %47 = vector.extract_strided_slice %40 {offsets = [0, 0], sizes = [32, 122], strides = [1, 1]} : vector<32x128xbf16> to vector<32x122xbf16>
    %48 = tpu.concatenate %46, %47 in 1 : vector<32x6xbf16>, vector<32x122xbf16> -> vector<32x128xbf16>
    %49 = vector.extract_strided_slice %40 {offsets = [0, 124], sizes = [32, 4], strides = [1, 1]} : vector<32x128xbf16> to vector<32x4xbf16>
    %50 = vector.extract_strided_slice %40 {offsets = [0, 0], sizes = [32, 124], strides = [1, 1]} : vector<32x128xbf16> to vector<32x124xbf16>
    %51 = tpu.concatenate %49, %50 in 1 : vector<32x4xbf16>, vector<32x124xbf16> -> vector<32x128xbf16>
    %52 = vector.extract_strided_slice %40 {offsets = [0, 126], sizes = [32, 2], strides = [1, 1]} : vector<32x128xbf16> to vector<32x2xbf16>
    %53 = vector.extract_strided_slice %40 {offsets = [0, 0], sizes = [32, 126], strides = [1, 1]} : vector<32x128xbf16> to vector<32x126xbf16>
    %54 = tpu.concatenate %52, %53 in 1 : vector<32x2xbf16>, vector<32x126xbf16> -> vector<32x128xbf16>
    %55 = vector.extract_strided_slice %40 {offsets = [0, 2], sizes = [32, 126], strides = [1, 1]} : vector<32x128xbf16> to vector<32x126xbf16>
    %56 = vector.extract_strided_slice %40 {offsets = [0, 0], sizes = [32, 2], strides = [1, 1]} : vector<32x128xbf16> to vector<32x2xbf16>
    %57 = tpu.concatenate %55, %56 in 1 : vector<32x126xbf16>, vector<32x2xbf16> -> vector<32x128xbf16>
    %58 = vector.extract_strided_slice %40 {offsets = [0, 4], sizes = [32, 124], strides = [1, 1]} : vector<32x128xbf16> to vector<32x124xbf16>
    %59 = vector.extract_strided_slice %40 {offsets = [0, 0], sizes = [32, 4], strides = [1, 1]} : vector<32x128xbf16> to vector<32x4xbf16>
    %60 = tpu.concatenate %58, %59 in 1 : vector<32x124xbf16>, vector<32x4xbf16> -> vector<32x128xbf16>
    %61 = vector.extract_strided_slice %40 {offsets = [0, 6], sizes = [32, 122], strides = [1, 1]} : vector<32x128xbf16> to vector<32x122xbf16>
    %62 = vector.extract_strided_slice %40 {offsets = [0, 0], sizes = [32, 6], strides = [1, 1]} : vector<32x128xbf16> to vector<32x6xbf16>
    %63 = tpu.concatenate %61, %62 in 1 : vector<32x122xbf16>, vector<32x6xbf16> -> vector<32x128xbf16>
    %64 = vector.extract_strided_slice %40 {offsets = [0, 8], sizes = [32, 120], strides = [1, 1]} : vector<32x128xbf16> to vector<32x120xbf16>
    %65 = vector.extract_strided_slice %40 {offsets = [0, 0], sizes = [32, 8], strides = [1, 1]} : vector<32x128xbf16> to vector<32x8xbf16>
    %66 = tpu.concatenate %64, %65 in 1 : vector<32x120xbf16>, vector<32x8xbf16> -> vector<32x128xbf16>
    %67 = tpu.concatenate %45, %48, %51, %54, %40, %57, %60, %63, %66 in 0 : vector<32x128xbf16>, vector<32x128xbf16>, vector<32x128xbf16>, vector<32x128xbf16>, vector<32x128xbf16>, vector<32x128xbf16>, vector<32x128xbf16>, vector<32x128xbf16>, vector<32x128xbf16> -> vector<288x128xbf16>
    %cst_14 = arith.constant dense<0.000000e+00> : vector<32x128xf32>
    %68 = tpu.matmul %42, %67, %cst_14 {dimension_numbers = #tpu.dot_dimension_numbers<[1], [0], [0], [1], [0, 0, 1, 1], [], []>} : vector<32x288xbf16>, vector<288x128xbf16>, vector<32x128xf32> -> vector<32x128xf32>
    %c0_15 = arith.constant 0 : index
    %c0_16 = arith.constant 0 : index
    %c0_17 = arith.constant 0 : index
    %69 = vector.load %arg7[%c0_15, %c0_16, %c0_17] : memref<7x32x1xf32, #tpu.memory_space<vmem>>, vector<1x32x1xf32>
    %70 = vector.shape_cast %69 : vector<1x32x1xf32> to vector<32x1xf32>
    %71 = vector.broadcast %70 : vector<32x1xf32> to vector<32x128xf32>
    %72 = arith.addf %68, %71 : vector<32x128xf32>
    %cst_18 = arith.constant 0.000000e+00 : f32
    %73 = vector.broadcast %cst_18 : f32 to vector<32x128xf32>
    %74 = arith.maximumf %72, %73 : vector<32x128xf32>
    %c0_19 = arith.constant 0 : index
    %c0_20 = arith.constant 0 : index
    %c0_21 = arith.constant 0 : index
    %75 = vector.load %arg8[%c0_19, %c0_20, %c0_21] : memref<7x32x1xf32, #tpu.memory_space<vmem>>, vector<1x32x1xf32>
    %76 = vector.shape_cast %75 : vector<1x32x1xf32> to vector<32x1xf32>
    %77 = vector.broadcast %76 : vector<32x1xf32> to vector<32x128xf32>
    %78 = arith.mulf %74, %77 : vector<32x128xf32>
    %c0_22 = arith.constant 0 : index
    %c0_23 = arith.constant 0 : index
    %c0_24 = arith.constant 0 : index
    %79 = vector.load %arg9[%c0_22, %c0_23, %c0_24] : memref<7x32x1xf32, #tpu.memory_space<vmem>>, vector<1x32x1xf32>
    %80 = vector.shape_cast %79 : vector<1x32x1xf32> to vector<32x1xf32>
    %81 = vector.broadcast %80 : vector<32x1xf32> to vector<32x128xf32>
    %82 = arith.addf %78, %81 : vector<32x128xf32>
    %83 = arith.addf %82, %39 : vector<32x128xf32>
    %84 = arith.truncf %83 : vector<32x128xf32> to vector<32x128xbf16>
    %c1 = arith.constant 1 : index
    %c0_25 = arith.constant 0 : index
    %c0_26 = arith.constant 0 : index
    %85 = vector.load %arg6[%c1, %c0_25, %c0_26] : memref<7x32x288xbf16, #tpu.memory_space<vmem>>, vector<1x32x288xbf16>
    %86 = vector.shape_cast %85 : vector<1x32x288xbf16> to vector<32x288xbf16>
    %87 = vector.extract_strided_slice %84 {offsets = [0, 120], sizes = [32, 8], strides = [1, 1]} : vector<32x128xbf16> to vector<32x8xbf16>
    %88 = vector.extract_strided_slice %84 {offsets = [0, 0], sizes = [32, 120], strides = [1, 1]} : vector<32x128xbf16> to vector<32x120xbf16>
    %89 = tpu.concatenate %87, %88 in 1 : vector<32x8xbf16>, vector<32x120xbf16> -> vector<32x128xbf16>
    %90 = vector.extract_strided_slice %84 {offsets = [0, 122], sizes = [32, 6], strides = [1, 1]} : vector<32x128xbf16> to vector<32x6xbf16>
    %91 = vector.extract_strided_slice %84 {offsets = [0, 0], sizes = [32, 122], strides = [1, 1]} : vector<32x128xbf16> to vector<32x122xbf16>
    %92 = tpu.concatenate %90, %91 in 1 : vector<32x6xbf16>, vector<32x122xbf16> -> vector<32x128xbf16>
    %93 = vector.extract_strided_slice %84 {offsets = [0, 124], sizes = [32, 4], strides = [1, 1]} : vector<32x128xbf16> to vector<32x4xbf16>
    %94 = vector.extract_strided_slice %84 {offsets = [0, 0], sizes = [32, 124], strides = [1, 1]} : vector<32x128xbf16> to vector<32x124xbf16>
    %95 = tpu.concatenate %93, %94 in 1 : vector<32x4xbf16>, vector<32x124xbf16> -> vector<32x128xbf16>
    %96 = vector.extract_strided_slice %84 {offsets = [0, 126], sizes = [32, 2], strides = [1, 1]} : vector<32x128xbf16> to vector<32x2xbf16>
    %97 = vector.extract_strided_slice %84 {offsets = [0, 0], sizes = [32, 126], strides = [1, 1]} : vector<32x128xbf16> to vector<32x126xbf16>
    %98 = tpu.concatenate %96, %97 in 1 : vector<32x2xbf16>, vector<32x126xbf16> -> vector<32x128xbf16>
    %99 = vector.extract_strided_slice %84 {offsets = [0, 2], sizes = [32, 126], strides = [1, 1]} : vector<32x128xbf16> to vector<32x126xbf16>
    %100 = vector.extract_strided_slice %84 {offsets = [0, 0], sizes = [32, 2], strides = [1, 1]} : vector<32x128xbf16> to vector<32x2xbf16>
    %101 = tpu.concatenate %99, %100 in 1 : vector<32x126xbf16>, vector<32x2xbf16> -> vector<32x128xbf16>
    %102 = vector.extract_strided_slice %84 {offsets = [0, 4], sizes = [32, 124], strides = [1, 1]} : vector<32x128xbf16> to vector<32x124xbf16>
    %103 = vector.extract_strided_slice %84 {offsets = [0, 0], sizes = [32, 4], strides = [1, 1]} : vector<32x128xbf16> to vector<32x4xbf16>
    %104 = tpu.concatenate %102, %103 in 1 : vector<32x124xbf16>, vector<32x4xbf16> -> vector<32x128xbf16>
    %105 = vector.extract_strided_slice %84 {offsets = [0, 6], sizes = [32, 122], strides = [1, 1]} : vector<32x128xbf16> to vector<32x122xbf16>
    %106 = vector.extract_strided_slice %84 {offsets = [0, 0], sizes = [32, 6], strides = [1, 1]} : vector<32x128xbf16> to vector<32x6xbf16>
    %107 = tpu.concatenate %105, %106 in 1 : vector<32x122xbf16>, vector<32x6xbf16> -> vector<32x128xbf16>
    %108 = vector.extract_strided_slice %84 {offsets = [0, 8], sizes = [32, 120], strides = [1, 1]} : vector<32x128xbf16> to vector<32x120xbf16>
    %109 = vector.extract_strided_slice %84 {offsets = [0, 0], sizes = [32, 8], strides = [1, 1]} : vector<32x128xbf16> to vector<32x8xbf16>
    %110 = tpu.concatenate %108, %109 in 1 : vector<32x120xbf16>, vector<32x8xbf16> -> vector<32x128xbf16>
    %111 = tpu.concatenate %89, %92, %95, %98, %84, %101, %104, %107, %110 in 0 : vector<32x128xbf16>, vector<32x128xbf16>, vector<32x128xbf16>, vector<32x128xbf16>, vector<32x128xbf16>, vector<32x128xbf16>, vector<32x128xbf16>, vector<32x128xbf16>, vector<32x128xbf16> -> vector<288x128xbf16>
    %cst_27 = arith.constant dense<0.000000e+00> : vector<32x128xf32>
    %112 = tpu.matmul %86, %111, %cst_27 {dimension_numbers = #tpu.dot_dimension_numbers<[1], [0], [0], [1], [0, 0, 1, 1], [], []>} : vector<32x288xbf16>, vector<288x128xbf16>, vector<32x128xf32> -> vector<32x128xf32>
    %c1_28 = arith.constant 1 : index
    %c0_29 = arith.constant 0 : index
    %c0_30 = arith.constant 0 : index
    %113 = vector.load %arg7[%c1_28, %c0_29, %c0_30] : memref<7x32x1xf32, #tpu.memory_space<vmem>>, vector<1x32x1xf32>
    %114 = vector.shape_cast %113 : vector<1x32x1xf32> to vector<32x1xf32>
    %115 = vector.broadcast %114 : vector<32x1xf32> to vector<32x128xf32>
    %116 = arith.addf %112, %115 : vector<32x128xf32>
    %cst_31 = arith.constant 0.000000e+00 : f32
    %117 = vector.broadcast %cst_31 : f32 to vector<32x128xf32>
    %118 = arith.maximumf %116, %117 : vector<32x128xf32>
    %c1_32 = arith.constant 1 : index
    %c0_33 = arith.constant 0 : index
    %c0_34 = arith.constant 0 : index
    %119 = vector.load %arg8[%c1_32, %c0_33, %c0_34] : memref<7x32x1xf32, #tpu.memory_space<vmem>>, vector<1x32x1xf32>
    %120 = vector.shape_cast %119 : vector<1x32x1xf32> to vector<32x1xf32>
    %121 = vector.broadcast %120 : vector<32x1xf32> to vector<32x128xf32>
    %122 = arith.mulf %118, %121 : vector<32x128xf32>
    %c1_35 = arith.constant 1 : index
    %c0_36 = arith.constant 0 : index
    %c0_37 = arith.constant 0 : index
    %123 = vector.load %arg9[%c1_35, %c0_36, %c0_37] : memref<7x32x1xf32, #tpu.memory_space<vmem>>, vector<1x32x1xf32>
    %124 = vector.shape_cast %123 : vector<1x32x1xf32> to vector<32x1xf32>
    %125 = vector.broadcast %124 : vector<32x1xf32> to vector<32x128xf32>
    %126 = arith.addf %122, %125 : vector<32x128xf32>
    %127 = arith.addf %126, %83 : vector<32x128xf32>
    %128 = arith.truncf %127 : vector<32x128xf32> to vector<32x128xbf16>
    %c2 = arith.constant 2 : index
    %c0_38 = arith.constant 0 : index
    %c0_39 = arith.constant 0 : index
    %129 = vector.load %arg6[%c2, %c0_38, %c0_39] : memref<7x32x288xbf16, #tpu.memory_space<vmem>>, vector<1x32x288xbf16>
    %130 = vector.shape_cast %129 : vector<1x32x288xbf16> to vector<32x288xbf16>
    %131 = vector.extract_strided_slice %128 {offsets = [0, 120], sizes = [32, 8], strides = [1, 1]} : vector<32x128xbf16> to vector<32x8xbf16>
    %132 = vector.extract_strided_slice %128 {offsets = [0, 0], sizes = [32, 120], strides = [1, 1]} : vector<32x128xbf16> to vector<32x120xbf16>
    %133 = tpu.concatenate %131, %132 in 1 : vector<32x8xbf16>, vector<32x120xbf16> -> vector<32x128xbf16>
    %134 = vector.extract_strided_slice %128 {offsets = [0, 122], sizes = [32, 6], strides = [1, 1]} : vector<32x128xbf16> to vector<32x6xbf16>
    %135 = vector.extract_strided_slice %128 {offsets = [0, 0], sizes = [32, 122], strides = [1, 1]} : vector<32x128xbf16> to vector<32x122xbf16>
    %136 = tpu.concatenate %134, %135 in 1 : vector<32x6xbf16>, vector<32x122xbf16> -> vector<32x128xbf16>
    %137 = vector.extract_strided_slice %128 {offsets = [0, 124], sizes = [32, 4], strides = [1, 1]} : vector<32x128xbf16> to vector<32x4xbf16>
    %138 = vector.extract_strided_slice %128 {offsets = [0, 0], sizes = [32, 124], strides = [1, 1]} : vector<32x128xbf16> to vector<32x124xbf16>
    %139 = tpu.concatenate %137, %138 in 1 : vector<32x4xbf16>, vector<32x124xbf16> -> vector<32x128xbf16>
    %140 = vector.extract_strided_slice %128 {offsets = [0, 126], sizes = [32, 2], strides = [1, 1]} : vector<32x128xbf16> to vector<32x2xbf16>
    %141 = vector.extract_strided_slice %128 {offsets = [0, 0], sizes = [32, 126], strides = [1, 1]} : vector<32x128xbf16> to vector<32x126xbf16>
    %142 = tpu.concatenate %140, %141 in 1 : vector<32x2xbf16>, vector<32x126xbf16> -> vector<32x128xbf16>
    %143 = vector.extract_strided_slice %128 {offsets = [0, 2], sizes = [32, 126], strides = [1, 1]} : vector<32x128xbf16> to vector<32x126xbf16>
    %144 = vector.extract_strided_slice %128 {offsets = [0, 0], sizes = [32, 2], strides = [1, 1]} : vector<32x128xbf16> to vector<32x2xbf16>
    %145 = tpu.concatenate %143, %144 in 1 : vector<32x126xbf16>, vector<32x2xbf16> -> vector<32x128xbf16>
    %146 = vector.extract_strided_slice %128 {offsets = [0, 4], sizes = [32, 124], strides = [1, 1]} : vector<32x128xbf16> to vector<32x124xbf16>
    %147 = vector.extract_strided_slice %128 {offsets = [0, 0], sizes = [32, 4], strides = [1, 1]} : vector<32x128xbf16> to vector<32x4xbf16>
    %148 = tpu.concatenate %146, %147 in 1 : vector<32x124xbf16>, vector<32x4xbf16> -> vector<32x128xbf16>
    %149 = vector.extract_strided_slice %128 {offsets = [0, 6], sizes = [32, 122], strides = [1, 1]} : vector<32x128xbf16> to vector<32x122xbf16>
    %150 = vector.extract_strided_slice %128 {offsets = [0, 0], sizes = [32, 6], strides = [1, 1]} : vector<32x128xbf16> to vector<32x6xbf16>
    %151 = tpu.concatenate %149, %150 in 1 : vector<32x122xbf16>, vector<32x6xbf16> -> vector<32x128xbf16>
    %152 = vector.extract_strided_slice %128 {offsets = [0, 8], sizes = [32, 120], strides = [1, 1]} : vector<32x128xbf16> to vector<32x120xbf16>
    %153 = vector.extract_strided_slice %128 {offsets = [0, 0], sizes = [32, 8], strides = [1, 1]} : vector<32x128xbf16> to vector<32x8xbf16>
    %154 = tpu.concatenate %152, %153 in 1 : vector<32x120xbf16>, vector<32x8xbf16> -> vector<32x128xbf16>
    %155 = tpu.concatenate %133, %136, %139, %142, %128, %145, %148, %151, %154 in 0 : vector<32x128xbf16>, vector<32x128xbf16>, vector<32x128xbf16>, vector<32x128xbf16>, vector<32x128xbf16>, vector<32x128xbf16>, vector<32x128xbf16>, vector<32x128xbf16>, vector<32x128xbf16> -> vector<288x128xbf16>
    %cst_40 = arith.constant dense<0.000000e+00> : vector<32x128xf32>
    %156 = tpu.matmul %130, %155, %cst_40 {dimension_numbers = #tpu.dot_dimension_numbers<[1], [0], [0], [1], [0, 0, 1, 1], [], []>} : vector<32x288xbf16>, vector<288x128xbf16>, vector<32x128xf32> -> vector<32x128xf32>
    %c2_41 = arith.constant 2 : index
    %c0_42 = arith.constant 0 : index
    %c0_43 = arith.constant 0 : index
    %157 = vector.load %arg7[%c2_41, %c0_42, %c0_43] : memref<7x32x1xf32, #tpu.memory_space<vmem>>, vector<1x32x1xf32>
    %158 = vector.shape_cast %157 : vector<1x32x1xf32> to vector<32x1xf32>
    %159 = vector.broadcast %158 : vector<32x1xf32> to vector<32x128xf32>
    %160 = arith.addf %156, %159 : vector<32x128xf32>
    %cst_44 = arith.constant 0.000000e+00 : f32
    %161 = vector.broadcast %cst_44 : f32 to vector<32x128xf32>
    %162 = arith.maximumf %160, %161 : vector<32x128xf32>
    %c2_45 = arith.constant 2 : index
    %c0_46 = arith.constant 0 : index
    %c0_47 = arith.constant 0 : index
    %163 = vector.load %arg8[%c2_45, %c0_46, %c0_47] : memref<7x32x1xf32, #tpu.memory_space<vmem>>, vector<1x32x1xf32>
    %164 = vector.shape_cast %163 : vector<1x32x1xf32> to vector<32x1xf32>
    %165 = vector.broadcast %164 : vector<32x1xf32> to vector<32x128xf32>
    %166 = arith.mulf %162, %165 : vector<32x128xf32>
    %c2_48 = arith.constant 2 : index
    %c0_49 = arith.constant 0 : index
    %c0_50 = arith.constant 0 : index
    %167 = vector.load %arg9[%c2_48, %c0_49, %c0_50] : memref<7x32x1xf32, #tpu.memory_space<vmem>>, vector<1x32x1xf32>
    %168 = vector.shape_cast %167 : vector<1x32x1xf32> to vector<32x1xf32>
    %169 = vector.broadcast %168 : vector<32x1xf32> to vector<32x128xf32>
    %170 = arith.addf %166, %169 : vector<32x128xf32>
    %171 = arith.addf %170, %127 : vector<32x128xf32>
    %172 = arith.truncf %171 : vector<32x128xf32> to vector<32x128xbf16>
    %c3 = arith.constant 3 : index
    %c0_51 = arith.constant 0 : index
    %c0_52 = arith.constant 0 : index
    %173 = vector.load %arg6[%c3, %c0_51, %c0_52] : memref<7x32x288xbf16, #tpu.memory_space<vmem>>, vector<1x32x288xbf16>
    %174 = vector.shape_cast %173 : vector<1x32x288xbf16> to vector<32x288xbf16>
    %175 = vector.extract_strided_slice %172 {offsets = [0, 112], sizes = [32, 16], strides = [1, 1]} : vector<32x128xbf16> to vector<32x16xbf16>
    %176 = vector.extract_strided_slice %172 {offsets = [0, 0], sizes = [32, 112], strides = [1, 1]} : vector<32x128xbf16> to vector<32x112xbf16>
    %177 = tpu.concatenate %175, %176 in 1 : vector<32x16xbf16>, vector<32x112xbf16> -> vector<32x128xbf16>
    %178 = vector.extract_strided_slice %172 {offsets = [0, 116], sizes = [32, 12], strides = [1, 1]} : vector<32x128xbf16> to vector<32x12xbf16>
    %179 = vector.extract_strided_slice %172 {offsets = [0, 0], sizes = [32, 116], strides = [1, 1]} : vector<32x128xbf16> to vector<32x116xbf16>
    %180 = tpu.concatenate %178, %179 in 1 : vector<32x12xbf16>, vector<32x116xbf16> -> vector<32x128xbf16>
    %181 = vector.extract_strided_slice %172 {offsets = [0, 120], sizes = [32, 8], strides = [1, 1]} : vector<32x128xbf16> to vector<32x8xbf16>
    %182 = vector.extract_strided_slice %172 {offsets = [0, 0], sizes = [32, 120], strides = [1, 1]} : vector<32x128xbf16> to vector<32x120xbf16>
    %183 = tpu.concatenate %181, %182 in 1 : vector<32x8xbf16>, vector<32x120xbf16> -> vector<32x128xbf16>
    %184 = vector.extract_strided_slice %172 {offsets = [0, 124], sizes = [32, 4], strides = [1, 1]} : vector<32x128xbf16> to vector<32x4xbf16>
    %185 = vector.extract_strided_slice %172 {offsets = [0, 0], sizes = [32, 124], strides = [1, 1]} : vector<32x128xbf16> to vector<32x124xbf16>
    %186 = tpu.concatenate %184, %185 in 1 : vector<32x4xbf16>, vector<32x124xbf16> -> vector<32x128xbf16>
    %187 = vector.extract_strided_slice %172 {offsets = [0, 4], sizes = [32, 124], strides = [1, 1]} : vector<32x128xbf16> to vector<32x124xbf16>
    %188 = vector.extract_strided_slice %172 {offsets = [0, 0], sizes = [32, 4], strides = [1, 1]} : vector<32x128xbf16> to vector<32x4xbf16>
    %189 = tpu.concatenate %187, %188 in 1 : vector<32x124xbf16>, vector<32x4xbf16> -> vector<32x128xbf16>
    %190 = vector.extract_strided_slice %172 {offsets = [0, 8], sizes = [32, 120], strides = [1, 1]} : vector<32x128xbf16> to vector<32x120xbf16>
    %191 = vector.extract_strided_slice %172 {offsets = [0, 0], sizes = [32, 8], strides = [1, 1]} : vector<32x128xbf16> to vector<32x8xbf16>
    %192 = tpu.concatenate %190, %191 in 1 : vector<32x120xbf16>, vector<32x8xbf16> -> vector<32x128xbf16>
    %193 = vector.extract_strided_slice %172 {offsets = [0, 12], sizes = [32, 116], strides = [1, 1]} : vector<32x128xbf16> to vector<32x116xbf16>
    %194 = vector.extract_strided_slice %172 {offsets = [0, 0], sizes = [32, 12], strides = [1, 1]} : vector<32x128xbf16> to vector<32x12xbf16>
    %195 = tpu.concatenate %193, %194 in 1 : vector<32x116xbf16>, vector<32x12xbf16> -> vector<32x128xbf16>
    %196 = vector.extract_strided_slice %172 {offsets = [0, 16], sizes = [32, 112], strides = [1, 1]} : vector<32x128xbf16> to vector<32x112xbf16>
    %197 = vector.extract_strided_slice %172 {offsets = [0, 0], sizes = [32, 16], strides = [1, 1]} : vector<32x128xbf16> to vector<32x16xbf16>
    %198 = tpu.concatenate %196, %197 in 1 : vector<32x112xbf16>, vector<32x16xbf16> -> vector<32x128xbf16>
    %199 = tpu.concatenate %177, %180, %183, %186, %172, %189, %192, %195, %198 in 0 : vector<32x128xbf16>, vector<32x128xbf16>, vector<32x128xbf16>, vector<32x128xbf16>, vector<32x128xbf16>, vector<32x128xbf16>, vector<32x128xbf16>, vector<32x128xbf16>, vector<32x128xbf16> -> vector<288x128xbf16>
    %cst_53 = arith.constant dense<0.000000e+00> : vector<32x128xf32>
    %200 = tpu.matmul %174, %199, %cst_53 {dimension_numbers = #tpu.dot_dimension_numbers<[1], [0], [0], [1], [0, 0, 1, 1], [], []>} : vector<32x288xbf16>, vector<288x128xbf16>, vector<32x128xf32> -> vector<32x128xf32>
    %c3_54 = arith.constant 3 : index
    %c0_55 = arith.constant 0 : index
    %c0_56 = arith.constant 0 : index
    %201 = vector.load %arg7[%c3_54, %c0_55, %c0_56] : memref<7x32x1xf32, #tpu.memory_space<vmem>>, vector<1x32x1xf32>
    %202 = vector.shape_cast %201 : vector<1x32x1xf32> to vector<32x1xf32>
    %203 = vector.broadcast %202 : vector<32x1xf32> to vector<32x128xf32>
    %204 = arith.addf %200, %203 : vector<32x128xf32>
    %cst_57 = arith.constant 0.000000e+00 : f32
    %205 = vector.broadcast %cst_57 : f32 to vector<32x128xf32>
    %206 = arith.maximumf %204, %205 : vector<32x128xf32>
    %c3_58 = arith.constant 3 : index
    %c0_59 = arith.constant 0 : index
    %c0_60 = arith.constant 0 : index
    %207 = vector.load %arg8[%c3_58, %c0_59, %c0_60] : memref<7x32x1xf32, #tpu.memory_space<vmem>>, vector<1x32x1xf32>
    %208 = vector.shape_cast %207 : vector<1x32x1xf32> to vector<32x1xf32>
    %209 = vector.broadcast %208 : vector<32x1xf32> to vector<32x128xf32>
    %210 = arith.mulf %206, %209 : vector<32x128xf32>
    %c3_61 = arith.constant 3 : index
    %c0_62 = arith.constant 0 : index
    %c0_63 = arith.constant 0 : index
    %211 = vector.load %arg9[%c3_61, %c0_62, %c0_63] : memref<7x32x1xf32, #tpu.memory_space<vmem>>, vector<1x32x1xf32>
    %212 = vector.shape_cast %211 : vector<1x32x1xf32> to vector<32x1xf32>
    %213 = vector.broadcast %212 : vector<32x1xf32> to vector<32x128xf32>
    %214 = arith.addf %210, %213 : vector<32x128xf32>
    %215 = arith.addf %214, %171 : vector<32x128xf32>
    %216 = arith.truncf %215 : vector<32x128xf32> to vector<32x128xbf16>
    %c4 = arith.constant 4 : index
    %c0_64 = arith.constant 0 : index
    %c0_65 = arith.constant 0 : index
    %217 = vector.load %arg6[%c4, %c0_64, %c0_65] : memref<7x32x288xbf16, #tpu.memory_space<vmem>>, vector<1x32x288xbf16>
    %218 = vector.shape_cast %217 : vector<1x32x288xbf16> to vector<32x288xbf16>
    %219 = vector.extract_strided_slice %216 {offsets = [0, 112], sizes = [32, 16], strides = [1, 1]} : vector<32x128xbf16> to vector<32x16xbf16>
    %220 = vector.extract_strided_slice %216 {offsets = [0, 0], sizes = [32, 112], strides = [1, 1]} : vector<32x128xbf16> to vector<32x112xbf16>
    %221 = tpu.concatenate %219, %220 in 1 : vector<32x16xbf16>, vector<32x112xbf16> -> vector<32x128xbf16>
    %222 = vector.extract_strided_slice %216 {offsets = [0, 116], sizes = [32, 12], strides = [1, 1]} : vector<32x128xbf16> to vector<32x12xbf16>
    %223 = vector.extract_strided_slice %216 {offsets = [0, 0], sizes = [32, 116], strides = [1, 1]} : vector<32x128xbf16> to vector<32x116xbf16>
    %224 = tpu.concatenate %222, %223 in 1 : vector<32x12xbf16>, vector<32x116xbf16> -> vector<32x128xbf16>
    %225 = vector.extract_strided_slice %216 {offsets = [0, 120], sizes = [32, 8], strides = [1, 1]} : vector<32x128xbf16> to vector<32x8xbf16>
    %226 = vector.extract_strided_slice %216 {offsets = [0, 0], sizes = [32, 120], strides = [1, 1]} : vector<32x128xbf16> to vector<32x120xbf16>
    %227 = tpu.concatenate %225, %226 in 1 : vector<32x8xbf16>, vector<32x120xbf16> -> vector<32x128xbf16>
    %228 = vector.extract_strided_slice %216 {offsets = [0, 124], sizes = [32, 4], strides = [1, 1]} : vector<32x128xbf16> to vector<32x4xbf16>
    %229 = vector.extract_strided_slice %216 {offsets = [0, 0], sizes = [32, 124], strides = [1, 1]} : vector<32x128xbf16> to vector<32x124xbf16>
    %230 = tpu.concatenate %228, %229 in 1 : vector<32x4xbf16>, vector<32x124xbf16> -> vector<32x128xbf16>
    %231 = vector.extract_strided_slice %216 {offsets = [0, 4], sizes = [32, 124], strides = [1, 1]} : vector<32x128xbf16> to vector<32x124xbf16>
    %232 = vector.extract_strided_slice %216 {offsets = [0, 0], sizes = [32, 4], strides = [1, 1]} : vector<32x128xbf16> to vector<32x4xbf16>
    %233 = tpu.concatenate %231, %232 in 1 : vector<32x124xbf16>, vector<32x4xbf16> -> vector<32x128xbf16>
    %234 = vector.extract_strided_slice %216 {offsets = [0, 8], sizes = [32, 120], strides = [1, 1]} : vector<32x128xbf16> to vector<32x120xbf16>
    %235 = vector.extract_strided_slice %216 {offsets = [0, 0], sizes = [32, 8], strides = [1, 1]} : vector<32x128xbf16> to vector<32x8xbf16>
    %236 = tpu.concatenate %234, %235 in 1 : vector<32x120xbf16>, vector<32x8xbf16> -> vector<32x128xbf16>
    %237 = vector.extract_strided_slice %216 {offsets = [0, 12], sizes = [32, 116], strides = [1, 1]} : vector<32x128xbf16> to vector<32x116xbf16>
    %238 = vector.extract_strided_slice %216 {offsets = [0, 0], sizes = [32, 12], strides = [1, 1]} : vector<32x128xbf16> to vector<32x12xbf16>
    %239 = tpu.concatenate %237, %238 in 1 : vector<32x116xbf16>, vector<32x12xbf16> -> vector<32x128xbf16>
    %240 = vector.extract_strided_slice %216 {offsets = [0, 16], sizes = [32, 112], strides = [1, 1]} : vector<32x128xbf16> to vector<32x112xbf16>
    %241 = vector.extract_strided_slice %216 {offsets = [0, 0], sizes = [32, 16], strides = [1, 1]} : vector<32x128xbf16> to vector<32x16xbf16>
    %242 = tpu.concatenate %240, %241 in 1 : vector<32x112xbf16>, vector<32x16xbf16> -> vector<32x128xbf16>
    %243 = tpu.concatenate %221, %224, %227, %230, %216, %233, %236, %239, %242 in 0 : vector<32x128xbf16>, vector<32x128xbf16>, vector<32x128xbf16>, vector<32x128xbf16>, vector<32x128xbf16>, vector<32x128xbf16>, vector<32x128xbf16>, vector<32x128xbf16>, vector<32x128xbf16> -> vector<288x128xbf16>
    %cst_66 = arith.constant dense<0.000000e+00> : vector<32x128xf32>
    %244 = tpu.matmul %218, %243, %cst_66 {dimension_numbers = #tpu.dot_dimension_numbers<[1], [0], [0], [1], [0, 0, 1, 1], [], []>} : vector<32x288xbf16>, vector<288x128xbf16>, vector<32x128xf32> -> vector<32x128xf32>
    %c4_67 = arith.constant 4 : index
    %c0_68 = arith.constant 0 : index
    %c0_69 = arith.constant 0 : index
    %245 = vector.load %arg7[%c4_67, %c0_68, %c0_69] : memref<7x32x1xf32, #tpu.memory_space<vmem>>, vector<1x32x1xf32>
    %246 = vector.shape_cast %245 : vector<1x32x1xf32> to vector<32x1xf32>
    %247 = vector.broadcast %246 : vector<32x1xf32> to vector<32x128xf32>
    %248 = arith.addf %244, %247 : vector<32x128xf32>
    %cst_70 = arith.constant 0.000000e+00 : f32
    %249 = vector.broadcast %cst_70 : f32 to vector<32x128xf32>
    %250 = arith.maximumf %248, %249 : vector<32x128xf32>
    %c4_71 = arith.constant 4 : index
    %c0_72 = arith.constant 0 : index
    %c0_73 = arith.constant 0 : index
    %251 = vector.load %arg8[%c4_71, %c0_72, %c0_73] : memref<7x32x1xf32, #tpu.memory_space<vmem>>, vector<1x32x1xf32>
    %252 = vector.shape_cast %251 : vector<1x32x1xf32> to vector<32x1xf32>
    %253 = vector.broadcast %252 : vector<32x1xf32> to vector<32x128xf32>
    %254 = arith.mulf %250, %253 : vector<32x128xf32>
    %c4_74 = arith.constant 4 : index
    %c0_75 = arith.constant 0 : index
    %c0_76 = arith.constant 0 : index
    %255 = vector.load %arg9[%c4_74, %c0_75, %c0_76] : memref<7x32x1xf32, #tpu.memory_space<vmem>>, vector<1x32x1xf32>
    %256 = vector.shape_cast %255 : vector<1x32x1xf32> to vector<32x1xf32>
    %257 = vector.broadcast %256 : vector<32x1xf32> to vector<32x128xf32>
    %258 = arith.addf %254, %257 : vector<32x128xf32>
    %259 = arith.addf %258, %215 : vector<32x128xf32>
    %260 = arith.truncf %259 : vector<32x128xf32> to vector<32x128xbf16>
    %c5 = arith.constant 5 : index
    %c0_77 = arith.constant 0 : index
    %c0_78 = arith.constant 0 : index
    %261 = vector.load %arg6[%c5, %c0_77, %c0_78] : memref<7x32x288xbf16, #tpu.memory_space<vmem>>, vector<1x32x288xbf16>
    %262 = vector.shape_cast %261 : vector<1x32x288xbf16> to vector<32x288xbf16>
    %263 = vector.extract_strided_slice %260 {offsets = [0, 96], sizes = [32, 32], strides = [1, 1]} : vector<32x128xbf16> to vector<32x32xbf16>
    %264 = vector.extract_strided_slice %260 {offsets = [0, 0], sizes = [32, 96], strides = [1, 1]} : vector<32x128xbf16> to vector<32x96xbf16>
    %265 = tpu.concatenate %263, %264 in 1 : vector<32x32xbf16>, vector<32x96xbf16> -> vector<32x128xbf16>
    %266 = vector.extract_strided_slice %260 {offsets = [0, 104], sizes = [32, 24], strides = [1, 1]} : vector<32x128xbf16> to vector<32x24xbf16>
    %267 = vector.extract_strided_slice %260 {offsets = [0, 0], sizes = [32, 104], strides = [1, 1]} : vector<32x128xbf16> to vector<32x104xbf16>
    %268 = tpu.concatenate %266, %267 in 1 : vector<32x24xbf16>, vector<32x104xbf16> -> vector<32x128xbf16>
    %269 = vector.extract_strided_slice %260 {offsets = [0, 112], sizes = [32, 16], strides = [1, 1]} : vector<32x128xbf16> to vector<32x16xbf16>
    %270 = vector.extract_strided_slice %260 {offsets = [0, 0], sizes = [32, 112], strides = [1, 1]} : vector<32x128xbf16> to vector<32x112xbf16>
    %271 = tpu.concatenate %269, %270 in 1 : vector<32x16xbf16>, vector<32x112xbf16> -> vector<32x128xbf16>
    %272 = vector.extract_strided_slice %260 {offsets = [0, 120], sizes = [32, 8], strides = [1, 1]} : vector<32x128xbf16> to vector<32x8xbf16>
    %273 = vector.extract_strided_slice %260 {offsets = [0, 0], sizes = [32, 120], strides = [1, 1]} : vector<32x128xbf16> to vector<32x120xbf16>
    %274 = tpu.concatenate %272, %273 in 1 : vector<32x8xbf16>, vector<32x120xbf16> -> vector<32x128xbf16>
    %275 = vector.extract_strided_slice %260 {offsets = [0, 8], sizes = [32, 120], strides = [1, 1]} : vector<32x128xbf16> to vector<32x120xbf16>
    %276 = vector.extract_strided_slice %260 {offsets = [0, 0], sizes = [32, 8], strides = [1, 1]} : vector<32x128xbf16> to vector<32x8xbf16>
    %277 = tpu.concatenate %275, %276 in 1 : vector<32x120xbf16>, vector<32x8xbf16> -> vector<32x128xbf16>
    %278 = vector.extract_strided_slice %260 {offsets = [0, 16], sizes = [32, 112], strides = [1, 1]} : vector<32x128xbf16> to vector<32x112xbf16>
    %279 = vector.extract_strided_slice %260 {offsets = [0, 0], sizes = [32, 16], strides = [1, 1]} : vector<32x128xbf16> to vector<32x16xbf16>
    %280 = tpu.concatenate %278, %279 in 1 : vector<32x112xbf16>, vector<32x16xbf16> -> vector<32x128xbf16>
    %281 = vector.extract_strided_slice %260 {offsets = [0, 24], sizes = [32, 104], strides = [1, 1]} : vector<32x128xbf16> to vector<32x104xbf16>
    %282 = vector.extract_strided_slice %260 {offsets = [0, 0], sizes = [32, 24], strides = [1, 1]} : vector<32x128xbf16> to vector<32x24xbf16>
    %283 = tpu.concatenate %281, %282 in 1 : vector<32x104xbf16>, vector<32x24xbf16> -> vector<32x128xbf16>
    %284 = vector.extract_strided_slice %260 {offsets = [0, 32], sizes = [32, 96], strides = [1, 1]} : vector<32x128xbf16> to vector<32x96xbf16>
    %285 = vector.extract_strided_slice %260 {offsets = [0, 0], sizes = [32, 32], strides = [1, 1]} : vector<32x128xbf16> to vector<32x32xbf16>
    %286 = tpu.concatenate %284, %285 in 1 : vector<32x96xbf16>, vector<32x32xbf16> -> vector<32x128xbf16>
    %287 = tpu.concatenate %265, %268, %271, %274, %260, %277, %280, %283, %286 in 0 : vector<32x128xbf16>, vector<32x128xbf16>, vector<32x128xbf16>, vector<32x128xbf16>, vector<32x128xbf16>, vector<32x128xbf16>, vector<32x128xbf16>, vector<32x128xbf16>, vector<32x128xbf16> -> vector<288x128xbf16>
    %cst_79 = arith.constant dense<0.000000e+00> : vector<32x128xf32>
    %288 = tpu.matmul %262, %287, %cst_79 {dimension_numbers = #tpu.dot_dimension_numbers<[1], [0], [0], [1], [0, 0, 1, 1], [], []>} : vector<32x288xbf16>, vector<288x128xbf16>, vector<32x128xf32> -> vector<32x128xf32>
    %c5_80 = arith.constant 5 : index
    %c0_81 = arith.constant 0 : index
    %c0_82 = arith.constant 0 : index
    %289 = vector.load %arg7[%c5_80, %c0_81, %c0_82] : memref<7x32x1xf32, #tpu.memory_space<vmem>>, vector<1x32x1xf32>
    %290 = vector.shape_cast %289 : vector<1x32x1xf32> to vector<32x1xf32>
    %291 = vector.broadcast %290 : vector<32x1xf32> to vector<32x128xf32>
    %292 = arith.addf %288, %291 : vector<32x128xf32>
    %cst_83 = arith.constant 0.000000e+00 : f32
    %293 = vector.broadcast %cst_83 : f32 to vector<32x128xf32>
    %294 = arith.maximumf %292, %293 : vector<32x128xf32>
    %c5_84 = arith.constant 5 : index
    %c0_85 = arith.constant 0 : index
    %c0_86 = arith.constant 0 : index
    %295 = vector.load %arg8[%c5_84, %c0_85, %c0_86] : memref<7x32x1xf32, #tpu.memory_space<vmem>>, vector<1x32x1xf32>
    %296 = vector.shape_cast %295 : vector<1x32x1xf32> to vector<32x1xf32>
    %297 = vector.broadcast %296 : vector<32x1xf32> to vector<32x128xf32>
    %298 = arith.mulf %294, %297 : vector<32x128xf32>
    %c5_87 = arith.constant 5 : index
    %c0_88 = arith.constant 0 : index
    %c0_89 = arith.constant 0 : index
    %299 = vector.load %arg9[%c5_87, %c0_88, %c0_89] : memref<7x32x1xf32, #tpu.memory_space<vmem>>, vector<1x32x1xf32>
    %300 = vector.shape_cast %299 : vector<1x32x1xf32> to vector<32x1xf32>
    %301 = vector.broadcast %300 : vector<32x1xf32> to vector<32x128xf32>
    %302 = arith.addf %298, %301 : vector<32x128xf32>
    %303 = arith.addf %302, %259 : vector<32x128xf32>
    %304 = arith.truncf %303 : vector<32x128xf32> to vector<32x128xbf16>
    %c6 = arith.constant 6 : index
    %c0_90 = arith.constant 0 : index
    %c0_91 = arith.constant 0 : index
    %305 = vector.load %arg6[%c6, %c0_90, %c0_91] : memref<7x32x288xbf16, #tpu.memory_space<vmem>>, vector<1x32x288xbf16>
    %306 = vector.shape_cast %305 : vector<1x32x288xbf16> to vector<32x288xbf16>
    %307 = vector.extract_strided_slice %304 {offsets = [0, 96], sizes = [32, 32], strides = [1, 1]} : vector<32x128xbf16> to vector<32x32xbf16>
    %308 = vector.extract_strided_slice %304 {offsets = [0, 0], sizes = [32, 96], strides = [1, 1]} : vector<32x128xbf16> to vector<32x96xbf16>
    %309 = tpu.concatenate %307, %308 in 1 : vector<32x32xbf16>, vector<32x96xbf16> -> vector<32x128xbf16>
    %310 = vector.extract_strided_slice %304 {offsets = [0, 104], sizes = [32, 24], strides = [1, 1]} : vector<32x128xbf16> to vector<32x24xbf16>
    %311 = vector.extract_strided_slice %304 {offsets = [0, 0], sizes = [32, 104], strides = [1, 1]} : vector<32x128xbf16> to vector<32x104xbf16>
    %312 = tpu.concatenate %310, %311 in 1 : vector<32x24xbf16>, vector<32x104xbf16> -> vector<32x128xbf16>
    %313 = vector.extract_strided_slice %304 {offsets = [0, 112], sizes = [32, 16], strides = [1, 1]} : vector<32x128xbf16> to vector<32x16xbf16>
    %314 = vector.extract_strided_slice %304 {offsets = [0, 0], sizes = [32, 112], strides = [1, 1]} : vector<32x128xbf16> to vector<32x112xbf16>
    %315 = tpu.concatenate %313, %314 in 1 : vector<32x16xbf16>, vector<32x112xbf16> -> vector<32x128xbf16>
    %316 = vector.extract_strided_slice %304 {offsets = [0, 120], sizes = [32, 8], strides = [1, 1]} : vector<32x128xbf16> to vector<32x8xbf16>
    %317 = vector.extract_strided_slice %304 {offsets = [0, 0], sizes = [32, 120], strides = [1, 1]} : vector<32x128xbf16> to vector<32x120xbf16>
    %318 = tpu.concatenate %316, %317 in 1 : vector<32x8xbf16>, vector<32x120xbf16> -> vector<32x128xbf16>
    %319 = vector.extract_strided_slice %304 {offsets = [0, 8], sizes = [32, 120], strides = [1, 1]} : vector<32x128xbf16> to vector<32x120xbf16>
    %320 = vector.extract_strided_slice %304 {offsets = [0, 0], sizes = [32, 8], strides = [1, 1]} : vector<32x128xbf16> to vector<32x8xbf16>
    %321 = tpu.concatenate %319, %320 in 1 : vector<32x120xbf16>, vector<32x8xbf16> -> vector<32x128xbf16>
    %322 = vector.extract_strided_slice %304 {offsets = [0, 16], sizes = [32, 112], strides = [1, 1]} : vector<32x128xbf16> to vector<32x112xbf16>
    %323 = vector.extract_strided_slice %304 {offsets = [0, 0], sizes = [32, 16], strides = [1, 1]} : vector<32x128xbf16> to vector<32x16xbf16>
    %324 = tpu.concatenate %322, %323 in 1 : vector<32x112xbf16>, vector<32x16xbf16> -> vector<32x128xbf16>
    %325 = vector.extract_strided_slice %304 {offsets = [0, 24], sizes = [32, 104], strides = [1, 1]} : vector<32x128xbf16> to vector<32x104xbf16>
    %326 = vector.extract_strided_slice %304 {offsets = [0, 0], sizes = [32, 24], strides = [1, 1]} : vector<32x128xbf16> to vector<32x24xbf16>
    %327 = tpu.concatenate %325, %326 in 1 : vector<32x104xbf16>, vector<32x24xbf16> -> vector<32x128xbf16>
    %328 = vector.extract_strided_slice %304 {offsets = [0, 32], sizes = [32, 96], strides = [1, 1]} : vector<32x128xbf16> to vector<32x96xbf16>
    %329 = vector.extract_strided_slice %304 {offsets = [0, 0], sizes = [32, 32], strides = [1, 1]} : vector<32x128xbf16> to vector<32x32xbf16>
    %330 = tpu.concatenate %328, %329 in 1 : vector<32x96xbf16>, vector<32x32xbf16> -> vector<32x128xbf16>
    %331 = tpu.concatenate %309, %312, %315, %318, %304, %321, %324, %327, %330 in 0 : vector<32x128xbf16>, vector<32x128xbf16>, vector<32x128xbf16>, vector<32x128xbf16>, vector<32x128xbf16>, vector<32x128xbf16>, vector<32x128xbf16>, vector<32x128xbf16>, vector<32x128xbf16> -> vector<288x128xbf16>
    %cst_92 = arith.constant dense<0.000000e+00> : vector<32x128xf32>
    %332 = tpu.matmul %306, %331, %cst_92 {dimension_numbers = #tpu.dot_dimension_numbers<[1], [0], [0], [1], [0, 0, 1, 1], [], []>} : vector<32x288xbf16>, vector<288x128xbf16>, vector<32x128xf32> -> vector<32x128xf32>
    %c6_93 = arith.constant 6 : index
    %c0_94 = arith.constant 0 : index
    %c0_95 = arith.constant 0 : index
    %333 = vector.load %arg7[%c6_93, %c0_94, %c0_95] : memref<7x32x1xf32, #tpu.memory_space<vmem>>, vector<1x32x1xf32>
    %334 = vector.shape_cast %333 : vector<1x32x1xf32> to vector<32x1xf32>
    %335 = vector.broadcast %334 : vector<32x1xf32> to vector<32x128xf32>
    %336 = arith.addf %332, %335 : vector<32x128xf32>
    %cst_96 = arith.constant 0.000000e+00 : f32
    %337 = vector.broadcast %cst_96 : f32 to vector<32x128xf32>
    %338 = arith.maximumf %336, %337 : vector<32x128xf32>
    %c6_97 = arith.constant 6 : index
    %c0_98 = arith.constant 0 : index
    %c0_99 = arith.constant 0 : index
    %339 = vector.load %arg8[%c6_97, %c0_98, %c0_99] : memref<7x32x1xf32, #tpu.memory_space<vmem>>, vector<1x32x1xf32>
    %340 = vector.shape_cast %339 : vector<1x32x1xf32> to vector<32x1xf32>
    %341 = vector.broadcast %340 : vector<32x1xf32> to vector<32x128xf32>
    %342 = arith.mulf %338, %341 : vector<32x128xf32>
    %c6_100 = arith.constant 6 : index
    %c0_101 = arith.constant 0 : index
    %c0_102 = arith.constant 0 : index
    %343 = vector.load %arg9[%c6_100, %c0_101, %c0_102] : memref<7x32x1xf32, #tpu.memory_space<vmem>>, vector<1x32x1xf32>
    %344 = vector.shape_cast %343 : vector<1x32x1xf32> to vector<32x1xf32>
    %345 = vector.broadcast %344 : vector<32x1xf32> to vector<32x128xf32>
    %346 = arith.addf %342, %345 : vector<32x128xf32>
    %347 = arith.addf %346, %303 : vector<32x128xf32>
    %348 = tpu.concatenate %39, %83, %127, %171, %215, %259, %303, %347 in 0 : vector<32x128xf32>, vector<32x128xf32>, vector<32x128xf32>, vector<32x128xf32>, vector<32x128xf32>, vector<32x128xf32>, vector<32x128xf32>, vector<32x128xf32> -> vector<256x128xf32>
    %349 = arith.truncf %348 : vector<256x128xf32> to vector<256x128xbf16>
    %c0_103 = arith.constant 0 : index
    %c0_104 = arith.constant 0 : index
    %350 = vector.load %arg10[%c0_103, %c0_104] : memref<256x256xbf16, #tpu.memory_space<vmem>>, vector<256x256xbf16>
    %cst_105 = arith.constant dense<0.000000e+00> : vector<256x128xf32>
    %351 = tpu.matmul %350, %349, %cst_105 {dimension_numbers = #tpu.dot_dimension_numbers<[1], [0], [0], [1], [0, 0, 1, 1], [], []>} : vector<256x256xbf16>, vector<256x128xbf16>, vector<256x128xf32> -> vector<256x128xf32>
    %c0_106 = arith.constant 0 : index
    %c0_107 = arith.constant 0 : index
    %352 = vector.load %arg11[%c0_106, %c0_107] : memref<256x1xf32, #tpu.memory_space<vmem>>, vector<256x1xf32>
    %353 = vector.broadcast %352 : vector<256x1xf32> to vector<256x128xf32>
    %354 = arith.addf %351, %353 : vector<256x128xf32>
    %355 = vector.extract_strided_slice %354 {offsets = [0, 2], sizes = [256, 126], strides = [1, 1]} : vector<256x128xf32> to vector<256x126xf32>
    %356 = vector.extract_strided_slice %354 {offsets = [0, 0], sizes = [256, 2], strides = [1, 1]} : vector<256x128xf32> to vector<256x2xf32>
    %357 = tpu.concatenate %355, %356 in 1 : vector<256x126xf32>, vector<256x2xf32> -> vector<256x128xf32>
    %358 = arith.maximumf %354, %357 : vector<256x128xf32>
    %359 = vector.extract_strided_slice %358 {offsets = [0, 4], sizes = [256, 124], strides = [1, 1]} : vector<256x128xf32> to vector<256x124xf32>
    %360 = vector.extract_strided_slice %358 {offsets = [0, 0], sizes = [256, 4], strides = [1, 1]} : vector<256x128xf32> to vector<256x4xf32>
    %361 = tpu.concatenate %359, %360 in 1 : vector<256x124xf32>, vector<256x4xf32> -> vector<256x128xf32>
    %362 = arith.maximumf %358, %361 : vector<256x128xf32>
    %363 = vector.extract_strided_slice %362 {offsets = [0, 8], sizes = [256, 120], strides = [1, 1]} : vector<256x128xf32> to vector<256x120xf32>
    %364 = vector.extract_strided_slice %362 {offsets = [0, 0], sizes = [256, 8], strides = [1, 1]} : vector<256x128xf32> to vector<256x8xf32>
    %365 = tpu.concatenate %363, %364 in 1 : vector<256x120xf32>, vector<256x8xf32> -> vector<256x128xf32>
    %366 = arith.maximumf %362, %365 : vector<256x128xf32>
    %367 = vector.extract_strided_slice %366 {offsets = [0, 16], sizes = [256, 112], strides = [1, 1]} : vector<256x128xf32> to vector<256x112xf32>
    %368 = vector.extract_strided_slice %366 {offsets = [0, 0], sizes = [256, 16], strides = [1, 1]} : vector<256x128xf32> to vector<256x16xf32>
    %369 = tpu.concatenate %367, %368 in 1 : vector<256x112xf32>, vector<256x16xf32> -> vector<256x128xf32>
    %370 = arith.maximumf %366, %369 : vector<256x128xf32>
    %371 = vector.extract_strided_slice %370 {offsets = [0, 32], sizes = [256, 96], strides = [1, 1]} : vector<256x128xf32> to vector<256x96xf32>
    %372 = vector.extract_strided_slice %370 {offsets = [0, 0], sizes = [256, 32], strides = [1, 1]} : vector<256x128xf32> to vector<256x32xf32>
    %373 = tpu.concatenate %371, %372 in 1 : vector<256x96xf32>, vector<256x32xf32> -> vector<256x128xf32>
    %374 = arith.maximumf %370, %373 : vector<256x128xf32>
    %375 = vector.extract_strided_slice %374 {offsets = [0, 64], sizes = [256, 64], strides = [1, 1]} : vector<256x128xf32> to vector<256x64xf32>
    %376 = vector.extract_strided_slice %374 {offsets = [0, 0], sizes = [256, 64], strides = [1, 1]} : vector<256x128xf32> to vector<256x64xf32>
    %377 = tpu.concatenate %375, %376 in 1 : vector<256x64xf32>, vector<256x64xf32> -> vector<256x128xf32>
    %378 = arith.maximumf %374, %377 : vector<256x128xf32>
    %379 = arith.truncf %378 : vector<256x128xf32> to vector<256x128xbf16>
    %c0_108 = arith.constant 0 : index
    %c0_109 = arith.constant 0 : index
    %380 = vector.load %arg12[%c0_108, %c0_109] : memref<256x256xbf16, #tpu.memory_space<vmem>>, vector<256x256xbf16>
    %cst_110 = arith.constant dense<0.000000e+00> : vector<256x128xf32>
    %381 = tpu.matmul %380, %379, %cst_110 {dimension_numbers = #tpu.dot_dimension_numbers<[1], [0], [0], [1], [0, 0, 1, 1], [], []>} : vector<256x256xbf16>, vector<256x128xbf16>, vector<256x128xf32> -> vector<256x128xf32>
    %c0_111 = arith.constant 0 : index
    %c0_112 = arith.constant 0 : index
    %382 = vector.load %arg13[%c0_111, %c0_112] : memref<256x256xbf16, #tpu.memory_space<vmem>>, vector<256x256xbf16>
    %cst_113 = arith.constant dense<0.000000e+00> : vector<256x128xf32>
    %383 = tpu.matmul %382, %349, %cst_113 {dimension_numbers = #tpu.dot_dimension_numbers<[1], [0], [0], [1], [0, 0, 1, 1], [], []>} : vector<256x256xbf16>, vector<256x128xbf16>, vector<256x128xf32> -> vector<256x128xf32>
    %384 = arith.addf %381, %383 : vector<256x128xf32>
    %c0_114 = arith.constant 0 : index
    %c0_115 = arith.constant 0 : index
    %385 = vector.load %arg14[%c0_114, %c0_115] : memref<256x1xf32, #tpu.memory_space<vmem>>, vector<256x1xf32>
    %386 = vector.broadcast %385 : vector<256x1xf32> to vector<256x128xf32>
    %387 = arith.addf %384, %386 : vector<256x128xf32>
    %cst_116 = arith.constant 0.000000e+00 : f32
    %388 = vector.broadcast %cst_116 : f32 to vector<256x128xf32>
    %389 = arith.maximumf %387, %388 : vector<256x128xf32>
    %390 = arith.truncf %389 : vector<256x128xf32> to vector<256x128xbf16>
    %c0_117 = arith.constant 0 : index
    %c0_118 = arith.constant 0 : index
    %391 = vector.load %arg15[%c0_117, %c0_118] : memref<64x256xbf16, #tpu.memory_space<vmem>>, vector<64x256xbf16>
    %cst_119 = arith.constant dense<0.000000e+00> : vector<64x128xf32>
    %392 = tpu.matmul %391, %390, %cst_119 {dimension_numbers = #tpu.dot_dimension_numbers<[1], [0], [0], [1], [0, 0, 1, 1], [], []>} : vector<64x256xbf16>, vector<256x128xbf16>, vector<64x128xf32> -> vector<64x128xf32>
    %c0_120 = arith.constant 0 : index
    %c0_121 = arith.constant 0 : index
    %393 = vector.load %arg16[%c0_120, %c0_121] : memref<64x1xf32, #tpu.memory_space<vmem>>, vector<64x1xf32>
    %394 = vector.broadcast %393 : vector<64x1xf32> to vector<64x128xf32>
    %395 = arith.addf %392, %394 : vector<64x128xf32>
    %cst_122 = arith.constant 0.000000e+00 : f32
    %396 = vector.broadcast %cst_122 : f32 to vector<64x128xf32>
    %397 = arith.maximumf %395, %396 : vector<64x128xf32>
    %398 = arith.truncf %397 : vector<64x128xf32> to vector<64x128xbf16>
    %c0_123 = arith.constant 0 : index
    %c0_124 = arith.constant 0 : index
    %399 = vector.load %arg17[%c0_123, %c0_124] : memref<2x64xbf16, #tpu.memory_space<vmem>>, vector<2x64xbf16>
    %cst_125 = arith.constant dense<0.000000e+00> : vector<2x128xf32>
    %400 = tpu.matmul %399, %398, %cst_125 {dimension_numbers = #tpu.dot_dimension_numbers<[1], [0], [0], [1], [0, 0, 1, 1], [], []>} : vector<2x64xbf16>, vector<64x128xbf16>, vector<2x128xf32> -> vector<2x128xf32>
    %c0_126 = arith.constant 0 : index
    %c0_127 = arith.constant 0 : index
    %401 = vector.load %arg18[%c0_126, %c0_127] : memref<2x1xf32, #tpu.memory_space<vmem>>, vector<2x1xf32>
    %402 = vector.broadcast %401 : vector<2x1xf32> to vector<2x128xf32>
    %403 = arith.addf %400, %402 : vector<2x128xf32>
    %c0_128 = arith.constant 0 : index
    %c0_129 = arith.constant 0 : index
    %c0_130 = arith.constant 0 : index
    %404 = vector.load %arg19[%c0_128, %c0_129, %c0_130] : memref<1x2x128xf32, #tpu.memory_space<vmem>>, vector<1x2x128xf32>
    %405 = vector.shape_cast %404 : vector<1x2x128xf32> to vector<2x128xf32>
    %406 = vector.shape_cast %403 : vector<2x128xf32> to vector<1x2x128xf32>
    tpu.vector_store %arg19[%c0_128, %c0_129, %c0_130], %406 {strides = array<i32>} : memref<1x2x128xf32, #tpu.memory_space<vmem>>, vector<1x2x128xf32>,
    return
  }
  func.func @transform_0(%arg0: i32) -> (i32, i32, i32) {
    %c0_i32 = arith.constant 0 : i32
    %c0_i32_0 = arith.constant 0 : i32
    %c0_i32_1 = arith.constant 0 : i32
    return %arg0, %c0_i32, %c0_i32_0 : i32, i32, i32
  }
  func.func @transform_1(%arg0: i32) -> (i32, i32) {
    %c0_i32 = arith.constant 0 : i32
    %c0_i32_0 = arith.constant 0 : i32
    %c0_i32_1 = arith.constant 0 : i32
    return %c0_i32, %c0_i32_0 : i32, i32
  }
  func.func @transform_2(%arg0: i32) -> (i32, i32) {
    %c0_i32 = arith.constant 0 : i32
    %c0_i32_0 = arith.constant 0 : i32
    %c0_i32_1 = arith.constant 0 : i32
    return %c0_i32, %c0_i32_0 : i32, i32
  }
  func.func @transform_3(%arg0: i32) -> (i32, i32) {
    %c0_i32 = arith.constant 0 : i32
    %c0_i32_0 = arith.constant 0 : i32
    %c0_i32_1 = arith.constant 0 : i32
    return %c0_i32, %c0_i32_0 : i32, i32
  }
  func.func @transform_4(%arg0: i32) -> (i32, i32) {
    %c0_i32 = arith.constant 0 : i32
    %c0_i32_0 = arith.constant 0 : i32
    %c0_i32_1 = arith.constant 0 : i32
    return %c0_i32, %c0_i32_0 : i32, i32
  }
  func.func @transform_5(%arg0: i32) -> (i32, i32, i32) {
    %c0_i32 = arith.constant 0 : i32
    %c0_i32_0 = arith.constant 0 : i32
    %c0_i32_1 = arith.constant 0 : i32
    %c0_i32_2 = arith.constant 0 : i32
    return %c0_i32, %c0_i32_0, %c0_i32_1 : i32, i32, i32
  }
  func.func @transform_6(%arg0: i32) -> (i32, i32, i32) {
    %c0_i32 = arith.constant 0 : i32
    %c0_i32_0 = arith.constant 0 : i32
    %c0_i32_1 = arith.constant 0 : i32
    %c0_i32_2 = arith.constant 0 : i32
    return %c0_i32, %c0_i32_0, %c0_i32_1 : i32, i32, i32
  }
  func.func @transform_7(%arg0: i32) -> (i32, i32, i32) {
    %c0_i32 = arith.constant 0 : i32
    %c0_i32_0 = arith.constant 0 : i32
    %c0_i32_1 = arith.constant 0 : i32
    %c0_i32_2 = arith.constant 0 : i32
    return %c0_i32, %c0_i32_0, %c0_i32_1 : i32, i32, i32
  }
  func.func @transform_8(%arg0: i32) -> (i32, i32, i32) {
    %c0_i32 = arith.constant 0 : i32
    %c0_i32_0 = arith.constant 0 : i32
    %c0_i32_1 = arith.constant 0 : i32
    %c0_i32_2 = arith.constant 0 : i32
    return %c0_i32, %c0_i32_0, %c0_i32_1 : i32, i32, i32
  }
  func.func @transform_9(%arg0: i32) -> (i32, i32) {
    %c0_i32 = arith.constant 0 : i32
    %c0_i32_0 = arith.constant 0 : i32
    %c0_i32_1 = arith.constant 0 : i32
    return %c0_i32, %c0_i32_0 : i32, i32
  }
  func.func @transform_10(%arg0: i32) -> (i32, i32) {
    %c0_i32 = arith.constant 0 : i32
    %c0_i32_0 = arith.constant 0 : i32
    %c0_i32_1 = arith.constant 0 : i32
    return %c0_i32, %c0_i32_0 : i32, i32
  }
  func.func @transform_11(%arg0: i32) -> (i32, i32) {
    %c0_i32 = arith.constant 0 : i32
    %c0_i32_0 = arith.constant 0 : i32
    %c0_i32_1 = arith.constant 0 : i32
    return %c0_i32, %c0_i32_0 : i32, i32
  }
  func.func @transform_12(%arg0: i32) -> (i32, i32) {
    %c0_i32 = arith.constant 0 : i32
    %c0_i32_0 = arith.constant 0 : i32
    %c0_i32_1 = arith.constant 0 : i32
    return %c0_i32, %c0_i32_0 : i32, i32
  }
  func.func @transform_13(%arg0: i32) -> (i32, i32) {
    %c0_i32 = arith.constant 0 : i32
    %c0_i32_0 = arith.constant 0 : i32
    %c0_i32_1 = arith.constant 0 : i32
    return %c0_i32, %c0_i32_0 : i32, i32
  }
  func.func @transform_14(%arg0: i32) -> (i32, i32) {
    %c0_i32 = arith.constant 0 : i32
    %c0_i32_0 = arith.constant 0 : i32
    %c0_i32_1 = arith.constant 0 : i32
    return %c0_i32, %c0_i32_0 : i32, i32
  }
  func.func @transform_15(%arg0: i32) -> (i32, i32) {
    %c0_i32 = arith.constant 0 : i32
    %c0_i32_0 = arith.constant 0 : i32
    %c0_i32_1 = arith.constant 0 : i32
    return %c0_i32, %c0_i32_0 : i32, i32
  }
  func.func @transform_16(%arg0: i32) -> (i32, i32) {
    %c0_i32 = arith.constant 0 : i32
    %c0_i32_0 = arith.constant 0 : i32
    %c0_i32_1 = arith.constant 0 : i32
    return %c0_i32, %c0_i32_0 : i32, i32
  }
  func.func @transform_17(%arg0: i32) -> (i32, i32) {
    %c0_i32 = arith.constant 0 : i32
    %c0_i32_0 = arith.constant 0 : i32
    %c0_i32_1 = arith.constant 0 : i32
    return %c0_i32, %c0_i32_0 : i32, i32
  }
  func.func @transform_18(%arg0: i32) -> (i32, i32, i32) {
    %c0_i32 = arith.constant 0 : i32
    %c0_i32_0 = arith.constant 0 : i32
    %c0_i32_1 = arith.constant 0 : i32
    return %arg0, %c0_i32, %c0_i32_0 : i32, i32, i32
  }
}

</mosaic_0001>

<llo_original>
// kernel: tpu_custom_call.1
$region0: #{tpu_custom_call.1}
  #allocation0 [shape = 'u32[]', space=smem, size = 0x4, offset = 0x4, fixed_abs, tag = 'smem constant byte address 0x4 - core index']
  #allocation1 [shape = 'u32[72,128]{1,0:T(1,128)}', space=vmem, size = 0x9000, scoped, tag = 'internal scratch']
  %s0 = inlined_call_operand.vmem [shape: bf16[1,32,128], index: 0, kind: input, shape index: {}]
  %s1 = inlined_call_operand.vmem [shape: bf16[32,288], index: 1, kind: input, shape index: {}]
  %s2 = inlined_call_operand.vmem [shape: f32[32,1], index: 2, kind: input, shape index: {}]
  %s3 = inlined_call_operand.vmem [shape: f32[32,1], index: 3, kind: input, shape index: {}]
  %s4 = inlined_call_operand.vmem [shape: f32[32,1], index: 4, kind: input, shape index: {}]
  %s5 = inlined_call_operand.vmem [shape: bf16[7,32,288], index: 5, kind: input, shape index: {}]
  %s6 = inlined_call_operand.vmem [shape: f32[7,32,1], index: 6, kind: input, shape index: {}]
  %s7 = inlined_call_operand.vmem [shape: f32[7,32,1], index: 7, kind: input, shape index: {}]
  %s8 = inlined_call_operand.vmem [shape: f32[7,32,1], index: 8, kind: input, shape index: {}]
  %s9 = inlined_call_operand.vmem [shape: bf16[256,256], index: 9, kind: input, shape index: {}]
  %s10 = inlined_call_operand.vmem [shape: f32[256,1], index: 10, kind: input, shape index: {}]
  %s11 = inlined_call_operand.vmem [shape: bf16[256,256], index: 11, kind: input, shape index: {}]
  %s12 = inlined_call_operand.vmem [shape: bf16[256,256], index: 12, kind: input, shape index: {}]
  %s13 = inlined_call_operand.vmem [shape: f32[256,1], index: 13, kind: input, shape index: {}]
  %s14 = inlined_call_operand.vmem [shape: bf16[64,256], index: 14, kind: input, shape index: {}]
  %s15 = inlined_call_operand.vmem [shape: f32[64,1], index: 15, kind: input, shape index: {}]
  %s16 = inlined_call_operand.vmem [shape: bf16[2,64], index: 16, kind: input, shape index: {}]
  %s17 = inlined_call_operand.vmem [shape: f32[2,1], index: 17, kind: input, shape index: {}]
  %s18 = inlined_call_operand.hbm [shape: f32[1,2,128], index: 18, kind: output, shape index: {}]
  %s19 = sld [smem:[#allocation0]]
  $region82: #{tpu_custom_call.1} parent=0
    _
  %s21 = ssub.s32 1, %s19
  %s22 = scalar_select 0, %s21, %s19
  $region1: #{tpu_custom_call.1} parent=0
    #allocation2 [shape = 'u8[1024]{0}', space=vmem, size = 0x400, scoped, tag = 'output window, operand 0, single buffered']
    #allocation3 [shape = 's32[1]{0}', space=sflag, size = 0x4, scoped, tag = 'scoped memory for tpu_custom_call.1']
    %23 = vsyncpa [#allocation3], 0
    // Predicated region
    $region2: #{tpu_custom_call.1} parent=1 // pred_check
      _
    $region3: #{tpu_custom_call.1} parent=1 // pred_check_branch
      %25 = sbr.rel (0) target = $region5
    $region4: #{tpu_custom_call.1} parent=1 // pred_region
      _
    $region5: #{tpu_custom_call.1} parent=1 // pred_fallthru
      _
    // Predicated region
    $region6: #{tpu_custom_call.1} parent=1 // pred_check
      _
    $region7: #{tpu_custom_call.1} parent=1 // pred_check_branch
      %27 = sbr.rel (0) target = $region9
    $region8: #{tpu_custom_call.1} parent=1 // pred_region
      _
    $region9: #{tpu_custom_call.1} parent=1 // pred_fallthru
      _
    // Predicated region
    $region10: #{tpu_custom_call.1} parent=1 // pred_check
      _
    $region11: #{tpu_custom_call.1} parent=1 // pred_check_branch
      %29 = sbr.rel (0) target = $region13
    $region12: #{tpu_custom_call.1} parent=1 // pred_region
      _
    $region13: #{tpu_custom_call.1} parent=1 // pred_fallthru
      _
    // Predicated region
    $region14: #{tpu_custom_call.1} parent=1 // pred_check
      _
    $region15: #{tpu_custom_call.1} parent=1 // pred_check_branch
      %31 = sbr.rel (0) target = $region17
    $region16: #{tpu_custom_call.1} parent=1 // pred_region
      _
    $region17: #{tpu_custom_call.1} parent=1 // pred_fallthru
      _
    // Predicated region
    $region18: #{tpu_custom_call.1} parent=1 // pred_check
      _
    $region19: #{tpu_custom_call.1} parent=1 // pred_check_branch
      %33 = sbr.rel (0) target = $region21
    $region20: #{tpu_custom_call.1} parent=1 // pred_region
      _
    $region21: #{tpu_custom_call.1} parent=1 // pred_fallthru
      _
    // Predicated region
    $region22: #{tpu_custom_call.1} parent=1 // pred_check
      _
    $region23: #{tpu_custom_call.1} parent=1 // pred_check_branch
      %35 = sbr.rel (0) target = $region25
    $region24: #{tpu_custom_call.1} parent=1 // pred_region
      _
    $region25: #{tpu_custom_call.1} parent=1 // pred_fallthru
      _
    // Predicated region
    $region26: #{tpu_custom_call.1} parent=1 // pred_check
      _
    $region27: #{tpu_custom_call.1} parent=1 // pred_check_branch
      %37 = sbr.rel (0) target = $region29
    $region28: #{tpu_custom_call.1} parent=1 // pred_region
      _
    $region29: #{tpu_custom_call.1} parent=1 // pred_fallthru
      _
    // Predicated region
    $region30: #{tpu_custom_call.1} parent=1 // pred_check
      _
    $region31: #{tpu_custom_call.1} parent=1 // pred_check_branch
      %39 = sbr.rel (0) target = $region33
    $region32: #{tpu_custom_call.1} parent=1 // pred_region
      _
    $region33: #{tpu_custom_call.1} parent=1 // pred_fallthru
      _
    // Predicated region
    $region34: #{tpu_custom_call.1} parent=1 // pred_check
      _
    $region35: #{tpu_custom_call.1} parent=1 // pred_check_branch
      %41 = sbr.rel (0) target = $region37
    $region36: #{tpu_custom_call.1} parent=1 // pred_region
      _
    $region37: #{tpu_custom_call.1} parent=1 // pred_fallthru
      _
    // Predicated region
    $region38: #{tpu_custom_call.1} parent=1 // pred_check
      _
    $region39: #{tpu_custom_call.1} parent=1 // pred_check_branch
      %43 = sbr.rel (0) target = $region41
    $region40: #{tpu_custom_call.1} parent=1 // pred_region
      _
    $region41: #{tpu_custom_call.1} parent=1 // pred_fallthru
      _
    // Predicated region
    $region42: #{tpu_custom_call.1} parent=1 // pred_check
      _
    $region43: #{tpu_custom_call.1} parent=1 // pred_check_branch
      %45 = sbr.rel (0) target = $region45
    $region44: #{tpu_custom_call.1} parent=1 // pred_region
      _
    $region45: #{tpu_custom_call.1} parent=1 // pred_fallthru
      _
    // Predicated region
    $region46: #{tpu_custom_call.1} parent=1 // pred_check
      _
    $region47: #{tpu_custom_call.1} parent=1 // pred_check_branch
      %47 = sbr.rel (0) target = $region49
    $region48: #{tpu_custom_call.1} parent=1 // pred_region
      _
    $region49: #{tpu_custom_call.1} parent=1 // pred_fallthru
      _
    // Predicated region
    $region50: #{tpu_custom_call.1} parent=1 // pred_check
      _
    $region51: #{tpu_custom_call.1} parent=1 // pred_check_branch
      %49 = sbr.rel (0) target = $region53
    $region52: #{tpu_custom_call.1} parent=1 // pred_region
      _
    $region53: #{tpu_custom_call.1} parent=1 // pred_fallthru
      _
    // Predicated region
    $region54: #{tpu_custom_call.1} parent=1 // pred_check
      _
    $region55: #{tpu_custom_call.1} parent=1 // pred_check_branch
      %51 = sbr.rel (0) target = $region57
    $region56: #{tpu_custom_call.1} parent=1 // pred_region
      _
    $region57: #{tpu_custom_call.1} parent=1 // pred_fallthru
      _
    // Predicated region
    $region58: #{tpu_custom_call.1} parent=1 // pred_check
      _
    $region59: #{tpu_custom_call.1} parent=1 // pred_check_branch
      %53 = sbr.rel (0) target = $region61
    $region60: #{tpu_custom_call.1} parent=1 // pred_region
      _
    $region61: #{tpu_custom_call.1} parent=1 // pred_fallthru
      _
    // Predicated region
    $region62: #{tpu_custom_call.1} parent=1 // pred_check
      _
    $region63: #{tpu_custom_call.1} parent=1 // pred_check_branch
      %55 = sbr.rel (0) target = $region65
    $region64: #{tpu_custom_call.1} parent=1 // pred_region
      _
    $region65: #{tpu_custom_call.1} parent=1 // pred_fallthru
      _
    // Predicated region
    $region66: #{tpu_custom_call.1} parent=1 // pred_check
      _
    $region67: #{tpu_custom_call.1} parent=1 // pred_check_branch
      %57 = sbr.rel (0) target = $region69
    $region68: #{tpu_custom_call.1} parent=1 // pred_region
      _
    $region69: #{tpu_custom_call.1} parent=1 // pred_fallthru
      _
    // Predicated region
    $region70: #{tpu_custom_call.1} parent=1 // pred_check
      _
    $region71: #{tpu_custom_call.1} parent=1 // pred_check_branch
      %59 = sbr.rel (0) target = $region73
    $region72: #{tpu_custom_call.1} parent=1 // pred_region
      _
    $region73: #{tpu_custom_call.1} parent=1 // pred_fallthru
      _
    %v61 = vld [vmem:[%s0] sm:$0xf]
    %v62 = vld [vmem:[%s0 + $0x4] sm:$0xf]
    %v63 = vld [vmem:[%s0 + $0x8] sm:$0xf]
    %v64 = vld [vmem:[%s0 + $0xc] sm:$0xf]
    %v65 = vld [vmem:[%s1] sm:$0xff]
    %v66 = vld [vmem:[%s1 + $0x8] sm:$0xf]
    %v67 = vld [vmem:[%s1 + $0xc] sm:$0xff]
    %v68 = vld [vmem:[%s1 + $0x14] sm:$0xf]
    %v69 = vld [vmem:[%s1 + $0x18] sm:$0xff]
    %v70 = vld [vmem:[%s1 + $0x20] sm:$0xf]
    %v71 = vld [vmem:[%s1 + $0x24] sm:$0xff]
    %v72 = vld [vmem:[%s1 + $0x2c] sm:$0xf]
    %v77 = vunpack.c.l.b16 %v61
    %v78 = vunpack.c.l.b16 %v62
    %v79 = vunpack.c.l.b16 %v63
    %v80 = vunpack.c.l.b16 %v64
    %v81 = vpack.c.b16 %v78, %v77
    %v82 = vpack.c.b16 %v80, %v79
    %83 = vrot.lane.b32.xlu0 %v81, 8
    %v84 = vpop.permute.xlu0 %83
    %85 = vrot.lane.b32.xlu0 %v82, 8
    %v86 = vpop.permute.xlu0 %85
    %91 = vrot.lane.b32.xlu0 %v81, 6
    %v92 = vpop.permute.xlu0 %91
    %93 = vrot.lane.b32.xlu0 %v82, 6
    %v94 = vpop.permute.xlu0 %93
    %99 = vrot.lane.b32.xlu0 %v81, 4
    %v100 = vpop.permute.xlu0 %99
    %101 = vrot.lane.b32.xlu0 %v82, 4
    %v102 = vpop.permute.xlu0 %101
    %107 = vrot.lane.b32.xlu0 %v81, 2
    %v108 = vpop.permute.xlu0 %107
    %109 = vrot.lane.b32.xlu0 %v82, 2
    %v110 = vpop.permute.xlu0 %109
    %115 = vrot.lane.b32.xlu0 %v81, 126
    %v116 = vpop.permute.xlu0 %115
    %117 = vrot.lane.b32.xlu0 %v82, 126
    %v118 = vpop.permute.xlu0 %117
    %123 = vrot.lane.b32.xlu0 %v81, 124
    %v124 = vpop.permute.xlu0 %123
    %125 = vrot.lane.b32.xlu0 %v82, 124
    %v126 = vpop.permute.xlu0 %125
    %131 = vrot.lane.b32.xlu0 %v81, 122
    %v132 = vpop.permute.xlu0 %131
    %133 = vrot.lane.b32.xlu0 %v82, 122
    %v134 = vpop.permute.xlu0 %133
    %139 = vrot.lane.b32.xlu0 %v81, 120
    %v140 = vpop.permute.xlu0 %139
    %141 = vrot.lane.b32.xlu0 %v82, 120
    %v142 = vpop.permute.xlu0 %141
    %v149 = vld [vmem:[%s2] sm:$0xff]
    %v150 = vld [vmem:[%s2 + $0x8] sm:$0xff]
    %v151 = vld [vmem:[%s2 + $0x10] sm:$0xff]
    %v152 = vld [vmem:[%s2 + $0x18] sm:$0xff]
    %154 = vset.pattern.permute.xlu0 0
    %155 = vperm.xlu0 %154, %v149
    %v156 = vpop.permute.xlu0 %155
    %159 = vset.pattern.permute.xlu0 0
    %160 = vperm.xlu0 %159, %v150
    %v161 = vpop.permute.xlu0 %160
    %164 = vset.pattern.permute.xlu0 0
    %165 = vperm.xlu0 %164, %v151
    %v166 = vpop.permute.xlu0 %165
    %169 = vset.pattern.permute.xlu0 0
    %170 = vperm.xlu0 %169, %v152
    %v171 = vpop.permute.xlu0 %170
    %v181 = vunpack.c.l.b16 %v65
    %v182 = vunpack.c.h.b16 %v65
    %v183 = vunpack.c.l.b16 %v66
    %v184 = vunpack.c.l.b16 %v67
    %v185 = vunpack.c.h.b16 %v67
    %v186 = vunpack.c.l.b16 %v68
    %v187 = vunpack.c.l.b16 %v69
    %v188 = vunpack.c.h.b16 %v69
    %v189 = vunpack.c.l.b16 %v70
    %v190 = vunpack.c.l.b16 %v71
    %v191 = vunpack.c.h.b16 %v71
    %v192 = vunpack.c.l.b16 %v72
    %v193 = vpack.c.b16 %v184, %v181
    %v194 = vpack.c.b16 %v185, %v182
    %v195 = vpack.c.b16 %v186, %v183
    %v196 = vpack.c.b16 %v190, %v187
    %v197 = vpack.c.b16 %v191, %v188
    %v198 = vpack.c.b16 %v192, %v189
    %vm203 = vcmask 261120
    %v205 = vsel %vm203, %v195, 0
    %v208 = vsel %vm203, %v198, 0
    %210 = vmatpush.bf16.msra.mxu0 %v110
    %211 = vmatpush.bf16.msra.mxu0 %v108
    %212 = vmatpush.bf16.msra.mxu0 %v102
    %213 = vmatpush.bf16.msra.mxu0 %v100
    %214 = vmatpush.bf16.msra.mxu0 %v94
    %215 = vmatpush.bf16.msra.mxu0 %v92
    %216 = vmatpush.bf16.msra.mxu0 %v86
    %217 = vmatpush.bf16.msra.mxu0 %v84
    %218 = vmatmul.bf16.gmra.mxu0 %v193
    %v219 = vpop.f32.mrf.mxu0
    %v220 = vadd.f32 %v156, %v219
    %v221 = vpop.f32.mrf.mxu0
    %v222 = vadd.f32 %v161, %v221
    %223 = vmatmul.bf16.gmra.mxu0 %v196
    %v224 = vpop.f32.mrf.mxu0
    %v225 = vadd.f32 %v166, %v224
    %v226 = vpop.f32.mrf.mxu0
    %v227 = vadd.f32 %v171, %v226
    %228 = vdwg.mxu0
    %229 = vmatpush.bf16.msra.mxu0 %v134
    %230 = vmatpush.bf16.msra.mxu0 %v132
    %231 = vmatpush.bf16.msra.mxu0 %v126
    %232 = vmatpush.bf16.msra.mxu0 %v124
    %233 = vmatpush.bf16.msra.mxu0 %v118
    %234 = vmatpush.bf16.msra.mxu0 %v116
    %235 = vmatpush.bf16.msra.mxu0 %v82
    %236 = vmatpush.bf16.msra.mxu0 %v81
    %237 = vmatmul.bf16.gmra.mxu0 %v194
    %v238 = vpop.f32.mrf.mxu0
    %v239 = vadd.f32 %v220, %v238
    %v240 = vpop.f32.mrf.mxu0
    %v241 = vadd.f32 %v222, %v240
    %242 = vmatmul.bf16.gmra.mxu0 %v197
    %v243 = vpop.f32.mrf.mxu0
    %v244 = vadd.f32 %v225, %v243
    %v245 = vpop.f32.mrf.mxu0
    %v246 = vadd.f32 %v227, %v245
    %247 = vdwg.mxu0
    %248 = vmatpush.bf16.msra.mxu0 0
    %249 = vmatpush.bf16.msra.mxu0 0
    %250 = vmatpush.bf16.msra.mxu0 0
    %251 = vmatpush.bf16.msra.mxu0 0
    %252 = vmatpush.bf16.msra.mxu0 0
    %253 = vmatpush.bf16.msra.mxu0 0
    %254 = vmatpush.bf16.msra.mxu0 %v142
    %255 = vmatpush.bf16.msra.mxu0 %v140
    %256 = vmatmul.bf16.gmra.mxu0 %v205
    %v257 = vpop.f32.mrf.mxu0
    %v258 = vadd.f32 %v239, %v257
    %v259 = vpop.f32.mrf.mxu0
    %v260 = vadd.f32 %v241, %v259
    %261 = vmatmul.bf16.gmra.mxu0 %v208
    %v262 = vpop.f32.mrf.mxu0
    %v263 = vadd.f32 %v244, %v262
    %v264 = vpop.f32.mrf.mxu0
    %v265 = vadd.f32 %v246, %v264
    %266 = vdwg.mxu0
    %v267 = vmax.f32 %v258, 0.0
    %v268 = vmax.f32 %v260, 0.0
    %v269 = vmax.f32 %v263, 0.0
    %v270 = vmax.f32 %v265, 0.0
    %v271 = vld [vmem:[%s3] sm:$0xff]
    %v272 = vld [vmem:[%s3 + $0x8] sm:$0xff]
    %v273 = vld [vmem:[%s3 + $0x10] sm:$0xff]
    %v274 = vld [vmem:[%s3 + $0x18] sm:$0xff]
    %276 = vset.pattern.permute.xlu0 0
    %277 = vperm.xlu0 %276, %v271
    %v278 = vpop.permute.xlu0 %277
    %281 = vset.pattern.permute.xlu0 0
    %282 = vperm.xlu0 %281, %v272
    %v283 = vpop.permute.xlu0 %282
    %286 = vset.pattern.permute.xlu0 0
    %287 = vperm.xlu0 %286, %v273
    %v288 = vpop.permute.xlu0 %287
    %291 = vset.pattern.permute.xlu0 0
    %292 = vperm.xlu0 %291, %v274
    %v293 = vpop.permute.xlu0 %292
    %v295 = vmul.f32 %v267, %v278
    %v296 = vmul.f32 %v268, %v283
    %v297 = vmul.f32 %v269, %v288
    %v298 = vmul.f32 %v270, %v293
    %v299 = vld [vmem:[%s4] sm:$0xff]
    %v300 = vld [vmem:[%s4 + $0x8] sm:$0xff]
    %v301 = vld [vmem:[%s4 + $0x10] sm:$0xff]
    %v302 = vld [vmem:[%s4 + $0x18] sm:$0xff]
    %304 = vset.pattern.permute.xlu0 0
    %305 = vperm.xlu0 %304, %v299
    %v306 = vpop.permute.xlu0 %305
    %309 = vset.pattern.permute.xlu0 0
    %310 = vperm.xlu0 %309, %v300
    %v311 = vpop.permute.xlu0 %310
    %314 = vset.pattern.permute.xlu0 0
    %315 = vperm.xlu0 %314, %v301
    %v316 = vpop.permute.xlu0 %315
    %319 = vset.pattern.permute.xlu0 0
    %320 = vperm.xlu0 %319, %v302
    %v321 = vpop.permute.xlu0 %320
    %v323 = vadd.f32 %v295, %v306
    %v324 = vadd.f32 %v296, %v311
    %v325 = vadd.f32 %v297, %v316
    %v326 = vadd.f32 %v298, %v321
    %v327 = vpack.c.bf16 %v323, %v323
    %v328 = vpack.c.bf16 %v324, %v324
    %v329 = vpack.c.bf16 %v325, %v325
    %v330 = vpack.c.bf16 %v326, %v326
    %v331 = vld [vmem:[%s5] sm:$0xff]
    %v332 = vld [vmem:[%s5 + $0x8] sm:$0xf]
    %v333 = vld [vmem:[%s5 + $0xc] sm:$0xff]
    %v334 = vld [vmem:[%s5 + $0x14] sm:$0xf]
    %v335 = vld [vmem:[%s5 + $0x18] sm:$0xff]
    %v336 = vld [vmem:[%s5 + $0x20] sm:$0xf]
    %v337 = vld [vmem:[%s5 + $0x24] sm:$0xff]
    %v338 = vld [vmem:[%s5 + $0x2c] sm:$0xf]
    %v343 = vunpack.c.l.b16 %v327
    %v344 = vunpack.c.l.b16 %v328
    %v345 = vunpack.c.l.b16 %v329
    %v346 = vunpack.c.l.b16 %v330
    %v347 = vpack.c.b16 %v344, %v343
    %v348 = vpack.c.b16 %v346, %v345
    %349 = vrot.lane.b32.xlu0 %v347, 8
    %v350 = vpop.permute.xlu0 %349
    %351 = vrot.lane.b32.xlu0 %v348, 8
    %v352 = vpop.permute.xlu0 %351
    %357 = vrot.lane.b32.xlu0 %v347, 6
    %v358 = vpop.permute.xlu0 %357
    %359 = vrot.lane.b32.xlu0 %v348, 6
    %v360 = vpop.permute.xlu0 %359
    %365 = vrot.lane.b32.xlu0 %v347, 4
    %v366 = vpop.permute.xlu0 %365
    %367 = vrot.lane.b32.xlu0 %v348, 4
    %v368 = vpop.permute.xlu0 %367
    %373 = vrot.lane.b32.xlu0 %v347, 2
    %v374 = vpop.permute.xlu0 %373
    %375 = vrot.lane.b32.xlu0 %v348, 2
    %v376 = vpop.permute.xlu0 %375
    %381 = vrot.lane.b32.xlu0 %v347, 126
    %v382 = vpop.permute.xlu0 %381
    %383 = vrot.lane.b32.xlu0 %v348, 126
    %v384 = vpop.permute.xlu0 %383
    %389 = vrot.lane.b32.xlu0 %v347, 124
    %v390 = vpop.permute.xlu0 %389
    %391 = vrot.lane.b32.xlu0 %v348, 124
    %v392 = vpop.permute.xlu0 %391
    %397 = vrot.lane.b32.xlu0 %v347, 122
    %v398 = vpop.permute.xlu0 %397
    %399 = vrot.lane.b32.xlu0 %v348, 122
    %v400 = vpop.permute.xlu0 %399
    %405 = vrot.lane.b32.xlu0 %v347, 120
    %v406 = vpop.permute.xlu0 %405
    %407 = vrot.lane.b32.xlu0 %v348, 120
    %v408 = vpop.permute.xlu0 %407
    %v415 = vld [vmem:[%s6] sm:$0xff]
    %v416 = vld [vmem:[%s6 + $0x8] sm:$0xff]
    %v417 = vld [vmem:[%s6 + $0x10] sm:$0xff]
    %v418 = vld [vmem:[%s6 + $0x18] sm:$0xff]
    %420 = vset.pattern.permute.xlu0 0
    %421 = vperm.xlu0 %420, %v415
    %v422 = vpop.permute.xlu0 %421
    %425 = vset.pattern.permute.xlu0 0
    %426 = vperm.xlu0 %425, %v416
    %v427 = vpop.permute.xlu0 %426
    %430 = vset.pattern.permute.xlu0 0
    %431 = vperm.xlu0 %430, %v417
    %v432 = vpop.permute.xlu0 %431
    %435 = vset.pattern.permute.xlu0 0
    %436 = vperm.xlu0 %435, %v418
    %v437 = vpop.permute.xlu0 %436
    %v447 = vunpack.c.l.b16 %v331
    %v448 = vunpack.c.h.b16 %v331
    %v449 = vunpack.c.l.b16 %v332
    %v450 = vunpack.c.l.b16 %v333
    %v451 = vunpack.c.h.b16 %v333
    %v452 = vunpack.c.l.b16 %v334
    %v453 = vunpack.c.l.b16 %v335
    %v454 = vunpack.c.h.b16 %v335
    %v455 = vunpack.c.l.b16 %v336
    %v456 = vunpack.c.l.b16 %v337
    %v457 = vunpack.c.h.b16 %v337
    %v458 = vunpack.c.l.b16 %v338
    %v459 = vpack.c.b16 %v450, %v447
    %v460 = vpack.c.b16 %v451, %v448
    %v461 = vpack.c.b16 %v452, %v449
    %v462 = vpack.c.b16 %v456, %v453
    %v463 = vpack.c.b16 %v457, %v454
    %v464 = vpack.c.b16 %v458, %v455
    %v470 = vsel %vm203, %v461, 0
    %v473 = vsel %vm203, %v464, 0
    %475 = vmatpush.bf16.msra.mxu0 %v376
    %476 = vmatpush.bf16.msra.mxu0 %v374
    %477 = vmatpush.bf16.msra.mxu0 %v368
    %478 = vmatpush.bf16.msra.mxu0 %v366
    %479 = vmatpush.bf16.msra.mxu0 %v360
    %480 = vmatpush.bf16.msra.mxu0 %v358
    %481 = vmatpush.bf16.msra.mxu0 %v352
    %482 = vmatpush.bf16.msra.mxu0 %v350
    %483 = vmatmul.bf16.gmra.mxu0 %v459
    %v484 = vpop.f32.mrf.mxu0
    %v485 = vadd.f32 %v422, %v484
    %v486 = vpop.f32.mrf.mxu0
    %v487 = vadd.f32 %v427, %v486
    %488 = vmatmul.bf16.gmra.mxu0 %v462
    %v489 = vpop.f32.mrf.mxu0
    %v490 = vadd.f32 %v432, %v489
    %v491 = vpop.f32.mrf.mxu0
    %v492 = vadd.f32 %v437, %v491
    %493 = vdwg.mxu0
    %494 = vmatpush.bf16.msra.mxu0 %v400
    %495 = vmatpush.bf16.msra.mxu0 %v398
    %496 = vmatpush.bf16.msra.mxu0 %v392
    %497 = vmatpush.bf16.msra.mxu0 %v390
    %498 = vmatpush.bf16.msra.mxu0 %v384
    %499 = vmatpush.bf16.msra.mxu0 %v382
    %500 = vmatpush.bf16.msra.mxu0 %v348
    %501 = vmatpush.bf16.msra.mxu0 %v347
    %502 = vmatmul.bf16.gmra.mxu0 %v460
    %v503 = vpop.f32.mrf.mxu0
    %v504 = vadd.f32 %v485, %v503
    %v505 = vpop.f32.mrf.mxu0
    %v506 = vadd.f32 %v487, %v505
    %507 = vmatmul.bf16.gmra.mxu0 %v463
    %v508 = vpop.f32.mrf.mxu0
    %v509 = vadd.f32 %v490, %v508
    %v510 = vpop.f32.mrf.mxu0
    %v511 = vadd.f32 %v492, %v510
    %512 = vdwg.mxu0
    %513 = vmatpush.bf16.msra.mxu0 0
    %514 = vmatpush.bf16.msra.mxu0 0
    %515 = vmatpush.bf16.msra.mxu0 0
    %516 = vmatpush.bf16.msra.mxu0 0
    %517 = vmatpush.bf16.msra.mxu0 0
    %518 = vmatpush.bf16.msra.mxu0 0
    %519 = vmatpush.bf16.msra.mxu0 %v408
    %520 = vmatpush.bf16.msra.mxu0 %v406
    %521 = vmatmul.bf16.gmra.mxu0 %v470
    %v522 = vpop.f32.mrf.mxu0
    %v523 = vadd.f32 %v504, %v522
    %v524 = vpop.f32.mrf.mxu0
    %v525 = vadd.f32 %v506, %v524
    %526 = vmatmul.bf16.gmra.mxu0 %v473
    %v527 = vpop.f32.mrf.mxu0
    %v528 = vadd.f32 %v509, %v527
    %v529 = vpop.f32.mrf.mxu0
    %v530 = vadd.f32 %v511, %v529
    %531 = vdwg.mxu0
    %v532 = vmax.f32 %v523, 0.0
    %v533 = vmax.f32 %v525, 0.0
    %v534 = vmax.f32 %v528, 0.0
    %v535 = vmax.f32 %v530, 0.0
    %v536 = vld [vmem:[%s7] sm:$0xff]
    %v537 = vld [vmem:[%s7 + $0x8] sm:$0xff]
    %v538 = vld [vmem:[%s7 + $0x10] sm:$0xff]
    %v539 = vld [vmem:[%s7 + $0x18] sm:$0xff]
    %541 = vset.pattern.permute.xlu0 0
    %542 = vperm.xlu0 %541, %v536
    %v543 = vpop.permute.xlu0 %542
    %546 = vset.pattern.permute.xlu0 0
    %547 = vperm.xlu0 %546, %v537
    %v548 = vpop.permute.xlu0 %547
    %551 = vset.pattern.permute.xlu0 0
    %552 = vperm.xlu0 %551, %v538
    %v553 = vpop.permute.xlu0 %552
    %556 = vset.pattern.permute.xlu0 0
    %557 = vperm.xlu0 %556, %v539
    %v558 = vpop.permute.xlu0 %557
    %v560 = vmul.f32 %v532, %v543
    %v561 = vmul.f32 %v533, %v548
    %v562 = vmul.f32 %v534, %v553
    %v563 = vmul.f32 %v535, %v558
    %v564 = vld [vmem:[%s8] sm:$0xff]
    %v565 = vld [vmem:[%s8 + $0x8] sm:$0xff]
    %v566 = vld [vmem:[%s8 + $0x10] sm:$0xff]
    %v567 = vld [vmem:[%s8 + $0x18] sm:$0xff]
    %569 = vset.pattern.permute.xlu0 0
    %570 = vperm.xlu0 %569, %v564
    %v571 = vpop.permute.xlu0 %570
    %574 = vset.pattern.permute.xlu0 0
    %575 = vperm.xlu0 %574, %v565
    %v576 = vpop.permute.xlu0 %575
    %579 = vset.pattern.permute.xlu0 0
    %580 = vperm.xlu0 %579, %v566
    %v581 = vpop.permute.xlu0 %580
    %584 = vset.pattern.permute.xlu0 0
    %585 = vperm.xlu0 %584, %v567
    %v586 = vpop.permute.xlu0 %585
    %v588 = vadd.f32 %v560, %v571
    %v589 = vadd.f32 %v561, %v576
    %v590 = vadd.f32 %v562, %v581
    %v591 = vadd.f32 %v563, %v586
    %v592 = vadd.f32 %v588, %v323
    %v593 = vadd.f32 %v589, %v324
    %v594 = vadd.f32 %v590, %v325
    %v595 = vadd.f32 %v591, %v326
    %v596 = vpack.c.bf16 %v592, %v592
    %v597 = vpack.c.bf16 %v593, %v593
    %v598 = vpack.c.bf16 %v594, %v594
    %v599 = vpack.c.bf16 %v595, %v595
    %s600 = scalar_lea.vmem %s5, 48
    %v601 = vld [vmem:[%s600] sm:$0xff]
    %v602 = vld [vmem:[%s600 + $0x8] sm:$0xf]
    %v603 = vld [vmem:[%s600 + $0xc] sm:$0xff]
    %v604 = vld [vmem:[%s600 + $0x14] sm:$0xf]
    %v605 = vld [vmem:[%s600 + $0x18] sm:$0xff]
    %v606 = vld [vmem:[%s600 + $0x20] sm:$0xf]
    %v607 = vld [vmem:[%s600 + $0x24] sm:$0xff]
    %v608 = vld [vmem:[%s600 + $0x2c] sm:$0xf]
    %v613 = vunpack.c.l.b16 %v596
    %v614 = vunpack.c.l.b16 %v597
    %v615 = vunpack.c.l.b16 %v598
    %v616 = vunpack.c.l.b16 %v599
    %v617 = vpack.c.b16 %v614, %v613
    %v618 = vpack.c.b16 %v616, %v615
    %619 = vrot.lane.b32.xlu0 %v617, 8
    %v620 = vpop.permute.xlu0 %619
    %621 = vrot.lane.b32.xlu0 %v618, 8
    %v622 = vpop.permute.xlu0 %621
    %627 = vrot.lane.b32.xlu0 %v617, 6
    %v628 = vpop.permute.xlu0 %627
    %629 = vrot.lane.b32.xlu0 %v618, 6
    %v630 = vpop.permute.xlu0 %629
    %635 = vrot.lane.b32.xlu0 %v617, 4
    %v636 = vpop.permute.xlu0 %635
    %637 = vrot.lane.b32.xlu0 %v618, 4
    %v638 = vpop.permute.xlu0 %637
    %643 = vrot.lane.b32.xlu0 %v617, 2
    %v644 = vpop.permute.xlu0 %643
    %645 = vrot.lane.b32.xlu0 %v618, 2
    %v646 = vpop.permute.xlu0 %645
    %651 = vrot.lane.b32.xlu0 %v617, 126
    %v652 = vpop.permute.xlu0 %651
    %653 = vrot.lane.b32.xlu0 %v618, 126
    %v654 = vpop.permute.xlu0 %653
    %659 = vrot.lane.b32.xlu0 %v617, 124
    %v660 = vpop.permute.xlu0 %659
    %661 = vrot.lane.b32.xlu0 %v618, 124
    %v662 = vpop.permute.xlu0 %661
    %667 = vrot.lane.b32.xlu0 %v617, 122
    %v668 = vpop.permute.xlu0 %667
    %669 = vrot.lane.b32.xlu0 %v618, 122
    %v670 = vpop.permute.xlu0 %669
    %675 = vrot.lane.b32.xlu0 %v617, 120
    %v676 = vpop.permute.xlu0 %675
    %677 = vrot.lane.b32.xlu0 %v618, 120
    %v678 = vpop.permute.xlu0 %677
    %s685 = scalar_lea.vmem %s6, 32
    %v686 = vld [vmem:[%s685] sm:$0xff]
    %v687 = vld [vmem:[%s685 + $0x8] sm:$0xff]
    %v688 = vld [vmem:[%s685 + $0x10] sm:$0xff]
    %v689 = vld [vmem:[%s685 + $0x18] sm:$0xff]
    %691 = vset.pattern.permute.xlu0 0
    %692 = vperm.xlu0 %691, %v686
    %v693 = vpop.permute.xlu0 %692
    %696 = vset.pattern.permute.xlu0 0
    %697 = vperm.xlu0 %696, %v687
    %v698 = vpop.permute.xlu0 %697
    %701 = vset.pattern.permute.xlu0 0
    %702 = vperm.xlu0 %701, %v688
    %v703 = vpop.permute.xlu0 %702
    %706 = vset.pattern.permute.xlu0 0
    %707 = vperm.xlu0 %706, %v689
    %v708 = vpop.permute.xlu0 %707
    %v718 = vunpack.c.l.b16 %v601
    %v719 = vunpack.c.h.b16 %v601
    %v720 = vunpack.c.l.b16 %v602
    %v721 = vunpack.c.l.b16 %v603
    %v722 = vunpack.c.h.b16 %v603
    %v723 = vunpack.c.l.b16 %v604
    %v724 = vunpack.c.l.b16 %v605
    %v725 = vunpack.c.h.b16 %v605
    %v726 = vunpack.c.l.b16 %v606
    %v727 = vunpack.c.l.b16 %v607
    %v728 = vunpack.c.h.b16 %v607
    %v729 = vunpack.c.l.b16 %v608
    %v730 = vpack.c.b16 %v721, %v718
    %v731 = vpack.c.b16 %v722, %v719
    %v732 = vpack.c.b16 %v723, %v720
    %v733 = vpack.c.b16 %v727, %v724
    %v734 = vpack.c.b16 %v728, %v725
    %v735 = vpack.c.b16 %v729, %v726
    %v741 = vsel %vm203, %v732, 0
    %v744 = vsel %vm203, %v735, 0
    %746 = vmatpush.bf16.msra.mxu0 %v646
    %747 = vmatpush.bf16.msra.mxu0 %v644
    %748 = vmatpush.bf16.msra.mxu0 %v638
    %749 = vmatpush.bf16.msra.mxu0 %v636
    %750 = vmatpush.bf16.msra.mxu0 %v630
    %751 = vmatpush.bf16.msra.mxu0 %v628
    %752 = vmatpush.bf16.msra.mxu0 %v622
    %753 = vmatpush.bf16.msra.mxu0 %v620
    %754 = vmatmul.bf16.gmra.mxu0 %v730
    %v755 = vpop.f32.mrf.mxu0
    %v756 = vadd.f32 %v693, %v755
    %v757 = vpop.f32.mrf.mxu0
    %v758 = vadd.f32 %v698, %v757
    %759 = vmatmul.bf16.gmra.mxu0 %v733
    %v760 = vpop.f32.mrf.mxu0
    %v761 = vadd.f32 %v703, %v760
    %v762 = vpop.f32.mrf.mxu0
    %v763 = vadd.f32 %v708, %v762
    %764 = vdwg.mxu0
    %765 = vmatpush.bf16.msra.mxu0 %v670
    %766 = vmatpush.bf16.msra.mxu0 %v668
    %767 = vmatpush.bf16.msra.mxu0 %v662
    %768 = vmatpush.bf16.msra.mxu0 %v660
    %769 = vmatpush.bf16.msra.mxu0 %v654
    %770 = vmatpush.bf16.msra.mxu0 %v652
    %771 = vmatpush.bf16.msra.mxu0 %v618
    %772 = vmatpush.bf16.msra.mxu0 %v617
    %773 = vmatmul.bf16.gmra.mxu0 %v731
    %v774 = vpop.f32.mrf.mxu0
    %v775 = vadd.f32 %v756, %v774
    %v776 = vpop.f32.mrf.mxu0
    %v777 = vadd.f32 %v758, %v776
    %778 = vmatmul.bf16.gmra.mxu0 %v734
    %v779 = vpop.f32.mrf.mxu0
    %v780 = vadd.f32 %v761, %v779
    %v781 = vpop.f32.mrf.mxu0
    %v782 = vadd.f32 %v763, %v781
    %783 = vdwg.mxu0
    %784 = vmatpush.bf16.msra.mxu0 0
    %785 = vmatpush.bf16.msra.mxu0 0
    %786 = vmatpush.bf16.msra.mxu0 0
    %787 = vmatpush.bf16.msra.mxu0 0
    %788 = vmatpush.bf16.msra.mxu0 0
    %789 = vmatpush.bf16.msra.mxu0 0
    %790 = vmatpush.bf16.msra.mxu0 %v678
    %791 = vmatpush.bf16.msra.mxu0 %v676
    %792 = vmatmul.bf16.gmra.mxu0 %v741
    %v793 = vpop.f32.mrf.mxu0
    %v794 = vadd.f32 %v775, %v793
    %v795 = vpop.f32.mrf.mxu0
    %v796 = vadd.f32 %v777, %v795
    %797 = vmatmul.bf16.gmra.mxu0 %v744
    %v798 = vpop.f32.mrf.mxu0
    %v799 = vadd.f32 %v780, %v798
    %v800 = vpop.f32.mrf.mxu0
    %v801 = vadd.f32 %v782, %v800
    %802 = vdwg.mxu0
    %v803 = vmax.f32 %v794, 0.0
    %v804 = vmax.f32 %v796, 0.0
    %v805 = vmax.f32 %v799, 0.0
    %v806 = vmax.f32 %v801, 0.0
    %s807 = scalar_lea.vmem %s7, 32
    %v808 = vld [vmem:[%s807] sm:$0xff]
    %v809 = vld [vmem:[%s807 + $0x8] sm:$0xff]
    %v810 = vld [vmem:[%s807 + $0x10] sm:$0xff]
    %v811 = vld [vmem:[%s807 + $0x18] sm:$0xff]
    %813 = vset.pattern.permute.xlu0 0
    %814 = vperm.xlu0 %813, %v808
    %v815 = vpop.permute.xlu0 %814
    %818 = vset.pattern.permute.xlu0 0
    %819 = vperm.xlu0 %818, %v809
    %v820 = vpop.permute.xlu0 %819
    %823 = vset.pattern.permute.xlu0 0
    %824 = vperm.xlu0 %823, %v810
    %v825 = vpop.permute.xlu0 %824
    %828 = vset.pattern.permute.xlu0 0
    %829 = vperm.xlu0 %828, %v811
    %v830 = vpop.permute.xlu0 %829
    %v832 = vmul.f32 %v803, %v815
    %v833 = vmul.f32 %v804, %v820
    %v834 = vmul.f32 %v805, %v825
    %v835 = vmul.f32 %v806, %v830
    %s836 = scalar_lea.vmem %s8, 32
    %v837 = vld [vmem:[%s836] sm:$0xff]
    %v838 = vld [vmem:[%s836 + $0x8] sm:$0xff]
    %v839 = vld [vmem:[%s836 + $0x10] sm:$0xff]
    %v840 = vld [vmem:[%s836 + $0x18] sm:$0xff]
    %842 = vset.pattern.permute.xlu0 0
    %843 = vperm.xlu0 %842, %v837
    %v844 = vpop.permute.xlu0 %843
    %847 = vset.pattern.permute.xlu0 0
    %848 = vperm.xlu0 %847, %v838
    %v849 = vpop.permute.xlu0 %848
    %852 = vset.pattern.permute.xlu0 0
    %853 = vperm.xlu0 %852, %v839
    %v854 = vpop.permute.xlu0 %853
    %857 = vset.pattern.permute.xlu0 0
    %858 = vperm.xlu0 %857, %v840
    %v859 = vpop.permute.xlu0 %858
    %v861 = vadd.f32 %v832, %v844
    %v862 = vadd.f32 %v833, %v849
    %v863 = vadd.f32 %v834, %v854
    %v864 = vadd.f32 %v835, %v859
    %v865 = vadd.f32 %v861, %v592
    %v866 = vadd.f32 %v862, %v593
    %v867 = vadd.f32 %v863, %v594
    %v868 = vadd.f32 %v864, %v595
    %v869 = vpack.c.bf16 %v865, %v865
    %v870 = vpack.c.bf16 %v866, %v866
    %v871 = vpack.c.bf16 %v867, %v867
    %v872 = vpack.c.bf16 %v868, %v868
    %s873 = scalar_lea.vmem %s5, 96
    %v874 = vld [vmem:[%s873] sm:$0xff]
    %v875 = vld [vmem:[%s873 + $0x8] sm:$0xf]
    %v876 = vld [vmem:[%s873 + $0xc] sm:$0xff]
    %v877 = vld [vmem:[%s873 + $0x14] sm:$0xf]
    %v878 = vld [vmem:[%s873 + $0x18] sm:$0xff]
    %v879 = vld [vmem:[%s873 + $0x20] sm:$0xf]
    %v880 = vld [vmem:[%s873 + $0x24] sm:$0xff]
    %v881 = vld [vmem:[%s873 + $0x2c] sm:$0xf]
    %v886 = vunpack.c.l.b16 %v869
    %v887 = vunpack.c.l.b16 %v870
    %v888 = vunpack.c.l.b16 %v871
    %v889 = vunpack.c.l.b16 %v872
    %v890 = vpack.c.b16 %v887, %v886
    %v891 = vpack.c.b16 %v889, %v888
    %892 = vrot.lane.b32.xlu0 %v890, 8
    %v893 = vpop.permute.xlu0 %892
    %894 = vrot.lane.b32.xlu0 %v891, 8
    %v895 = vpop.permute.xlu0 %894
    %900 = vrot.lane.b32.xlu0 %v890, 6
    %v901 = vpop.permute.xlu0 %900
    %902 = vrot.lane.b32.xlu0 %v891, 6
    %v903 = vpop.permute.xlu0 %902
    %908 = vrot.lane.b32.xlu0 %v890, 4
    %v909 = vpop.permute.xlu0 %908
    %910 = vrot.lane.b32.xlu0 %v891, 4
    %v911 = vpop.permute.xlu0 %910
    %916 = vrot.lane.b32.xlu0 %v890, 2
    %v917 = vpop.permute.xlu0 %916
    %918 = vrot.lane.b32.xlu0 %v891, 2
    %v919 = vpop.permute.xlu0 %918
    %924 = vrot.lane.b32.xlu0 %v890, 126
    %v925 = vpop.permute.xlu0 %924
    %926 = vrot.lane.b32.xlu0 %v891, 126
    %v927 = vpop.permute.xlu0 %926
    %932 = vrot.lane.b32.xlu0 %v890, 124
    %v933 = vpop.permute.xlu0 %932
    %934 = vrot.lane.b32.xlu0 %v891, 124
    %v935 = vpop.permute.xlu0 %934
    %940 = vrot.lane.b32.xlu0 %v890, 122
    %v941 = vpop.permute.xlu0 %940
    %942 = vrot.lane.b32.xlu0 %v891, 122
    %v943 = vpop.permute.xlu0 %942
    %948 = vrot.lane.b32.xlu0 %v890, 120
    %v949 = vpop.permute.xlu0 %948
    %950 = vrot.lane.b32.xlu0 %v891, 120
    %v951 = vpop.permute.xlu0 %950
    %s958 = scalar_lea.vmem %s6, 64
    %v959 = vld [vmem:[%s958] sm:$0xff]
    %v960 = vld [vmem:[%s958 + $0x8] sm:$0xff]
    %v961 = vld [vmem:[%s958 + $0x10] sm:$0xff]
    %v962 = vld [vmem:[%s958 + $0x18] sm:$0xff]
    %964 = vset.pattern.permute.xlu0 0
    %965 = vperm.xlu0 %964, %v959
    %v966 = vpop.permute.xlu0 %965
    %969 = vset.pattern.permute.xlu0 0
    %970 = vperm.xlu0 %969, %v960
    %v971 = vpop.permute.xlu0 %970
    %974 = vset.pattern.permute.xlu0 0
    %975 = vperm.xlu0 %974, %v961
    %v976 = vpop.permute.xlu0 %975
    %979 = vset.pattern.permute.xlu0 0
    %980 = vperm.xlu0 %979, %v962
    %v981 = vpop.permute.xlu0 %980
    %v991 = vunpack.c.l.b16 %v874
    %v992 = vunpack.c.h.b16 %v874
    %v993 = vunpack.c.l.b16 %v875
    %v994 = vunpack.c.l.b16 %v876
    %v995 = vunpack.c.h.b16 %v876
    %v996 = vunpack.c.l.b16 %v877
    %v997 = vunpack.c.l.b16 %v878
    %v998 = vunpack.c.h.b16 %v878
    %v999 = vunpack.c.l.b16 %v879
    %v1000 = vunpack.c.l.b16 %v880
    %v1001 = vunpack.c.h.b16 %v880
    %v1002 = vunpack.c.l.b16 %v881
    %v1003 = vpack.c.b16 %v994, %v991
    %v1004 = vpack.c.b16 %v995, %v992
    %v1005 = vpack.c.b16 %v996, %v993
    %v1006 = vpack.c.b16 %v1000, %v997
    %v1007 = vpack.c.b16 %v1001, %v998
    %v1008 = vpack.c.b16 %v1002, %v999
    %v1014 = vsel %vm203, %v1005, 0
    %v1017 = vsel %vm203, %v1008, 0
    %1019 = vmatpush.bf16.msra.mxu0 %v919
    %1020 = vmatpush.bf16.msra.mxu0 %v917
    %1021 = vmatpush.bf16.msra.mxu0 %v911
    %1022 = vmatpush.bf16.msra.mxu0 %v909
    %1023 = vmatpush.bf16.msra.mxu0 %v903
    %1024 = vmatpush.bf16.msra.mxu0 %v901
    %1025 = vmatpush.bf16.msra.mxu0 %v895
    %1026 = vmatpush.bf16.msra.mxu0 %v893
    %1027 = vmatmul.bf16.gmra.mxu0 %v1003
    %v1028 = vpop.f32.mrf.mxu0
    %v1029 = vadd.f32 %v966, %v1028
    %v1030 = vpop.f32.mrf.mxu0
    %v1031 = vadd.f32 %v971, %v1030
    %1032 = vmatmul.bf16.gmra.mxu0 %v1006
    %v1033 = vpop.f32.mrf.mxu0
    %v1034 = vadd.f32 %v976, %v1033
    %v1035 = vpop.f32.mrf.mxu0
    %v1036 = vadd.f32 %v981, %v1035
    %1037 = vdwg.mxu0
    %1038 = vmatpush.bf16.msra.mxu0 %v943
    %1039 = vmatpush.bf16.msra.mxu0 %v941
    %1040 = vmatpush.bf16.msra.mxu0 %v935
    %1041 = vmatpush.bf16.msra.mxu0 %v933
    %1042 = vmatpush.bf16.msra.mxu0 %v927
    %1043 = vmatpush.bf16.msra.mxu0 %v925
    %1044 = vmatpush.bf16.msra.mxu0 %v891
    %1045 = vmatpush.bf16.msra.mxu0 %v890
    %1046 = vmatmul.bf16.gmra.mxu0 %v1004
    %v1047 = vpop.f32.mrf.mxu0
    %v1048 = vadd.f32 %v1029, %v1047
    %v1049 = vpop.f32.mrf.mxu0
    %v1050 = vadd.f32 %v1031, %v1049
    %1051 = vmatmul.bf16.gmra.mxu0 %v1007
    %v1052 = vpop.f32.mrf.mxu0
    %v1053 = vadd.f32 %v1034, %v1052
    %v1054 = vpop.f32.mrf.mxu0
    %v1055 = vadd.f32 %v1036, %v1054
    %1056 = vdwg.mxu0
    %1057 = vmatpush.bf16.msra.mxu0 0
    %1058 = vmatpush.bf16.msra.mxu0 0
    %1059 = vmatpush.bf16.msra.mxu0 0
    %1060 = vmatpush.bf16.msra.mxu0 0
    %1061 = vmatpush.bf16.msra.mxu0 0
    %1062 = vmatpush.bf16.msra.mxu0 0
    %1063 = vmatpush.bf16.msra.mxu0 %v951
    %1064 = vmatpush.bf16.msra.mxu0 %v949
    %1065 = vmatmul.bf16.gmra.mxu0 %v1014
    %v1066 = vpop.f32.mrf.mxu0
    %v1067 = vadd.f32 %v1048, %v1066
    %v1068 = vpop.f32.mrf.mxu0
    %v1069 = vadd.f32 %v1050, %v1068
    %1070 = vmatmul.bf16.gmra.mxu0 %v1017
    %v1071 = vpop.f32.mrf.mxu0
    %v1072 = vadd.f32 %v1053, %v1071
    %v1073 = vpop.f32.mrf.mxu0
    %v1074 = vadd.f32 %v1055, %v1073
    %1075 = vdwg.mxu0
    %v1076 = vmax.f32 %v1067, 0.0
    %v1077 = vmax.f32 %v1069, 0.0
    %v1078 = vmax.f32 %v1072, 0.0
    %v1079 = vmax.f32 %v1074, 0.0
    %s1080 = scalar_lea.vmem %s7, 64
    %v1081 = vld [vmem:[%s1080] sm:$0xff]
    %v1082 = vld [vmem:[%s1080 + $0x8] sm:$0xff]
    %v1083 = vld [vmem:[%s1080 + $0x10] sm:$0xff]
    %v1084 = vld [vmem:[%s1080 + $0x18] sm:$0xff]
    %1086 = vset.pattern.permute.xlu0 0
    %1087 = vperm.xlu0 %1086, %v1081
    %v1088 = vpop.permute.xlu0 %1087
    %1091 = vset.pattern.permute.xlu0 0
    %1092 = vperm.xlu0 %1091, %v1082
    %v1093 = vpop.permute.xlu0 %1092
    %1096 = vset.pattern.permute.xlu0 0
    %1097 = vperm.xlu0 %1096, %v1083
    %v1098 = vpop.permute.xlu0 %1097
    %1101 = vset.pattern.permute.xlu0 0
    %1102 = vperm.xlu0 %1101, %v1084
    %v1103 = vpop.permute.xlu0 %1102
    %v1105 = vmul.f32 %v1076, %v1088
    %v1106 = vmul.f32 %v1077, %v1093
    %v1107 = vmul.f32 %v1078, %v1098
    %v1108 = vmul.f32 %v1079, %v1103
    %s1109 = scalar_lea.vmem %s8, 64
    %v1110 = vld [vmem:[%s1109] sm:$0xff]
    %v1111 = vld [vmem:[%s1109 + $0x8] sm:$0xff]
    %v1112 = vld [vmem:[%s1109 + $0x10] sm:$0xff]
    %v1113 = vld [vmem:[%s1109 + $0x18] sm:$0xff]
    %1115 = vset.pattern.permute.xlu0 0
    %1116 = vperm.xlu0 %1115, %v1110
    %v1117 = vpop.permute.xlu0 %1116
    %1120 = vset.pattern.permute.xlu0 0
    %1121 = vperm.xlu0 %1120, %v1111
    %v1122 = vpop.permute.xlu0 %1121
    %1125 = vset.pattern.permute.xlu0 0
    %1126 = vperm.xlu0 %1125, %v1112
    %v1127 = vpop.permute.xlu0 %1126
    %1130 = vset.pattern.permute.xlu0 0
    %1131 = vperm.xlu0 %1130, %v1113
    %v1132 = vpop.permute.xlu0 %1131
    %v1134 = vadd.f32 %v1105, %v1117
    %v1135 = vadd.f32 %v1106, %v1122
    %v1136 = vadd.f32 %v1107, %v1127
    %v1137 = vadd.f32 %v1108, %v1132
    %v1138 = vadd.f32 %v1134, %v865
    %v1139 = vadd.f32 %v1135, %v866
    %v1140 = vadd.f32 %v1136, %v867
    %v1141 = vadd.f32 %v1137, %v868
    %v1142 = vpack.c.bf16 %v1138, %v1138
    %v1143 = vpack.c.bf16 %v1139, %v1139
    %v1144 = vpack.c.bf16 %v1140, %v1140
    %v1145 = vpack.c.bf16 %v1141, %v1141
    %s1146 = scalar_lea.vmem %s5, 144
    %v1147 = vld [vmem:[%s1146] sm:$0xff]
    %v1148 = vld [vmem:[%s1146 + $0x8] sm:$0xf]
    %v1149 = vld [vmem:[%s1146 + $0xc] sm:$0xff]
    %v1150 = vld [vmem:[%s1146 + $0x14] sm:$0xf]
    %v1151 = vld [vmem:[%s1146 + $0x18] sm:$0xff]
    %v1152 = vld [vmem:[%s1146 + $0x20] sm:$0xf]
    %v1153 = vld [vmem:[%s1146 + $0x24] sm:$0xff]
    %v1154 = vld [vmem:[%s1146 + $0x2c] sm:$0xf]
    %v1159 = vunpack.c.l.b16 %v1142
    %v1160 = vunpack.c.l.b16 %v1143
    %v1161 = vunpack.c.l.b16 %v1144
    %v1162 = vunpack.c.l.b16 %v1145
    %v1163 = vpack.c.b16 %v1160, %v1159
    %v1164 = vpack.c.b16 %v1162, %v1161
    %1165 = vrot.lane.b32.xlu0 %v1163, 16
    %v1166 = vpop.permute.xlu0 %1165
    %1167 = vrot.lane.b32.xlu0 %v1164, 16
    %v1168 = vpop.permute.xlu0 %1167
    %1173 = vrot.lane.b32.xlu0 %v1163, 12
    %v1174 = vpop.permute.xlu0 %1173
    %1175 = vrot.lane.b32.xlu0 %v1164, 12
    %v1176 = vpop.permute.xlu0 %1175
    %1181 = vrot.lane.b32.xlu0 %v1163, 8
    %v1182 = vpop.permute.xlu0 %1181
    %1183 = vrot.lane.b32.xlu0 %v1164, 8
    %v1184 = vpop.permute.xlu0 %1183
    %1189 = vrot.lane.b32.xlu0 %v1163, 4
    %v1190 = vpop.permute.xlu0 %1189
    %1191 = vrot.lane.b32.xlu0 %v1164, 4
    %v1192 = vpop.permute.xlu0 %1191
    %1197 = vrot.lane.b32.xlu0 %v1163, 124
    %v1198 = vpop.permute.xlu0 %1197
    %1199 = vrot.lane.b32.xlu0 %v1164, 124
    %v1200 = vpop.permute.xlu0 %1199
    %1205 = vrot.lane.b32.xlu0 %v1163, 120
    %v1206 = vpop.permute.xlu0 %1205
    %1207 = vrot.lane.b32.xlu0 %v1164, 120
    %v1208 = vpop.permute.xlu0 %1207
    %1213 = vrot.lane.b32.xlu0 %v1163, 116
    %v1214 = vpop.permute.xlu0 %1213
    %1215 = vrot.lane.b32.xlu0 %v1164, 116
    %v1216 = vpop.permute.xlu0 %1215
    %1221 = vrot.lane.b32.xlu0 %v1163, 112
    %v1222 = vpop.permute.xlu0 %1221
    %1223 = vrot.lane.b32.xlu0 %v1164, 112
    %v1224 = vpop.permute.xlu0 %1223
    %s1231 = scalar_lea.vmem %s6, 96
    %v1232 = vld [vmem:[%s1231] sm:$0xff]
    %v1233 = vld [vmem:[%s1231 + $0x8] sm:$0xff]
    %v1234 = vld [vmem:[%s1231 + $0x10] sm:$0xff]
    %v1235 = vld [vmem:[%s1231 + $0x18] sm:$0xff]
    %1237 = vset.pattern.permute.xlu0 0
    %1238 = vperm.xlu0 %1237, %v1232
    %v1239 = vpop.permute.xlu0 %1238
    %1242 = vset.pattern.permute.xlu0 0
    %1243 = vperm.xlu0 %1242, %v1233
    %v1244 = vpop.permute.xlu0 %1243
    %1247 = vset.pattern.permute.xlu0 0
    %1248 = vperm.xlu0 %1247, %v1234
    %v1249 = vpop.permute.xlu0 %1248
    %1252 = vset.pattern.permute.xlu0 0
    %1253 = vperm.xlu0 %1252, %v1235
    %v1254 = vpop.permute.xlu0 %1253
    %v1264 = vunpack.c.l.b16 %v1147
    %v1265 = vunpack.c.h.b16 %v1147
    %v1266 = vunpack.c.l.b16 %v1148
    %v1267 = vunpack.c.l.b16 %v1149
    %v1268 = vunpack.c.h.b16 %v1149
    %v1269 = vunpack.c.l.b16 %v1150
    %v1270 = vunpack.c.l.b16 %v1151
    %v1271 = vunpack.c.h.b16 %v1151
    %v1272 = vunpack.c.l.b16 %v1152
    %v1273 = vunpack.c.l.b16 %v1153
    %v1274 = vunpack.c.h.b16 %v1153
    %v1275 = vunpack.c.l.b16 %v1154
    %v1276 = vpack.c.b16 %v1267, %v1264
    %v1277 = vpack.c.b16 %v1268, %v1265
    %v1278 = vpack.c.b16 %v1269, %v1266
    %v1279 = vpack.c.b16 %v1273, %v1270
    %v1280 = vpack.c.b16 %v1274, %v1271
    %v1281 = vpack.c.b16 %v1275, %v1272
    %v1287 = vsel %vm203, %v1278, 0
    %v1290 = vsel %vm203, %v1281, 0
    %1292 = vmatpush.bf16.msra.mxu0 %v1192
    %1293 = vmatpush.bf16.msra.mxu0 %v1190
    %1294 = vmatpush.bf16.msra.mxu0 %v1184
    %1295 = vmatpush.bf16.msra.mxu0 %v1182
    %1296 = vmatpush.bf16.msra.mxu0 %v1176
    %1297 = vmatpush.bf16.msra.mxu0 %v1174
    %1298 = vmatpush.bf16.msra.mxu0 %v1168
    %1299 = vmatpush.bf16.msra.mxu0 %v1166
    %1300 = vmatmul.bf16.gmra.mxu0 %v1276
    %v1301 = vpop.f32.mrf.mxu0
    %v1302 = vadd.f32 %v1239, %v1301
    %v1303 = vpop.f32.mrf.mxu0
    %v1304 = vadd.f32 %v1244, %v1303
    %1305 = vmatmul.bf16.gmra.mxu0 %v1279
    %v1306 = vpop.f32.mrf.mxu0
    %v1307 = vadd.f32 %v1249, %v1306
    %v1308 = vpop.f32.mrf.mxu0
    %v1309 = vadd.f32 %v1254, %v1308
    %1310 = vdwg.mxu0
    %1311 = vmatpush.bf16.msra.mxu0 %v1216
    %1312 = vmatpush.bf16.msra.mxu0 %v1214
    %1313 = vmatpush.bf16.msra.mxu0 %v1208
    %1314 = vmatpush.bf16.msra.mxu0 %v1206
    %1315 = vmatpush.bf16.msra.mxu0 %v1200
    %1316 = vmatpush.bf16.msra.mxu0 %v1198
    %1317 = vmatpush.bf16.msra.mxu0 %v1164
    %1318 = vmatpush.bf16.msra.mxu0 %v1163
    %1319 = vmatmul.bf16.gmra.mxu0 %v1277
    %v1320 = vpop.f32.mrf.mxu0
    %v1321 = vadd.f32 %v1302, %v1320
    %v1322 = vpop.f32.mrf.mxu0
    %v1323 = vadd.f32 %v1304, %v1322
    %1324 = vmatmul.bf16.gmra.mxu0 %v1280
    %v1325 = vpop.f32.mrf.mxu0
    %v1326 = vadd.f32 %v1307, %v1325
    %v1327 = vpop.f32.mrf.mxu0
    %v1328 = vadd.f32 %v1309, %v1327
    %1329 = vdwg.mxu0
    %1330 = vmatpush.bf16.msra.mxu0 0
    %1331 = vmatpush.bf16.msra.mxu0 0
    %1332 = vmatpush.bf16.msra.mxu0 0
    %1333 = vmatpush.bf16.msra.mxu0 0
    %1334 = vmatpush.bf16.msra.mxu0 0
    %1335 = vmatpush.bf16.msra.mxu0 0
    %1336 = vmatpush.bf16.msra.mxu0 %v1224
    %1337 = vmatpush.bf16.msra.mxu0 %v1222
    %1338 = vmatmul.bf16.gmra.mxu0 %v1287
    %v1339 = vpop.f32.mrf.mxu0
    %v1340 = vadd.f32 %v1321, %v1339
    %v1341 = vpop.f32.mrf.mxu0
    %v1342 = vadd.f32 %v1323, %v1341
    %1343 = vmatmul.bf16.gmra.mxu0 %v1290
    %v1344 = vpop.f32.mrf.mxu0
    %v1345 = vadd.f32 %v1326, %v1344
    %v1346 = vpop.f32.mrf.mxu0
    %v1347 = vadd.f32 %v1328, %v1346
    %1348 = vdwg.mxu0
    %v1349 = vmax.f32 %v1340, 0.0
    %v1350 = vmax.f32 %v1342, 0.0
    %v1351 = vmax.f32 %v1345, 0.0
    %v1352 = vmax.f32 %v1347, 0.0
    %s1353 = scalar_lea.vmem %s7, 96
    %v1354 = vld [vmem:[%s1353] sm:$0xff]
    %v1355 = vld [vmem:[%s1353 + $0x8] sm:$0xff]
    %v1356 = vld [vmem:[%s1353 + $0x10] sm:$0xff]
    %v1357 = vld [vmem:[%s1353 + $0x18] sm:$0xff]
    %1359 = vset.pattern.permute.xlu0 0
    %1360 = vperm.xlu0 %1359, %v1354
    %v1361 = vpop.permute.xlu0 %1360
    %1364 = vset.pattern.permute.xlu0 0
    %1365 = vperm.xlu0 %1364, %v1355
    %v1366 = vpop.permute.xlu0 %1365
    %1369 = vset.pattern.permute.xlu0 0
    %1370 = vperm.xlu0 %1369, %v1356
    %v1371 = vpop.permute.xlu0 %1370
    %1374 = vset.pattern.permute.xlu0 0
    %1375 = vperm.xlu0 %1374, %v1357
    %v1376 = vpop.permute.xlu0 %1375
    %v1378 = vmul.f32 %v1349, %v1361
    %v1379 = vmul.f32 %v1350, %v1366
    %v1380 = vmul.f32 %v1351, %v1371
    %v1381 = vmul.f32 %v1352, %v1376
    %s1382 = scalar_lea.vmem %s8, 96
    %v1383 = vld [vmem:[%s1382] sm:$0xff]
    %v1384 = vld [vmem:[%s1382 + $0x8] sm:$0xff]
    %v1385 = vld [vmem:[%s1382 + $0x10] sm:$0xff]
    %v1386 = vld [vmem:[%s1382 + $0x18] sm:$0xff]
    %1388 = vset.pattern.permute.xlu0 0
    %1389 = vperm.xlu0 %1388, %v1383
    %v1390 = vpop.permute.xlu0 %1389
    %1393 = vset.pattern.permute.xlu0 0
    %1394 = vperm.xlu0 %1393, %v1384
    %v1395 = vpop.permute.xlu0 %1394
    %1398 = vset.pattern.permute.xlu0 0
    %1399 = vperm.xlu0 %1398, %v1385
    %v1400 = vpop.permute.xlu0 %1399
    %1403 = vset.pattern.permute.xlu0 0
    %1404 = vperm.xlu0 %1403, %v1386
    %v1405 = vpop.permute.xlu0 %1404
    %v1407 = vadd.f32 %v1378, %v1390
    %v1408 = vadd.f32 %v1379, %v1395
    %v1409 = vadd.f32 %v1380, %v1400
    %v1410 = vadd.f32 %v1381, %v1405
    %v1411 = vadd.f32 %v1407, %v1138
    %v1412 = vadd.f32 %v1408, %v1139
    %v1413 = vadd.f32 %v1409, %v1140
    %v1414 = vadd.f32 %v1410, %v1141
    %v1415 = vpack.c.bf16 %v1411, %v1411
    %v1416 = vpack.c.bf16 %v1412, %v1412
    %v1417 = vpack.c.bf16 %v1413, %v1413
    %v1418 = vpack.c.bf16 %v1414, %v1414
    %s1419 = scalar_lea.vmem %s5, 192
    %v1420 = vld [vmem:[%s1419] sm:$0xff]
    %v1421 = vld [vmem:[%s1419 + $0x8] sm:$0xf]
    %v1422 = vld [vmem:[%s1419 + $0xc] sm:$0xff]
    %v1423 = vld [vmem:[%s1419 + $0x14] sm:$0xf]
    %v1424 = vld [vmem:[%s1419 + $0x18] sm:$0xff]
    %v1425 = vld [vmem:[%s1419 + $0x20] sm:$0xf]
    %v1426 = vld [vmem:[%s1419 + $0x24] sm:$0xff]
    %v1427 = vld [vmem:[%s1419 + $0x2c] sm:$0xf]
    %v1432 = vunpack.c.l.b16 %v1415
    %v1433 = vunpack.c.l.b16 %v1416
    %v1434 = vunpack.c.l.b16 %v1417
    %v1435 = vunpack.c.l.b16 %v1418
    %v1436 = vpack.c.b16 %v1433, %v1432
    %v1437 = vpack.c.b16 %v1435, %v1434
    %1438 = vrot.lane.b32.xlu0 %v1436, 16
    %v1439 = vpop.permute.xlu0 %1438
    %1440 = vrot.lane.b32.xlu0 %v1437, 16
    %v1441 = vpop.permute.xlu0 %1440
    %1446 = vrot.lane.b32.xlu0 %v1436, 12
    %v1447 = vpop.permute.xlu0 %1446
    %1448 = vrot.lane.b32.xlu0 %v1437, 12
    %v1449 = vpop.permute.xlu0 %1448
    %1454 = vrot.lane.b32.xlu0 %v1436, 8
    %v1455 = vpop.permute.xlu0 %1454
    %1456 = vrot.lane.b32.xlu0 %v1437, 8
    %v1457 = vpop.permute.xlu0 %1456
    %1462 = vrot.lane.b32.xlu0 %v1436, 4
    %v1463 = vpop.permute.xlu0 %1462
    %1464 = vrot.lane.b32.xlu0 %v1437, 4
    %v1465 = vpop.permute.xlu0 %1464
    %1470 = vrot.lane.b32.xlu0 %v1436, 124
    %v1471 = vpop.permute.xlu0 %1470
    %1472 = vrot.lane.b32.xlu0 %v1437, 124
    %v1473 = vpop.permute.xlu0 %1472
    %1478 = vrot.lane.b32.xlu0 %v1436, 120
    %v1479 = vpop.permute.xlu0 %1478
    %1480 = vrot.lane.b32.xlu0 %v1437, 120
    %v1481 = vpop.permute.xlu0 %1480
    %1486 = vrot.lane.b32.xlu0 %v1436, 116
    %v1487 = vpop.permute.xlu0 %1486
    %1488 = vrot.lane.b32.xlu0 %v1437, 116
    %v1489 = vpop.permute.xlu0 %1488
    %1494 = vrot.lane.b32.xlu0 %v1436, 112
    %v1495 = vpop.permute.xlu0 %1494
    %1496 = vrot.lane.b32.xlu0 %v1437, 112
    %v1497 = vpop.permute.xlu0 %1496
    %s1504 = scalar_lea.vmem %s6, 128
    %v1505 = vld [vmem:[%s1504] sm:$0xff]
    %v1506 = vld [vmem:[%s1504 + $0x8] sm:$0xff]
    %v1507 = vld [vmem:[%s1504 + $0x10] sm:$0xff]
    %v1508 = vld [vmem:[%s1504 + $0x18] sm:$0xff]
    %1510 = vset.pattern.permute.xlu0 0
    %1511 = vperm.xlu0 %1510, %v1505
    %v1512 = vpop.permute.xlu0 %1511
    %1515 = vset.pattern.permute.xlu0 0
    %1516 = vperm.xlu0 %1515, %v1506
    %v1517 = vpop.permute.xlu0 %1516
    %1520 = vset.pattern.permute.xlu0 0
    %1521 = vperm.xlu0 %1520, %v1507
    %v1522 = vpop.permute.xlu0 %1521
    %1525 = vset.pattern.permute.xlu0 0
    %1526 = vperm.xlu0 %1525, %v1508
    %v1527 = vpop.permute.xlu0 %1526
    %v1537 = vunpack.c.l.b16 %v1420
    %v1538 = vunpack.c.h.b16 %v1420
    %v1539 = vunpack.c.l.b16 %v1421
    %v1540 = vunpack.c.l.b16 %v1422
    %v1541 = vunpack.c.h.b16 %v1422
    %v1542 = vunpack.c.l.b16 %v1423
    %v1543 = vunpack.c.l.b16 %v1424
    %v1544 = vunpack.c.h.b16 %v1424
    %v1545 = vunpack.c.l.b16 %v1425
    %v1546 = vunpack.c.l.b16 %v1426
    %v1547 = vunpack.c.h.b16 %v1426
    %v1548 = vunpack.c.l.b16 %v1427
    %v1549 = vpack.c.b16 %v1540, %v1537
    %v1550 = vpack.c.b16 %v1541, %v1538
    %v1551 = vpack.c.b16 %v1542, %v1539
    %v1552 = vpack.c.b16 %v1546, %v1543
    %v1553 = vpack.c.b16 %v1547, %v1544
    %v1554 = vpack.c.b16 %v1548, %v1545
    %v1560 = vsel %vm203, %v1551, 0
    %v1563 = vsel %vm203, %v1554, 0
    %1565 = vmatpush.bf16.msra.mxu0 %v1465
    %1566 = vmatpush.bf16.msra.mxu0 %v1463
    %1567 = vmatpush.bf16.msra.mxu0 %v1457
    %1568 = vmatpush.bf16.msra.mxu0 %v1455
    %1569 = vmatpush.bf16.msra.mxu0 %v1449
    %1570 = vmatpush.bf16.msra.mxu0 %v1447
    %1571 = vmatpush.bf16.msra.mxu0 %v1441
    %1572 = vmatpush.bf16.msra.mxu0 %v1439
    %1573 = vmatmul.bf16.gmra.mxu0 %v1549
    %v1574 = vpop.f32.mrf.mxu0
    %v1575 = vadd.f32 %v1512, %v1574
    %v1576 = vpop.f32.mrf.mxu0
    %v1577 = vadd.f32 %v1517, %v1576
    %1578 = vmatmul.bf16.gmra.mxu0 %v1552
    %v1579 = vpop.f32.mrf.mxu0
    %v1580 = vadd.f32 %v1522, %v1579
    %v1581 = vpop.f32.mrf.mxu0
    %v1582 = vadd.f32 %v1527, %v1581
    %1583 = vdwg.mxu0
    %1584 = vmatpush.bf16.msra.mxu0 %v1489
    %1585 = vmatpush.bf16.msra.mxu0 %v1487
    %1586 = vmatpush.bf16.msra.mxu0 %v1481
    %1587 = vmatpush.bf16.msra.mxu0 %v1479
    %1588 = vmatpush.bf16.msra.mxu0 %v1473
    %1589 = vmatpush.bf16.msra.mxu0 %v1471
    %1590 = vmatpush.bf16.msra.mxu0 %v1437
    %1591 = vmatpush.bf16.msra.mxu0 %v1436
    %1592 = vmatmul.bf16.gmra.mxu0 %v1550
    %v1593 = vpop.f32.mrf.mxu0
    %v1594 = vadd.f32 %v1575, %v1593
    %v1595 = vpop.f32.mrf.mxu0
    %v1596 = vadd.f32 %v1577, %v1595
    %1597 = vmatmul.bf16.gmra.mxu0 %v1553
    %v1598 = vpop.f32.mrf.mxu0
    %v1599 = vadd.f32 %v1580, %v1598
    %v1600 = vpop.f32.mrf.mxu0
    %v1601 = vadd.f32 %v1582, %v1600
    %1602 = vdwg.mxu0
    %1603 = vmatpush.bf16.msra.mxu0 0
    %1604 = vmatpush.bf16.msra.mxu0 0
    %1605 = vmatpush.bf16.msra.mxu0 0
    %1606 = vmatpush.bf16.msra.mxu0 0
    %1607 = vmatpush.bf16.msra.mxu0 0
    %1608 = vmatpush.bf16.msra.mxu0 0
    %1609 = vmatpush.bf16.msra.mxu0 %v1497
    %1610 = vmatpush.bf16.msra.mxu0 %v1495
    %1611 = vmatmul.bf16.gmra.mxu0 %v1560
    %v1612 = vpop.f32.mrf.mxu0
    %v1613 = vadd.f32 %v1594, %v1612
    %v1614 = vpop.f32.mrf.mxu0
    %v1615 = vadd.f32 %v1596, %v1614
    %1616 = vmatmul.bf16.gmra.mxu0 %v1563
    %v1617 = vpop.f32.mrf.mxu0
    %v1618 = vadd.f32 %v1599, %v1617
    %v1619 = vpop.f32.mrf.mxu0
    %v1620 = vadd.f32 %v1601, %v1619
    %1621 = vdwg.mxu0
    %v1622 = vmax.f32 %v1613, 0.0
    %v1623 = vmax.f32 %v1615, 0.0
    %v1624 = vmax.f32 %v1618, 0.0
    %v1625 = vmax.f32 %v1620, 0.0
    %s1626 = scalar_lea.vmem %s7, 128
    %v1627 = vld [vmem:[%s1626] sm:$0xff]
    %v1628 = vld [vmem:[%s1626 + $0x8] sm:$0xff]
    %v1629 = vld [vmem:[%s1626 + $0x10] sm:$0xff]
    %v1630 = vld [vmem:[%s1626 + $0x18] sm:$0xff]
    %1632 = vset.pattern.permute.xlu0 0
    %1633 = vperm.xlu0 %1632, %v1627
    %v1634 = vpop.permute.xlu0 %1633
    %1637 = vset.pattern.permute.xlu0 0
    %1638 = vperm.xlu0 %1637, %v1628
    %v1639 = vpop.permute.xlu0 %1638
    %1642 = vset.pattern.permute.xlu0 0
    %1643 = vperm.xlu0 %1642, %v1629
    %v1644 = vpop.permute.xlu0 %1643
    %1647 = vset.pattern.permute.xlu0 0
    %1648 = vperm.xlu0 %1647, %v1630
    %v1649 = vpop.permute.xlu0 %1648
    %v1651 = vmul.f32 %v1622, %v1634
    %v1652 = vmul.f32 %v1623, %v1639
    %v1653 = vmul.f32 %v1624, %v1644
    %v1654 = vmul.f32 %v1625, %v1649
    %s1655 = scalar_lea.vmem %s8, 128
    %v1656 = vld [vmem:[%s1655] sm:$0xff]
    %v1657 = vld [vmem:[%s1655 + $0x8] sm:$0xff]
    %v1658 = vld [vmem:[%s1655 + $0x10] sm:$0xff]
    %v1659 = vld [vmem:[%s1655 + $0x18] sm:$0xff]
    %1661 = vset.pattern.permute.xlu0 0
    %1662 = vperm.xlu0 %1661, %v1656
    %v1663 = vpop.permute.xlu0 %1662
    %1666 = vset.pattern.permute.xlu0 0
    %1667 = vperm.xlu0 %1666, %v1657
    %v1668 = vpop.permute.xlu0 %1667
    %1671 = vset.pattern.permute.xlu0 0
    %1672 = vperm.xlu0 %1671, %v1658
    %v1673 = vpop.permute.xlu0 %1672
    %1676 = vset.pattern.permute.xlu0 0
    %1677 = vperm.xlu0 %1676, %v1659
    %v1678 = vpop.permute.xlu0 %1677
    %v1680 = vadd.f32 %v1651, %v1663
    %v1681 = vadd.f32 %v1652, %v1668
    %v1682 = vadd.f32 %v1653, %v1673
    %v1683 = vadd.f32 %v1654, %v1678
    %v1684 = vadd.f32 %v1680, %v1411
    %v1685 = vadd.f32 %v1681, %v1412
    %v1686 = vadd.f32 %v1682, %v1413
    %v1687 = vadd.f32 %v1683, %v1414
    %v1688 = vpack.c.bf16 %v1684, %v1684
    %v1689 = vpack.c.bf16 %v1685, %v1685
    %v1690 = vpack.c.bf16 %v1686, %v1686
    %v1691 = vpack.c.bf16 %v1687, %v1687
    %s1692 = scalar_lea.vmem %s5, 240
    %v1693 = vld [vmem:[%s1692] sm:$0xff]
    %v1694 = vld [vmem:[%s1692 + $0x8] sm:$0xf]
    %v1695 = vld [vmem:[%s1692 + $0xc] sm:$0xff]
    %v1696 = vld [vmem:[%s1692 + $0x14] sm:$0xf]
    %v1697 = vld [vmem:[%s1692 + $0x18] sm:$0xff]
    %v1698 = vld [vmem:[%s1692 + $0x20] sm:$0xf]
    %v1699 = vld [vmem:[%s1692 + $0x24] sm:$0xff]
    %v1700 = vld [vmem:[%s1692 + $0x2c] sm:$0xf]
    %v1705 = vunpack.c.l.b16 %v1688
    %v1706 = vunpack.c.l.b16 %v1689
    %v1707 = vunpack.c.l.b16 %v1690
    %v1708 = vunpack.c.l.b16 %v1691
    %v1709 = vpack.c.b16 %v1706, %v1705
    %v1710 = vpack.c.b16 %v1708, %v1707
    %1711 = vrot.lane.b32.xlu0 %v1709, 32
    %v1712 = vpop.permute.xlu0 %1711
    %1713 = vrot.lane.b32.xlu0 %v1710, 32
    %v1714 = vpop.permute.xlu0 %1713
    %1719 = vrot.lane.b32.xlu0 %v1709, 24
    %v1720 = vpop.permute.xlu0 %1719
    %1721 = vrot.lane.b32.xlu0 %v1710, 24
    %v1722 = vpop.permute.xlu0 %1721
    %1727 = vrot.lane.b32.xlu0 %v1709, 16
    %v1728 = vpop.permute.xlu0 %1727
    %1729 = vrot.lane.b32.xlu0 %v1710, 16
    %v1730 = vpop.permute.xlu0 %1729
    %1735 = vrot.lane.b32.xlu0 %v1709, 8
    %v1736 = vpop.permute.xlu0 %1735
    %1737 = vrot.lane.b32.xlu0 %v1710, 8
    %v1738 = vpop.permute.xlu0 %1737
    %1743 = vrot.lane.b32.xlu0 %v1709, 120
    %v1744 = vpop.permute.xlu0 %1743
    %1745 = vrot.lane.b32.xlu0 %v1710, 120
    %v1746 = vpop.permute.xlu0 %1745
    %1751 = vrot.lane.b32.xlu0 %v1709, 112
    %v1752 = vpop.permute.xlu0 %1751
    %1753 = vrot.lane.b32.xlu0 %v1710, 112
    %v1754 = vpop.permute.xlu0 %1753
    %1759 = vrot.lane.b32.xlu0 %v1709, 104
    %v1760 = vpop.permute.xlu0 %1759
    %1761 = vrot.lane.b32.xlu0 %v1710, 104
    %v1762 = vpop.permute.xlu0 %1761
    %1767 = vrot.lane.b32.xlu0 %v1709, 96
    %v1768 = vpop.permute.xlu0 %1767
    %1769 = vrot.lane.b32.xlu0 %v1710, 96
    %v1770 = vpop.permute.xlu0 %1769
    %s1777 = scalar_lea.vmem %s6, 160
    %v1778 = vld [vmem:[%s1777] sm:$0xff]
    %v1779 = vld [vmem:[%s1777 + $0x8] sm:$0xff]
    %v1780 = vld [vmem:[%s1777 + $0x10] sm:$0xff]
    %v1781 = vld [vmem:[%s1777 + $0x18] sm:$0xff]
    %1783 = vset.pattern.permute.xlu0 0
    %1784 = vperm.xlu0 %1783, %v1778
    %v1785 = vpop.permute.xlu0 %1784
    %1788 = vset.pattern.permute.xlu0 0
    %1789 = vperm.xlu0 %1788, %v1779
    %v1790 = vpop.permute.xlu0 %1789
    %1793 = vset.pattern.permute.xlu0 0
    %1794 = vperm.xlu0 %1793, %v1780
    %v1795 = vpop.permute.xlu0 %1794
    %1798 = vset.pattern.permute.xlu0 0
    %1799 = vperm.xlu0 %1798, %v1781
    %v1800 = vpop.permute.xlu0 %1799
    %v1810 = vunpack.c.l.b16 %v1693
    %v1811 = vunpack.c.h.b16 %v1693
    %v1812 = vunpack.c.l.b16 %v1694
    %v1813 = vunpack.c.l.b16 %v1695
    %v1814 = vunpack.c.h.b16 %v1695
    %v1815 = vunpack.c.l.b16 %v1696
    %v1816 = vunpack.c.l.b16 %v1697
    %v1817 = vunpack.c.h.b16 %v1697
    %v1818 = vunpack.c.l.b16 %v1698
    %v1819 = vunpack.c.l.b16 %v1699
    %v1820 = vunpack.c.h.b16 %v1699
    %v1821 = vunpack.c.l.b16 %v1700
    %v1822 = vpack.c.b16 %v1813, %v1810
    %v1823 = vpack.c.b16 %v1814, %v1811
    %v1824 = vpack.c.b16 %v1815, %v1812
    %v1825 = vpack.c.b16 %v1819, %v1816
    %v1826 = vpack.c.b16 %v1820, %v1817
    %v1827 = vpack.c.b16 %v1821, %v1818
    %v1833 = vsel %vm203, %v1824, 0
    %v1836 = vsel %vm203, %v1827, 0
    %1838 = vmatpush.bf16.msra.mxu0 %v1738
    %1839 = vmatpush.bf16.msra.mxu0 %v1736
    %1840 = vmatpush.bf16.msra.mxu0 %v1730
    %1841 = vmatpush.bf16.msra.mxu0 %v1728
    %1842 = vmatpush.bf16.msra.mxu0 %v1722
    %1843 = vmatpush.bf16.msra.mxu0 %v1720
    %1844 = vmatpush.bf16.msra.mxu0 %v1714
    %1845 = vmatpush.bf16.msra.mxu0 %v1712
    %1846 = vmatmul.bf16.gmra.mxu0 %v1822
    %v1847 = vpop.f32.mrf.mxu0
    %v1848 = vadd.f32 %v1785, %v1847
    %v1849 = vpop.f32.mrf.mxu0
    %v1850 = vadd.f32 %v1790, %v1849
    %1851 = vmatmul.bf16.gmra.mxu0 %v1825
    %v1852 = vpop.f32.mrf.mxu0
    %v1853 = vadd.f32 %v1795, %v1852
    %v1854 = vpop.f32.mrf.mxu0
    %v1855 = vadd.f32 %v1800, %v1854
    %1856 = vdwg.mxu0
    %1857 = vmatpush.bf16.msra.mxu0 %v1762
    %1858 = vmatpush.bf16.msra.mxu0 %v1760
    %1859 = vmatpush.bf16.msra.mxu0 %v1754
    %1860 = vmatpush.bf16.msra.mxu0 %v1752
    %1861 = vmatpush.bf16.msra.mxu0 %v1746
    %1862 = vmatpush.bf16.msra.mxu0 %v1744
    %1863 = vmatpush.bf16.msra.mxu0 %v1710
    %1864 = vmatpush.bf16.msra.mxu0 %v1709
    %1865 = vmatmul.bf16.gmra.mxu0 %v1823
    %v1866 = vpop.f32.mrf.mxu0
    %v1867 = vadd.f32 %v1848, %v1866
    %v1868 = vpop.f32.mrf.mxu0
    %v1869 = vadd.f32 %v1850, %v1868
    %1870 = vmatmul.bf16.gmra.mxu0 %v1826
    %v1871 = vpop.f32.mrf.mxu0
    %v1872 = vadd.f32 %v1853, %v1871
    %v1873 = vpop.f32.mrf.mxu0
    %v1874 = vadd.f32 %v1855, %v1873
    %1875 = vdwg.mxu0
    %1876 = vmatpush.bf16.msra.mxu0 0
    %1877 = vmatpush.bf16.msra.mxu0 0
    %1878 = vmatpush.bf16.msra.mxu0 0
    %1879 = vmatpush.bf16.msra.mxu0 0
    %1880 = vmatpush.bf16.msra.mxu0 0
    %1881 = vmatpush.bf16.msra.mxu0 0
    %1882 = vmatpush.bf16.msra.mxu0 %v1770
    %1883 = vmatpush.bf16.msra.mxu0 %v1768
    %1884 = vmatmul.bf16.gmra.mxu0 %v1833
    %v1885 = vpop.f32.mrf.mxu0
    %v1886 = vadd.f32 %v1867, %v1885
    %v1887 = vpop.f32.mrf.mxu0
    %v1888 = vadd.f32 %v1869, %v1887
    %1889 = vmatmul.bf16.gmra.mxu0 %v1836
    %v1890 = vpop.f32.mrf.mxu0
    %v1891 = vadd.f32 %v1872, %v1890
    %v1892 = vpop.f32.mrf.mxu0
    %v1893 = vadd.f32 %v1874, %v1892
    %1894 = vdwg.mxu0
    %v1895 = vmax.f32 %v1886, 0.0
    %v1896 = vmax.f32 %v1888, 0.0
    %v1897 = vmax.f32 %v1891, 0.0
    %v1898 = vmax.f32 %v1893, 0.0
    %s1899 = scalar_lea.vmem %s7, 160
    %v1900 = vld [vmem:[%s1899] sm:$0xff]
    %v1901 = vld [vmem:[%s1899 + $0x8] sm:$0xff]
    %v1902 = vld [vmem:[%s1899 + $0x10] sm:$0xff]
    %v1903 = vld [vmem:[%s1899 + $0x18] sm:$0xff]
    %1905 = vset.pattern.permute.xlu0 0
    %1906 = vperm.xlu0 %1905, %v1900
    %v1907 = vpop.permute.xlu0 %1906
    %1910 = vset.pattern.permute.xlu0 0
    %1911 = vperm.xlu0 %1910, %v1901
    %v1912 = vpop.permute.xlu0 %1911
    %1915 = vset.pattern.permute.xlu0 0
    %1916 = vperm.xlu0 %1915, %v1902
    %v1917 = vpop.permute.xlu0 %1916
    %1920 = vset.pattern.permute.xlu0 0
    %1921 = vperm.xlu0 %1920, %v1903
    %v1922 = vpop.permute.xlu0 %1921
    %v1924 = vmul.f32 %v1895, %v1907
    %v1925 = vmul.f32 %v1896, %v1912
    %v1926 = vmul.f32 %v1897, %v1917
    %v1927 = vmul.f32 %v1898, %v1922
    %s1928 = scalar_lea.vmem %s8, 160
    %v1929 = vld [vmem:[%s1928] sm:$0xff]
    %v1930 = vld [vmem:[%s1928 + $0x8] sm:$0xff]
    %v1931 = vld [vmem:[%s1928 + $0x10] sm:$0xff]
    %v1932 = vld [vmem:[%s1928 + $0x18] sm:$0xff]
    %1934 = vset.pattern.permute.xlu0 0
    %1935 = vperm.xlu0 %1934, %v1929
    %v1936 = vpop.permute.xlu0 %1935
    %1939 = vset.pattern.permute.xlu0 0
    %1940 = vperm.xlu0 %1939, %v1930
    %v1941 = vpop.permute.xlu0 %1940
    %1944 = vset.pattern.permute.xlu0 0
    %1945 = vperm.xlu0 %1944, %v1931
    %v1946 = vpop.permute.xlu0 %1945
    %1949 = vset.pattern.permute.xlu0 0
    %1950 = vperm.xlu0 %1949, %v1932
    %v1951 = vpop.permute.xlu0 %1950
    %v1953 = vadd.f32 %v1924, %v1936
    %v1954 = vadd.f32 %v1925, %v1941
    %v1955 = vadd.f32 %v1926, %v1946
    %v1956 = vadd.f32 %v1927, %v1951
    %v1957 = vadd.f32 %v1953, %v1684
    %v1958 = vadd.f32 %v1954, %v1685
    %v1959 = vadd.f32 %v1955, %v1686
    %v1960 = vadd.f32 %v1956, %v1687
    %v1961 = vpack.c.bf16 %v1957, %v1957
    %v1962 = vpack.c.bf16 %v1958, %v1958
    %v1963 = vpack.c.bf16 %v1959, %v1959
    %v1964 = vpack.c.bf16 %v1960, %v1960
    %s1965 = scalar_lea.vmem %s5, 288
    %v1966 = vld [vmem:[%s1965] sm:$0xff]
    %v1967 = vld [vmem:[%s1965 + $0x8] sm:$0xf]
    %v1968 = vld [vmem:[%s1965 + $0xc] sm:$0xff]
    %v1969 = vld [vmem:[%s1965 + $0x14] sm:$0xf]
    %v1970 = vld [vmem:[%s1965 + $0x18] sm:$0xff]
    %v1971 = vld [vmem:[%s1965 + $0x20] sm:$0xf]
    %v1972 = vld [vmem:[%s1965 + $0x24] sm:$0xff]
    %v1973 = vld [vmem:[%s1965 + $0x2c] sm:$0xf]
    %v1978 = vunpack.c.l.b16 %v1961
    %v1979 = vunpack.c.l.b16 %v1962
    %v1980 = vunpack.c.l.b16 %v1963
    %v1981 = vunpack.c.l.b16 %v1964
    %v1982 = vpack.c.b16 %v1979, %v1978
    %v1983 = vpack.c.b16 %v1981, %v1980
    %1984 = vrot.lane.b32.xlu0 %v1982, 32
    %v1985 = vpop.permute.xlu0 %1984
    %1986 = vrot.lane.b32.xlu0 %v1983, 32
    %v1987 = vpop.permute.xlu0 %1986
    %1992 = vrot.lane.b32.xlu0 %v1982, 24
    %v1993 = vpop.permute.xlu0 %1992
    %1994 = vrot.lane.b32.xlu0 %v1983, 24
    %v1995 = vpop.permute.xlu0 %1994
    %2000 = vrot.lane.b32.xlu0 %v1982, 16
    %v2001 = vpop.permute.xlu0 %2000
    %2002 = vrot.lane.b32.xlu0 %v1983, 16
    %v2003 = vpop.permute.xlu0 %2002
    %2008 = vrot.lane.b32.xlu0 %v1982, 8
    %v2009 = vpop.permute.xlu0 %2008
    %2010 = vrot.lane.b32.xlu0 %v1983, 8
    %v2011 = vpop.permute.xlu0 %2010
    %2016 = vrot.lane.b32.xlu0 %v1982, 120
    %v2017 = vpop.permute.xlu0 %2016
    %2018 = vrot.lane.b32.xlu0 %v1983, 120
    %v2019 = vpop.permute.xlu0 %2018
    %2024 = vrot.lane.b32.xlu0 %v1982, 112
    %v2025 = vpop.permute.xlu0 %2024
    %2026 = vrot.lane.b32.xlu0 %v1983, 112
    %v2027 = vpop.permute.xlu0 %2026
    %2032 = vrot.lane.b32.xlu0 %v1982, 104
    %v2033 = vpop.permute.xlu0 %2032
    %2034 = vrot.lane.b32.xlu0 %v1983, 104
    %v2035 = vpop.permute.xlu0 %2034
    %2040 = vrot.lane.b32.xlu0 %v1982, 96
    %v2041 = vpop.permute.xlu0 %2040
    %2042 = vrot.lane.b32.xlu0 %v1983, 96
    %v2043 = vpop.permute.xlu0 %2042
    %s2050 = scalar_lea.vmem %s6, 192
    %v2051 = vld [vmem:[%s2050] sm:$0xff]
    %v2052 = vld [vmem:[%s2050 + $0x8] sm:$0xff]
    %v2053 = vld [vmem:[%s2050 + $0x10] sm:$0xff]
    %v2054 = vld [vmem:[%s2050 + $0x18] sm:$0xff]
    %2056 = vset.pattern.permute.xlu0 0
    %2057 = vperm.xlu0 %2056, %v2051
    %v2058 = vpop.permute.xlu0 %2057
    %2061 = vset.pattern.permute.xlu0 0
    %2062 = vperm.xlu0 %2061, %v2052
    %v2063 = vpop.permute.xlu0 %2062
    %2066 = vset.pattern.permute.xlu0 0
    %2067 = vperm.xlu0 %2066, %v2053
    %v2068 = vpop.permute.xlu0 %2067
    %2071 = vset.pattern.permute.xlu0 0
    %2072 = vperm.xlu0 %2071, %v2054
    %v2073 = vpop.permute.xlu0 %2072
    %v2083 = vunpack.c.l.b16 %v1966
    %v2084 = vunpack.c.h.b16 %v1966
    %v2085 = vunpack.c.l.b16 %v1967
    %v2086 = vunpack.c.l.b16 %v1968
    %v2087 = vunpack.c.h.b16 %v1968
    %v2088 = vunpack.c.l.b16 %v1969
    %v2089 = vunpack.c.l.b16 %v1970
    %v2090 = vunpack.c.h.b16 %v1970
    %v2091 = vunpack.c.l.b16 %v1971
    %v2092 = vunpack.c.l.b16 %v1972
    %v2093 = vunpack.c.h.b16 %v1972
    %v2094 = vunpack.c.l.b16 %v1973
    %v2095 = vpack.c.b16 %v2086, %v2083
    %v2096 = vpack.c.b16 %v2087, %v2084
    %v2097 = vpack.c.b16 %v2088, %v2085
    %v2098 = vpack.c.b16 %v2092, %v2089
    %v2099 = vpack.c.b16 %v2093, %v2090
    %v2100 = vpack.c.b16 %v2094, %v2091
    %v2106 = vsel %vm203, %v2097, 0
    %v2109 = vsel %vm203, %v2100, 0
    %2111 = vmatpush.bf16.msra.mxu0 %v2011
    %2112 = vmatpush.bf16.msra.mxu0 %v2009
    %2113 = vmatpush.bf16.msra.mxu0 %v2003
    %2114 = vmatpush.bf16.msra.mxu0 %v2001
    %2115 = vmatpush.bf16.msra.mxu0 %v1995
    %2116 = vmatpush.bf16.msra.mxu0 %v1993
    %2117 = vmatpush.bf16.msra.mxu0 %v1987
    %2118 = vmatpush.bf16.msra.mxu0 %v1985
    %2119 = vmatmul.bf16.gmra.mxu0 %v2095
    %v2120 = vpop.f32.mrf.mxu0
    %v2121 = vadd.f32 %v2058, %v2120
    %v2122 = vpop.f32.mrf.mxu0
    %v2123 = vadd.f32 %v2063, %v2122
    %2124 = vmatmul.bf16.gmra.mxu0 %v2098
    %v2125 = vpop.f32.mrf.mxu0
    %v2126 = vadd.f32 %v2068, %v2125
    %v2127 = vpop.f32.mrf.mxu0
    %v2128 = vadd.f32 %v2073, %v2127
    %2129 = vdwg.mxu0
    %2130 = vmatpush.bf16.msra.mxu0 %v2035
    %2131 = vmatpush.bf16.msra.mxu0 %v2033
    %2132 = vmatpush.bf16.msra.mxu0 %v2027
    %2133 = vmatpush.bf16.msra.mxu0 %v2025
    %2134 = vmatpush.bf16.msra.mxu0 %v2019
    %2135 = vmatpush.bf16.msra.mxu0 %v2017
    %2136 = vmatpush.bf16.msra.mxu0 %v1983
    %2137 = vmatpush.bf16.msra.mxu0 %v1982
    %2138 = vmatmul.bf16.gmra.mxu0 %v2096
    %v2139 = vpop.f32.mrf.mxu0
    %v2140 = vadd.f32 %v2121, %v2139
    %v2141 = vpop.f32.mrf.mxu0
    %v2142 = vadd.f32 %v2123, %v2141
    %2143 = vmatmul.bf16.gmra.mxu0 %v2099
    %v2144 = vpop.f32.mrf.mxu0
    %v2145 = vadd.f32 %v2126, %v2144
    %v2146 = vpop.f32.mrf.mxu0
    %v2147 = vadd.f32 %v2128, %v2146
    %2148 = vdwg.mxu0
    %2149 = vmatpush.bf16.msra.mxu0 0
    %2150 = vmatpush.bf16.msra.mxu0 0
    %2151 = vmatpush.bf16.msra.mxu0 0
    %2152 = vmatpush.bf16.msra.mxu0 0
    %2153 = vmatpush.bf16.msra.mxu0 0
    %2154 = vmatpush.bf16.msra.mxu0 0
    %2155 = vmatpush.bf16.msra.mxu0 %v2043
    %2156 = vmatpush.bf16.msra.mxu0 %v2041
    %2157 = vmatmul.bf16.gmra.mxu0 %v2106
    %v2158 = vpop.f32.mrf.mxu0
    %v2159 = vadd.f32 %v2140, %v2158
    %v2160 = vpop.f32.mrf.mxu0
    %v2161 = vadd.f32 %v2142, %v2160
    %2162 = vmatmul.bf16.gmra.mxu0 %v2109
    %v2163 = vpop.f32.mrf.mxu0
    %v2164 = vadd.f32 %v2145, %v2163
    %v2165 = vpop.f32.mrf.mxu0
    %v2166 = vadd.f32 %v2147, %v2165
    %2167 = vdwg.mxu0
    %v2168 = vmax.f32 %v2159, 0.0
    %v2169 = vmax.f32 %v2161, 0.0
    %v2170 = vmax.f32 %v2164, 0.0
    %v2171 = vmax.f32 %v2166, 0.0
    %s2172 = scalar_lea.vmem %s7, 192
    %v2173 = vld [vmem:[%s2172] sm:$0xff]
    %v2174 = vld [vmem:[%s2172 + $0x8] sm:$0xff]
    %v2175 = vld [vmem:[%s2172 + $0x10] sm:$0xff]
    %v2176 = vld [vmem:[%s2172 + $0x18] sm:$0xff]
    %2178 = vset.pattern.permute.xlu0 0
    %2179 = vperm.xlu0 %2178, %v2173
    %v2180 = vpop.permute.xlu0 %2179
    %2183 = vset.pattern.permute.xlu0 0
    %2184 = vperm.xlu0 %2183, %v2174
    %v2185 = vpop.permute.xlu0 %2184
    %2188 = vset.pattern.permute.xlu0 0
    %2189 = vperm.xlu0 %2188, %v2175
    %v2190 = vpop.permute.xlu0 %2189
    %2193 = vset.pattern.permute.xlu0 0
    %2194 = vperm.xlu0 %2193, %v2176
    %v2195 = vpop.permute.xlu0 %2194
    %v2197 = vmul.f32 %v2168, %v2180
    %v2198 = vmul.f32 %v2169, %v2185
    %v2199 = vmul.f32 %v2170, %v2190
    %v2200 = vmul.f32 %v2171, %v2195
    %s2201 = scalar_lea.vmem %s8, 192
    %v2202 = vld [vmem:[%s2201] sm:$0xff]
    %v2203 = vld [vmem:[%s2201 + $0x8] sm:$0xff]
    %v2204 = vld [vmem:[%s2201 + $0x10] sm:$0xff]
    %v2205 = vld [vmem:[%s2201 + $0x18] sm:$0xff]
    %2207 = vset.pattern.permute.xlu0 0
    %2208 = vperm.xlu0 %2207, %v2202
    %v2209 = vpop.permute.xlu0 %2208
    %2212 = vset.pattern.permute.xlu0 0
    %2213 = vperm.xlu0 %2212, %v2203
    %v2214 = vpop.permute.xlu0 %2213
    %2217 = vset.pattern.permute.xlu0 0
    %2218 = vperm.xlu0 %2217, %v2204
    %v2219 = vpop.permute.xlu0 %2218
    %2222 = vset.pattern.permute.xlu0 0
    %2223 = vperm.xlu0 %2222, %v2205
    %v2224 = vpop.permute.xlu0 %2223
    %v2226 = vadd.f32 %v2197, %v2209
    %v2227 = vadd.f32 %v2198, %v2214
    %v2228 = vadd.f32 %v2199, %v2219
    %v2229 = vadd.f32 %v2200, %v2224
    %v2230 = vadd.f32 %v2226, %v1957
    %v2231 = vadd.f32 %v2227, %v1958
    %v2232 = vadd.f32 %v2228, %v1959
    %v2233 = vadd.f32 %v2229, %v1960
    %v2234 = vpack.c.bf16 %v324, %v323
    %v2235 = vpack.c.bf16 %v326, %v325
    %v2236 = vpack.c.bf16 %v593, %v592
    %v2237 = vpack.c.bf16 %v595, %v594
    %v2238 = vpack.c.bf16 %v866, %v865
    %v2239 = vpack.c.bf16 %v868, %v867
    %v2240 = vpack.c.bf16 %v1139, %v1138
    %v2241 = vpack.c.bf16 %v1141, %v1140
    %v2242 = vpack.c.bf16 %v1412, %v1411
    %v2243 = vpack.c.bf16 %v1414, %v1413
    %v2244 = vpack.c.bf16 %v1685, %v1684
    %v2245 = vpack.c.bf16 %v1687, %v1686
    %v2246 = vpack.c.bf16 %v1958, %v1957
    %v2247 = vpack.c.bf16 %v1960, %v1959
    %v2248 = vpack.c.bf16 %v2231, %v2230
    %v2249 = vpack.c.bf16 %v2233, %v2232
    %v2250 = vld [vmem:[%s9] sm:$0xff]
    %v2251 = vld [vmem:[%s9 + $0x8] sm:$0xff]
    %v2252 = vld [vmem:[%s9 + $0x10] sm:$0xff]
    %v2253 = vld [vmem:[%s9 + $0x18] sm:$0xff]
    %v2254 = vld [vmem:[%s9 + $0x20] sm:$0xff]
    %v2255 = vld [vmem:[%s9 + $0x28] sm:$0xff]
    %v2256 = vld [vmem:[%s9 + $0x30] sm:$0xff]
    %v2257 = vld [vmem:[%s9 + $0x38] sm:$0xff]
    %v2258 = vld [vmem:[%s9 + $0x40] sm:$0xff]
    %v2259 = vld [vmem:[%s9 + $0x48] sm:$0xff]
    %v2260 = vld [vmem:[%s9 + $0x50] sm:$0xff]
    %v2261 = vld [vmem:[%s9 + $0x58] sm:$0xff]
    %v2262 = vld [vmem:[%s9 + $0x60] sm:$0xff]
    %v2263 = vld [vmem:[%s9 + $0x68] sm:$0xff]
    %v2264 = vld [vmem:[%s9 + $0x70] sm:$0xff]
    %v2265 = vld [vmem:[%s9 + $0x78] sm:$0xff]
    %v2266 = vld [vmem:[%s9 + $0x80] sm:$0xff]
    %v2267 = vld [vmem:[%s9 + $0x88] sm:$0xff]
    %v2268 = vld [vmem:[%s9 + $0x90] sm:$0xff]
    %v2269 = vld [vmem:[%s9 + $0x98] sm:$0xff]
    %v2270 = vld [vmem:[%s9 + $0xa0] sm:$0xff]
    %v2271 = vld [vmem:[%s9 + $0xa8] sm:$0xff]
    %v2272 = vld [vmem:[%s9 + $0xb0] sm:$0xff]
    %v2273 = vld [vmem:[%s9 + $0xb8] sm:$0xff]
    %v2274 = vld [vmem:[%s9 + $0xc0] sm:$0xff]
    %v2275 = vld [vmem:[%s9 + $0xc8] sm:$0xff]
    %v2276 = vld [vmem:[%s9 + $0xd0] sm:$0xff]
    %v2277 = vld [vmem:[%s9 + $0xd8] sm:$0xff]
    %v2278 = vld [vmem:[%s9 + $0xe0] sm:$0xff]
    %v2279 = vld [vmem:[%s9 + $0xe8] sm:$0xff]
    %v2280 = vld [vmem:[%s9 + $0xf0] sm:$0xff]
    %v2281 = vld [vmem:[%s9 + $0xf8] sm:$0xff]
    %v2282 = vld [vmem:[%s10] sm:$0xff]
    %v2283 = vld [vmem:[%s10 + $0x8] sm:$0xff]
    %v2284 = vld [vmem:[%s10 + $0x10] sm:$0xff]
    %v2285 = vld [vmem:[%s10 + $0x18] sm:$0xff]
    %v2286 = vld [vmem:[%s10 + $0x20] sm:$0xff]
    %v2287 = vld [vmem:[%s10 + $0x28] sm:$0xff]
    %v2288 = vld [vmem:[%s10 + $0x30] sm:$0xff]
    %v2289 = vld [vmem:[%s10 + $0x38] sm:$0xff]
    %v2290 = vld [vmem:[%s10 + $0x40] sm:$0xff]
    %v2291 = vld [vmem:[%s10 + $0x48] sm:$0xff]
    %v2292 = vld [vmem:[%s10 + $0x50] sm:$0xff]
    %v2293 = vld [vmem:[%s10 + $0x58] sm:$0xff]
    %v2294 = vld [vmem:[%s10 + $0x60] sm:$0xff]
    %v2295 = vld [vmem:[%s10 + $0x68] sm:$0xff]
    %v2296 = vld [vmem:[%s10 + $0x70] sm:$0xff]
    %v2297 = vld [vmem:[%s10 + $0x78] sm:$0xff]
    %v2298 = vld [vmem:[%s10 + $0x80] sm:$0xff]
    %v2299 = vld [vmem:[%s10 + $0x88] sm:$0xff]
    %v2300 = vld [vmem:[%s10 + $0x90] sm:$0xff]
    %v2301 = vld [vmem:[%s10 + $0x98] sm:$0xff]
    %v2302 = vld [vmem:[%s10 + $0xa0] sm:$0xff]
    %v2303 = vld [vmem:[%s10 + $0xa8] sm:$0xff]
    %v2304 = vld [vmem:[%s10 + $0xb0] sm:$0xff]
    %v2305 = vld [vmem:[%s10 + $0xb8] sm:$0xff]
    %v2306 = vld [vmem:[%s10 + $0xc0] sm:$0xff]
    %v2307 = vld [vmem:[%s10 + $0xc8] sm:$0xff]
    %v2308 = vld [vmem:[%s10 + $0xd0] sm:$0xff]
    %v2309 = vld [vmem:[%s10 + $0xd8] sm:$0xff]
    %v2310 = vld [vmem:[%s10 + $0xe0] sm:$0xff]
    %v2311 = vld [vmem:[%s10 + $0xe8] sm:$0xff]
    %v2312 = vld [vmem:[%s10 + $0xf0] sm:$0xff]
    %v2313 = vld [vmem:[%s10 + $0xf8] sm:$0xff]
    %2315 = vset.pattern.permute.xlu0 0
    %2316 = vperm.xlu0 %2315, %v2282
    %v2317 = vpop.permute.xlu0 %2316
    %2320 = vset.pattern.permute.xlu0 0
    %2321 = vperm.xlu0 %2320, %v2283
    %v2322 = vpop.permute.xlu0 %2321
    %2325 = vset.pattern.permute.xlu0 0
    %2326 = vperm.xlu0 %2325, %v2284
    %v2327 = vpop.permute.xlu0 %2326
    %2330 = vset.pattern.permute.xlu0 0
    %2331 = vperm.xlu0 %2330, %v2285
    %v2332 = vpop.permute.xlu0 %2331
    %2335 = vset.pattern.permute.xlu0 0
    %2336 = vperm.xlu0 %2335, %v2286
    %v2337 = vpop.permute.xlu0 %2336
    %2340 = vset.pattern.permute.xlu0 0
    %2341 = vperm.xlu0 %2340, %v2287
    %v2342 = vpop.permute.xlu0 %2341
    %2345 = vset.pattern.permute.xlu0 0
    %2346 = vperm.xlu0 %2345, %v2288
    %v2347 = vpop.permute.xlu0 %2346
    %2350 = vset.pattern.permute.xlu0 0
    %2351 = vperm.xlu0 %2350, %v2289
    %v2352 = vpop.permute.xlu0 %2351
    %2355 = vset.pattern.permute.xlu0 0
    %2356 = vperm.xlu0 %2355, %v2290
    %v2357 = vpop.permute.xlu0 %2356
    %2360 = vset.pattern.permute.xlu0 0
    %2361 = vperm.xlu0 %2360, %v2291
    %v2362 = vpop.permute.xlu0 %2361
    %2365 = vset.pattern.permute.xlu0 0
    %2366 = vperm.xlu0 %2365, %v2292
    %v2367 = vpop.permute.xlu0 %2366
    %2370 = vset.pattern.permute.xlu0 0
    %2371 = vperm.xlu0 %2370, %v2293
    %v2372 = vpop.permute.xlu0 %2371
    %2375 = vset.pattern.permute.xlu0 0
    %2376 = vperm.xlu0 %2375, %v2294
    %v2377 = vpop.permute.xlu0 %2376
    %2380 = vset.pattern.permute.xlu0 0
    %2381 = vperm.xlu0 %2380, %v2295
    %v2382 = vpop.permute.xlu0 %2381
    %2385 = vset.pattern.permute.xlu0 0
    %2386 = vperm.xlu0 %2385, %v2296
    %v2387 = vpop.permute.xlu0 %2386
    %2390 = vset.pattern.permute.xlu0 0
    %2391 = vperm.xlu0 %2390, %v2297
    %v2392 = vpop.permute.xlu0 %2391
    %2395 = vset.pattern.permute.xlu0 0
    %2396 = vperm.xlu0 %2395, %v2298
    %v2397 = vpop.permute.xlu0 %2396
    %2400 = vset.pattern.permute.xlu0 0
    %2401 = vperm.xlu0 %2400, %v2299
    %v2402 = vpop.permute.xlu0 %2401
    %2405 = vset.pattern.permute.xlu0 0
    %2406 = vperm.xlu0 %2405, %v2300
    %v2407 = vpop.permute.xlu0 %2406
    %2410 = vset.pattern.permute.xlu0 0
    %2411 = vperm.xlu0 %2410, %v2301
    %v2412 = vpop.permute.xlu0 %2411
    %2415 = vset.pattern.permute.xlu0 0
    %2416 = vperm.xlu0 %2415, %v2302
    %v2417 = vpop.permute.xlu0 %2416
    %2420 = vset.pattern.permute.xlu0 0
    %2421 = vperm.xlu0 %2420, %v2303
    %v2422 = vpop.permute.xlu0 %2421
    %2425 = vset.pattern.permute.xlu0 0
    %2426 = vperm.xlu0 %2425, %v2304
    %v2427 = vpop.permute.xlu0 %2426
    %2430 = vset.pattern.permute.xlu0 0
    %2431 = vperm.xlu0 %2430, %v2305
    %v2432 = vpop.permute.xlu0 %2431
    %2435 = vset.pattern.permute.xlu0 0
    %2436 = vperm.xlu0 %2435, %v2306
    %v2437 = vpop.permute.xlu0 %2436
    %2440 = vset.pattern.permute.xlu0 0
    %2441 = vperm.xlu0 %2440, %v2307
    %v2442 = vpop.permute.xlu0 %2441
    %2445 = vset.pattern.permute.xlu0 0
    %2446 = vperm.xlu0 %2445, %v2308
    %v2447 = vpop.permute.xlu0 %2446
    %2450 = vset.pattern.permute.xlu0 0
    %2451 = vperm.xlu0 %2450, %v2309
    %v2452 = vpop.permute.xlu0 %2451
    %2455 = vset.pattern.permute.xlu0 0
    %2456 = vperm.xlu0 %2455, %v2310
    %v2457 = vpop.permute.xlu0 %2456
    %2460 = vset.pattern.permute.xlu0 0
    %2461 = vperm.xlu0 %2460, %v2311
    %v2462 = vpop.permute.xlu0 %2461
    %2465 = vset.pattern.permute.xlu0 0
    %2466 = vperm.xlu0 %2465, %v2312
    %v2467 = vpop.permute.xlu0 %2466
    %2470 = vset.pattern.permute.xlu0 0
    %2471 = vperm.xlu0 %2470, %v2313
    %v2472 = vpop.permute.xlu0 %2471
    %v2506 = vunpack.c.l.b16 %v2250
    %v2507 = vunpack.c.h.b16 %v2250
    %v2508 = vunpack.c.l.b16 %v2251
    %v2509 = vunpack.c.h.b16 %v2251
    %v2510 = vunpack.c.l.b16 %v2252
    %v2511 = vunpack.c.h.b16 %v2252
    %v2512 = vunpack.c.l.b16 %v2253
    %v2513 = vunpack.c.h.b16 %v2253
    %v2514 = vunpack.c.l.b16 %v2254
    %v2515 = vunpack.c.h.b16 %v2254
    %v2516 = vunpack.c.l.b16 %v2255
    %v2517 = vunpack.c.h.b16 %v2255
    %v2518 = vunpack.c.l.b16 %v2256
    %v2519 = vunpack.c.h.b16 %v2256
    %v2520 = vunpack.c.l.b16 %v2257
    %v2521 = vunpack.c.h.b16 %v2257
    %v2522 = vunpack.c.l.b16 %v2258
    %v2523 = vunpack.c.h.b16 %v2258
    %v2524 = vunpack.c.l.b16 %v2259
    %v2525 = vunpack.c.h.b16 %v2259
    %v2526 = vunpack.c.l.b16 %v2260
    %v2527 = vunpack.c.h.b16 %v2260
    %v2528 = vunpack.c.l.b16 %v2261
    %v2529 = vunpack.c.h.b16 %v2261
    %v2530 = vunpack.c.l.b16 %v2262
    %v2531 = vunpack.c.h.b16 %v2262
    %v2532 = vunpack.c.l.b16 %v2263
    %v2533 = vunpack.c.h.b16 %v2263
    %v2534 = vunpack.c.l.b16 %v2264
    %v2535 = vunpack.c.h.b16 %v2264
    %v2536 = vunpack.c.l.b16 %v2265
    %v2537 = vunpack.c.h.b16 %v2265
    %v2538 = vunpack.c.l.b16 %v2266
    %v2539 = vunpack.c.h.b16 %v2266
    %v2540 = vunpack.c.l.b16 %v2267
    %v2541 = vunpack.c.h.b16 %v2267
    %v2542 = vunpack.c.l.b16 %v2268
    %v2543 = vunpack.c.h.b16 %v2268
    %v2544 = vunpack.c.l.b16 %v2269
    %v2545 = vunpack.c.h.b16 %v2269
    %v2546 = vunpack.c.l.b16 %v2270
    %v2547 = vunpack.c.h.b16 %v2270
    %v2548 = vunpack.c.l.b16 %v2271
    %v2549 = vunpack.c.h.b16 %v2271
    %v2550 = vunpack.c.l.b16 %v2272
    %v2551 = vunpack.c.h.b16 %v2272
    %v2552 = vunpack.c.l.b16 %v2273
    %v2553 = vunpack.c.h.b16 %v2273
    %v2554 = vunpack.c.l.b16 %v2274
    %v2555 = vunpack.c.h.b16 %v2274
    %v2556 = vunpack.c.l.b16 %v2275
    %v2557 = vunpack.c.h.b16 %v2275
    %v2558 = vunpack.c.l.b16 %v2276
    %v2559 = vunpack.c.h.b16 %v2276
    %v2560 = vunpack.c.l.b16 %v2277
    %v2561 = vunpack.c.h.b16 %v2277
    %v2562 = vunpack.c.l.b16 %v2278
    %v2563 = vunpack.c.h.b16 %v2278
    %v2564 = vunpack.c.l.b16 %v2279
    %v2565 = vunpack.c.h.b16 %v2279
    %v2566 = vunpack.c.l.b16 %v2280
    %v2567 = vunpack.c.h.b16 %v2280
    %v2568 = vunpack.c.l.b16 %v2281
    %v2569 = vunpack.c.h.b16 %v2281
    %v2570 = vpack.c.b16 %v2508, %v2506
    %v2571 = vpack.c.b16 %v2509, %v2507
    %v2572 = vpack.c.b16 %v2512, %v2510
    %v2573 = vpack.c.b16 %v2513, %v2511
    %v2574 = vpack.c.b16 %v2516, %v2514
    %v2575 = vpack.c.b16 %v2517, %v2515
    %v2576 = vpack.c.b16 %v2520, %v2518
    %v2577 = vpack.c.b16 %v2521, %v2519
    %v2578 = vpack.c.b16 %v2524, %v2522
    %v2579 = vpack.c.b16 %v2525, %v2523
    %v2580 = vpack.c.b16 %v2528, %v2526
    %v2581 = vpack.c.b16 %v2529, %v2527
    %v2582 = vpack.c.b16 %v2532, %v2530
    %v2583 = vpack.c.b16 %v2533, %v2531
    %v2584 = vpack.c.b16 %v2536, %v2534
    %v2585 = vpack.c.b16 %v2537, %v2535
    %v2586 = vpack.c.b16 %v2540, %v2538
    %v2587 = vpack.c.b16 %v2541, %v2539
    %v2588 = vpack.c.b16 %v2544, %v2542
    %v2589 = vpack.c.b16 %v2545, %v2543
    %v2590 = vpack.c.b16 %v2548, %v2546
    %v2591 = vpack.c.b16 %v2549, %v2547
    %v2592 = vpack.c.b16 %v2552, %v2550
    %v2593 = vpack.c.b16 %v2553, %v2551
    %v2594 = vpack.c.b16 %v2556, %v2554
    %v2595 = vpack.c.b16 %v2557, %v2555
    %v2596 = vpack.c.b16 %v2560, %v2558
    %v2597 = vpack.c.b16 %v2561, %v2559
    %v2598 = vpack.c.b16 %v2564, %v2562
    %v2599 = vpack.c.b16 %v2565, %v2563
    %v2600 = vpack.c.b16 %v2568, %v2566
    %v2601 = vpack.c.b16 %v2569, %v2567
    %2634 = vmatpush.bf16.msra.mxu0 %v2241
    %2635 = vmatpush.bf16.msra.mxu0 %v2240
    %2636 = vmatpush.bf16.msra.mxu0 %v2239
    %2637 = vmatpush.bf16.msra.mxu0 %v2238
    %2638 = vmatpush.bf16.msra.mxu0 %v2237
    %2639 = vmatpush.bf16.msra.mxu0 %v2236
    %2640 = vmatpush.bf16.msra.mxu0 %v2235
    %2641 = vmatpush.bf16.msra.mxu0 %v2234
    %2642 = vmatmul.bf16.gmra.mxu0 %v2570
    %v2643 = vpop.f32.mrf.mxu0
    %v2644 = vadd.f32 %v2317, %v2643
    %v2645 = vpop.f32.mrf.mxu0
    %v2646 = vadd.f32 %v2322, %v2645
    %2647 = vmatmul.bf16.gmra.mxu0 %v2572
    %v2648 = vpop.f32.mrf.mxu0
    %v2649 = vadd.f32 %v2327, %v2648
    %v2650 = vpop.f32.mrf.mxu0
    %v2651 = vadd.f32 %v2332, %v2650
    %2652 = vmatmul.bf16.gmra.mxu0 %v2574
    %v2653 = vpop.f32.mrf.mxu0
    %v2654 = vadd.f32 %v2337, %v2653
    %v2655 = vpop.f32.mrf.mxu0
    %v2656 = vadd.f32 %v2342, %v2655
    %2657 = vmatmul.bf16.gmra.mxu0 %v2576
    %v2658 = vpop.f32.mrf.mxu0
    %v2659 = vadd.f32 %v2347, %v2658
    %v2660 = vpop.f32.mrf.mxu0
    %v2661 = vadd.f32 %v2352, %v2660
    %2662 = vmatmul.bf16.gmra.mxu0 %v2578
    %v2663 = vpop.f32.mrf.mxu0
    %v2664 = vadd.f32 %v2357, %v2663
    %v2665 = vpop.f32.mrf.mxu0
    %v2666 = vadd.f32 %v2362, %v2665
    %2667 = vmatmul.bf16.gmra.mxu0 %v2580
    %v2668 = vpop.f32.mrf.mxu0
    %v2669 = vadd.f32 %v2367, %v2668
    %v2670 = vpop.f32.mrf.mxu0
    %v2671 = vadd.f32 %v2372, %v2670
    %2672 = vmatmul.bf16.gmra.mxu0 %v2582
    %v2673 = vpop.f32.mrf.mxu0
    %v2674 = vadd.f32 %v2377, %v2673
    %v2675 = vpop.f32.mrf.mxu0
    %v2676 = vadd.f32 %v2382, %v2675
    %2677 = vmatmul.bf16.gmra.mxu0 %v2584
    %v2678 = vpop.f32.mrf.mxu0
    %v2679 = vadd.f32 %v2387, %v2678
    %v2680 = vpop.f32.mrf.mxu0
    %v2681 = vadd.f32 %v2392, %v2680
    %2682 = vmatmul.bf16.gmra.mxu0 %v2586
    %v2683 = vpop.f32.mrf.mxu0
    %v2684 = vadd.f32 %v2397, %v2683
    %v2685 = vpop.f32.mrf.mxu0
    %v2686 = vadd.f32 %v2402, %v2685
    %2687 = vmatmul.bf16.gmra.mxu0 %v2588
    %v2688 = vpop.f32.mrf.mxu0
    %v2689 = vadd.f32 %v2407, %v2688
    %v2690 = vpop.f32.mrf.mxu0
    %v2691 = vadd.f32 %v2412, %v2690
    %2692 = vmatmul.bf16.gmra.mxu0 %v2590
    %v2693 = vpop.f32.mrf.mxu0
    %v2694 = vadd.f32 %v2417, %v2693
    %v2695 = vpop.f32.mrf.mxu0
    %v2696 = vadd.f32 %v2422, %v2695
    %2697 = vmatmul.bf16.gmra.mxu0 %v2592
    %v2698 = vpop.f32.mrf.mxu0
    %v2699 = vadd.f32 %v2427, %v2698
    %v2700 = vpop.f32.mrf.mxu0
    %v2701 = vadd.f32 %v2432, %v2700
    %2702 = vmatmul.bf16.gmra.mxu0 %v2594
    %v2703 = vpop.f32.mrf.mxu0
    %v2704 = vadd.f32 %v2437, %v2703
    %v2705 = vpop.f32.mrf.mxu0
    %v2706 = vadd.f32 %v2442, %v2705
    %2707 = vmatmul.bf16.gmra.mxu0 %v2596
    %v2708 = vpop.f32.mrf.mxu0
    %v2709 = vadd.f32 %v2447, %v2708
    %v2710 = vpop.f32.mrf.mxu0
    %v2711 = vadd.f32 %v2452, %v2710
    %2712 = vmatmul.bf16.gmra.mxu0 %v2598
    %v2713 = vpop.f32.mrf.mxu0
    %v2714 = vadd.f32 %v2457, %v2713
    %v2715 = vpop.f32.mrf.mxu0
    %v2716 = vadd.f32 %v2462, %v2715
    %2717 = vmatmul.bf16.gmra.mxu0 %v2600
    %v2718 = vpop.f32.mrf.mxu0
    %v2719 = vadd.f32 %v2467, %v2718
    %v2720 = vpop.f32.mrf.mxu0
    %v2721 = vadd.f32 %v2472, %v2720
    %2722 = vdwg.mxu0
    %2723 = vmatpush.bf16.msra.mxu0 %v2249
    %2724 = vmatpush.bf16.msra.mxu0 %v2248
    %2725 = vmatpush.bf16.msra.mxu0 %v2247
    %2726 = vmatpush.bf16.msra.mxu0 %v2246
    %2727 = vmatpush.bf16.msra.mxu0 %v2245
    %2728 = vmatpush.bf16.msra.mxu0 %v2244
    %2729 = vmatpush.bf16.msra.mxu0 %v2243
    %2730 = vmatpush.bf16.msra.mxu0 %v2242
    %2731 = vmatmul.bf16.gmra.mxu0 %v2571
    %v2732 = vpop.f32.mrf.mxu0
    %v2733 = vadd.f32 %v2644, %v2732
    %v2734 = vpop.f32.mrf.mxu0
    %v2735 = vadd.f32 %v2646, %v2734
    %2736 = vmatmul.bf16.gmra.mxu0 %v2573
    %v2737 = vpop.f32.mrf.mxu0
    %v2738 = vadd.f32 %v2649, %v2737
    %v2739 = vpop.f32.mrf.mxu0
    %v2740 = vadd.f32 %v2651, %v2739
    %2741 = vmatmul.bf16.gmra.mxu0 %v2575
    %v2742 = vpop.f32.mrf.mxu0
    %v2743 = vadd.f32 %v2654, %v2742
    %v2744 = vpop.f32.mrf.mxu0
    %v2745 = vadd.f32 %v2656, %v2744
    %2746 = vmatmul.bf16.gmra.mxu0 %v2577
    %v2747 = vpop.f32.mrf.mxu0
    %v2748 = vadd.f32 %v2659, %v2747
    %v2749 = vpop.f32.mrf.mxu0
    %v2750 = vadd.f32 %v2661, %v2749
    %2751 = vmatmul.bf16.gmra.mxu0 %v2579
    %v2752 = vpop.f32.mrf.mxu0
    %v2753 = vadd.f32 %v2664, %v2752
    %v2754 = vpop.f32.mrf.mxu0
    %v2755 = vadd.f32 %v2666, %v2754
    %2756 = vmatmul.bf16.gmra.mxu0 %v2581
    %v2757 = vpop.f32.mrf.mxu0
    %v2758 = vadd.f32 %v2669, %v2757
    %v2759 = vpop.f32.mrf.mxu0
    %v2760 = vadd.f32 %v2671, %v2759
    %2761 = vmatmul.bf16.gmra.mxu0 %v2583
    %v2762 = vpop.f32.mrf.mxu0
    %v2763 = vadd.f32 %v2674, %v2762
    %v2764 = vpop.f32.mrf.mxu0
    %v2765 = vadd.f32 %v2676, %v2764
    %2766 = vmatmul.bf16.gmra.mxu0 %v2585
    %v2767 = vpop.f32.mrf.mxu0
    %v2768 = vadd.f32 %v2679, %v2767
    %v2769 = vpop.f32.mrf.mxu0
    %v2770 = vadd.f32 %v2681, %v2769
    %2771 = vmatmul.bf16.gmra.mxu0 %v2587
    %v2772 = vpop.f32.mrf.mxu0
    %v2773 = vadd.f32 %v2684, %v2772
    %v2774 = vpop.f32.mrf.mxu0
    %v2775 = vadd.f32 %v2686, %v2774
    %2776 = vmatmul.bf16.gmra.mxu0 %v2589
    %v2777 = vpop.f32.mrf.mxu0
    %v2778 = vadd.f32 %v2689, %v2777
    %v2779 = vpop.f32.mrf.mxu0
    %v2780 = vadd.f32 %v2691, %v2779
    %2781 = vmatmul.bf16.gmra.mxu0 %v2591
    %v2782 = vpop.f32.mrf.mxu0
    %v2783 = vadd.f32 %v2694, %v2782
    %v2784 = vpop.f32.mrf.mxu0
    %v2785 = vadd.f32 %v2696, %v2784
    %2786 = vmatmul.bf16.gmra.mxu0 %v2593
    %v2787 = vpop.f32.mrf.mxu0
    %v2788 = vadd.f32 %v2699, %v2787
    %v2789 = vpop.f32.mrf.mxu0
    %v2790 = vadd.f32 %v2701, %v2789
    %2791 = vmatmul.bf16.gmra.mxu0 %v2595
    %v2792 = vpop.f32.mrf.mxu0
    %v2793 = vadd.f32 %v2704, %v2792
    %v2794 = vpop.f32.mrf.mxu0
    %v2795 = vadd.f32 %v2706, %v2794
    %2796 = vmatmul.bf16.gmra.mxu0 %v2597
    %v2797 = vpop.f32.mrf.mxu0
    %v2798 = vadd.f32 %v2709, %v2797
    %v2799 = vpop.f32.mrf.mxu0
    %v2800 = vadd.f32 %v2711, %v2799
    %2801 = vmatmul.bf16.gmra.mxu0 %v2599
    %v2802 = vpop.f32.mrf.mxu0
    %v2803 = vadd.f32 %v2714, %v2802
    %v2804 = vpop.f32.mrf.mxu0
    %v2805 = vadd.f32 %v2716, %v2804
    %2806 = vmatmul.bf16.gmra.mxu0 %v2601
    %v2807 = vpop.f32.mrf.mxu0
    %v2808 = vadd.f32 %v2719, %v2807
    %v2809 = vpop.f32.mrf.mxu0
    %v2810 = vadd.f32 %v2721, %v2809
    %2811 = vdwg.mxu0
    %2844 = vrot.lane.b32.xlu0 %v2733, 126
    %v2845 = vpop.permute.xlu0 %2844
    %2846 = vrot.lane.b32.xlu0 %v2735, 126
    %v2847 = vpop.permute.xlu0 %2846
    %2848 = vrot.lane.b32.xlu0 %v2738, 126
    %v2849 = vpop.permute.xlu0 %2848
    %2850 = vrot.lane.b32.xlu0 %v2740, 126
    %v2851 = vpop.permute.xlu0 %2850
    %2852 = vrot.lane.b32.xlu0 %v2743, 126
    %v2853 = vpop.permute.xlu0 %2852
    %2854 = vrot.lane.b32.xlu0 %v2745, 126
    %v2855 = vpop.permute.xlu0 %2854
    %2856 = vrot.lane.b32.xlu0 %v2748, 126
    %v2857 = vpop.permute.xlu0 %2856
    %2858 = vrot.lane.b32.xlu0 %v2750, 126
    %v2859 = vpop.permute.xlu0 %2858
    %2860 = vrot.lane.b32.xlu0 %v2753, 126
    %v2861 = vpop.permute.xlu0 %2860
    %2862 = vrot.lane.b32.xlu0 %v2755, 126
    %v2863 = vpop.permute.xlu0 %2862
    %2864 = vrot.lane.b32.xlu0 %v2758, 126
    %v2865 = vpop.permute.xlu0 %2864
    %2866 = vrot.lane.b32.xlu0 %v2760, 126
    %v2867 = vpop.permute.xlu0 %2866
    %2868 = vrot.lane.b32.xlu0 %v2763, 126
    %v2869 = vpop.permute.xlu0 %2868
    %2870 = vrot.lane.b32.xlu0 %v2765, 126
    %v2871 = vpop.permute.xlu0 %2870
    %2872 = vrot.lane.b32.xlu0 %v2768, 126
    %v2873 = vpop.permute.xlu0 %2872
    %2874 = vrot.lane.b32.xlu0 %v2770, 126
    %v2875 = vpop.permute.xlu0 %2874
    %2876 = vrot.lane.b32.xlu0 %v2773, 126
    %v2877 = vpop.permute.xlu0 %2876
    %2878 = vrot.lane.b32.xlu0 %v2775, 126
    %v2879 = vpop.permute.xlu0 %2878
    %2880 = vrot.lane.b32.xlu0 %v2778, 126
    %v2881 = vpop.permute.xlu0 %2880
    %2882 = vrot.lane.b32.xlu0 %v2780, 126
    %v2883 = vpop.permute.xlu0 %2882
    %2884 = vrot.lane.b32.xlu0 %v2783, 126
    %v2885 = vpop.permute.xlu0 %2884
    %2886 = vrot.lane.b32.xlu0 %v2785, 126
    %v2887 = vpop.permute.xlu0 %2886
    %2888 = vrot.lane.b32.xlu0 %v2788, 126
    %v2889 = vpop.permute.xlu0 %2888
    %2890 = vrot.lane.b32.xlu0 %v2790, 126
    %v2891 = vpop.permute.xlu0 %2890
    %2892 = vrot.lane.b32.xlu0 %v2793, 126
    %v2893 = vpop.permute.xlu0 %2892
    %2894 = vrot.lane.b32.xlu0 %v2795, 126
    %v2895 = vpop.permute.xlu0 %2894
    %2896 = vrot.lane.b32.xlu0 %v2798, 126
    %v2897 = vpop.permute.xlu0 %2896
    %2898 = vrot.lane.b32.xlu0 %v2800, 126
    %v2899 = vpop.permute.xlu0 %2898
    %2900 = vrot.lane.b32.xlu0 %v2803, 126
    %v2901 = vpop.permute.xlu0 %2900
    %2902 = vrot.lane.b32.xlu0 %v2805, 126
    %v2903 = vpop.permute.xlu0 %2902
    %2904 = vrot.lane.b32.xlu0 %v2808, 126
    %v2905 = vpop.permute.xlu0 %2904
    %2906 = vrot.lane.b32.xlu0 %v2810, 126
    %v2907 = vpop.permute.xlu0 %2906
    %v2940 = vmax.f32 %v2733, %v2845
    %v2941 = vmax.f32 %v2735, %v2847
    %v2942 = vmax.f32 %v2738, %v2849
    %v2943 = vmax.f32 %v2740, %v2851
    %v2944 = vmax.f32 %v2743, %v2853
    %v2945 = vmax.f32 %v2745, %v2855
    %v2946 = vmax.f32 %v2748, %v2857
    %v2947 = vmax.f32 %v2750, %v2859
    %v2948 = vmax.f32 %v2753, %v2861
    %v2949 = vmax.f32 %v2755, %v2863
    %v2950 = vmax.f32 %v2758, %v2865
    %v2951 = vmax.f32 %v2760, %v2867
    %v2952 = vmax.f32 %v2763, %v2869
    %v2953 = vmax.f32 %v2765, %v2871
    %v2954 = vmax.f32 %v2768, %v2873
    %v2955 = vmax.f32 %v2770, %v2875
    %v2956 = vmax.f32 %v2773, %v2877
    %v2957 = vmax.f32 %v2775, %v2879
    %v2958 = vmax.f32 %v2778, %v2881
    %v2959 = vmax.f32 %v2780, %v2883
    %v2960 = vmax.f32 %v2783, %v2885
    %v2961 = vmax.f32 %v2785, %v2887
    %v2962 = vmax.f32 %v2788, %v2889
    %v2963 = vmax.f32 %v2790, %v2891
    %v2964 = vmax.f32 %v2793, %v2893
    %v2965 = vmax.f32 %v2795, %v2895
    %v2966 = vmax.f32 %v2798, %v2897
    %v2967 = vmax.f32 %v2800, %v2899
    %v2968 = vmax.f32 %v2803, %v2901
    %v2969 = vmax.f32 %v2805, %v2903
    %v2970 = vmax.f32 %v2808, %v2905
    %v2971 = vmax.f32 %v2810, %v2907
    %3004 = vrot.lane.b32.xlu0 %v2940, 124
    %v3005 = vpop.permute.xlu0 %3004
    %3006 = vrot.lane.b32.xlu0 %v2941, 124
    %v3007 = vpop.permute.xlu0 %3006
    %3008 = vrot.lane.b32.xlu0 %v2942, 124
    %v3009 = vpop.permute.xlu0 %3008
    %3010 = vrot.lane.b32.xlu0 %v2943, 124
    %v3011 = vpop.permute.xlu0 %3010
    %3012 = vrot.lane.b32.xlu0 %v2944, 124
    %v3013 = vpop.permute.xlu0 %3012
    %3014 = vrot.lane.b32.xlu0 %v2945, 124
    %v3015 = vpop.permute.xlu0 %3014
    %3016 = vrot.lane.b32.xlu0 %v2946, 124
    %v3017 = vpop.permute.xlu0 %3016
    %3018 = vrot.lane.b32.xlu0 %v2947, 124
    %v3019 = vpop.permute.xlu0 %3018
    %3020 = vrot.lane.b32.xlu0 %v2948, 124
    %v3021 = vpop.permute.xlu0 %3020
    %3022 = vrot.lane.b32.xlu0 %v2949, 124
    %v3023 = vpop.permute.xlu0 %3022
    %3024 = vrot.lane.b32.xlu0 %v2950, 124
    %v3025 = vpop.permute.xlu0 %3024
    %3026 = vrot.lane.b32.xlu0 %v2951, 124
    %v3027 = vpop.permute.xlu0 %3026
    %3028 = vrot.lane.b32.xlu0 %v2952, 124
    %v3029 = vpop.permute.xlu0 %3028
    %3030 = vrot.lane.b32.xlu0 %v2953, 124
    %v3031 = vpop.permute.xlu0 %3030
    %3032 = vrot.lane.b32.xlu0 %v2954, 124
    %v3033 = vpop.permute.xlu0 %3032
    %3034 = vrot.lane.b32.xlu0 %v2955, 124
    %v3035 = vpop.permute.xlu0 %3034
    %3036 = vrot.lane.b32.xlu0 %v2956, 124
    %v3037 = vpop.permute.xlu0 %3036
    %3038 = vrot.lane.b32.xlu0 %v2957, 124
    %v3039 = vpop.permute.xlu0 %3038
    %3040 = vrot.lane.b32.xlu0 %v2958, 124
    %v3041 = vpop.permute.xlu0 %3040
    %3042 = vrot.lane.b32.xlu0 %v2959, 124
    %v3043 = vpop.permute.xlu0 %3042
    %3044 = vrot.lane.b32.xlu0 %v2960, 124
    %v3045 = vpop.permute.xlu0 %3044
    %3046 = vrot.lane.b32.xlu0 %v2961, 124
    %v3047 = vpop.permute.xlu0 %3046
    %3048 = vrot.lane.b32.xlu0 %v2962, 124
    %v3049 = vpop.permute.xlu0 %3048
    %3050 = vrot.lane.b32.xlu0 %v2963, 124
    %v3051 = vpop.permute.xlu0 %3050
    %3052 = vrot.lane.b32.xlu0 %v2964, 124
    %v3053 = vpop.permute.xlu0 %3052
    %3054 = vrot.lane.b32.xlu0 %v2965, 124
    %v3055 = vpop.permute.xlu0 %3054
    %3056 = vrot.lane.b32.xlu0 %v2966, 124
    %v3057 = vpop.permute.xlu0 %3056
    %3058 = vrot.lane.b32.xlu0 %v2967, 124
    %v3059 = vpop.permute.xlu0 %3058
    %3060 = vrot.lane.b32.xlu0 %v2968, 124
    %v3061 = vpop.permute.xlu0 %3060
    %3062 = vrot.lane.b32.xlu0 %v2969, 124
    %v3063 = vpop.permute.xlu0 %3062
    %3064 = vrot.lane.b32.xlu0 %v2970, 124
    %v3065 = vpop.permute.xlu0 %3064
    %3066 = vrot.lane.b32.xlu0 %v2971, 124
    %v3067 = vpop.permute.xlu0 %3066
    %v3100 = vmax.f32 %v2940, %v3005
    %v3101 = vmax.f32 %v2941, %v3007
    %v3102 = vmax.f32 %v2942, %v3009
    %v3103 = vmax.f32 %v2943, %v3011
    %v3104 = vmax.f32 %v2944, %v3013
    %v3105 = vmax.f32 %v2945, %v3015
    %v3106 = vmax.f32 %v2946, %v3017
    %v3107 = vmax.f32 %v2947, %v3019
    %v3108 = vmax.f32 %v2948, %v3021
    %v3109 = vmax.f32 %v2949, %v3023
    %v3110 = vmax.f32 %v2950, %v3025
    %v3111 = vmax.f32 %v2951, %v3027
    %v3112 = vmax.f32 %v2952, %v3029
    %v3113 = vmax.f32 %v2953, %v3031
    %v3114 = vmax.f32 %v2954, %v3033
    %v3115 = vmax.f32 %v2955, %v3035
    %v3116 = vmax.f32 %v2956, %v3037
    %v3117 = vmax.f32 %v2957, %v3039
    %v3118 = vmax.f32 %v2958, %v3041
    %v3119 = vmax.f32 %v2959, %v3043
    %v3120 = vmax.f32 %v2960, %v3045
    %v3121 = vmax.f32 %v2961, %v3047
    %v3122 = vmax.f32 %v2962, %v3049
    %v3123 = vmax.f32 %v2963, %v3051
    %v3124 = vmax.f32 %v2964, %v3053
    %v3125 = vmax.f32 %v2965, %v3055
    %v3126 = vmax.f32 %v2966, %v3057
    %v3127 = vmax.f32 %v2967, %v3059
    %v3128 = vmax.f32 %v2968, %v3061
    %v3129 = vmax.f32 %v2969, %v3063
    %v3130 = vmax.f32 %v2970, %v3065
    %v3131 = vmax.f32 %v2971, %v3067
    %3164 = vrot.lane.b32.xlu0 %v3100, 120
    %v3165 = vpop.permute.xlu0 %3164
    %3166 = vrot.lane.b32.xlu0 %v3101, 120
    %v3167 = vpop.permute.xlu0 %3166
    %3168 = vrot.lane.b32.xlu0 %v3102, 120
    %v3169 = vpop.permute.xlu0 %3168
    %3170 = vrot.lane.b32.xlu0 %v3103, 120
    %v3171 = vpop.permute.xlu0 %3170
    %3172 = vrot.lane.b32.xlu0 %v3104, 120
    %v3173 = vpop.permute.xlu0 %3172
    %3174 = vrot.lane.b32.xlu0 %v3105, 120
    %v3175 = vpop.permute.xlu0 %3174
    %3176 = vrot.lane.b32.xlu0 %v3106, 120
    %v3177 = vpop.permute.xlu0 %3176
    %3178 = vrot.lane.b32.xlu0 %v3107, 120
    %v3179 = vpop.permute.xlu0 %3178
    %3180 = vrot.lane.b32.xlu0 %v3108, 120
    %v3181 = vpop.permute.xlu0 %3180
    %3182 = vrot.lane.b32.xlu0 %v3109, 120
    %v3183 = vpop.permute.xlu0 %3182
    %3184 = vrot.lane.b32.xlu0 %v3110, 120
    %v3185 = vpop.permute.xlu0 %3184
    %3186 = vrot.lane.b32.xlu0 %v3111, 120
    %v3187 = vpop.permute.xlu0 %3186
    %3188 = vrot.lane.b32.xlu0 %v3112, 120
    %v3189 = vpop.permute.xlu0 %3188
    %3190 = vrot.lane.b32.xlu0 %v3113, 120
    %v3191 = vpop.permute.xlu0 %3190
    %3192 = vrot.lane.b32.xlu0 %v3114, 120
    %v3193 = vpop.permute.xlu0 %3192
    %3194 = vrot.lane.b32.xlu0 %v3115, 120
    %v3195 = vpop.permute.xlu0 %3194
    %3196 = vrot.lane.b32.xlu0 %v3116, 120
    %v3197 = vpop.permute.xlu0 %3196
    %3198 = vrot.lane.b32.xlu0 %v3117, 120
    %v3199 = vpop.permute.xlu0 %3198
    %3200 = vrot.lane.b32.xlu0 %v3118, 120
    %v3201 = vpop.permute.xlu0 %3200
    %3202 = vrot.lane.b32.xlu0 %v3119, 120
    %v3203 = vpop.permute.xlu0 %3202
    %3204 = vrot.lane.b32.xlu0 %v3120, 120
    %v3205 = vpop.permute.xlu0 %3204
    %3206 = vrot.lane.b32.xlu0 %v3121, 120
    %v3207 = vpop.permute.xlu0 %3206
    %3208 = vrot.lane.b32.xlu0 %v3122, 120
    %v3209 = vpop.permute.xlu0 %3208
    %3210 = vrot.lane.b32.xlu0 %v3123, 120
    %v3211 = vpop.permute.xlu0 %3210
    %3212 = vrot.lane.b32.xlu0 %v3124, 120
    %v3213 = vpop.permute.xlu0 %3212
    %3214 = vrot.lane.b32.xlu0 %v3125, 120
    %v3215 = vpop.permute.xlu0 %3214
    %3216 = vrot.lane.b32.xlu0 %v3126, 120
    %v3217 = vpop.permute.xlu0 %3216
    %3218 = vrot.lane.b32.xlu0 %v3127, 120
    %v3219 = vpop.permute.xlu0 %3218
    %3220 = vrot.lane.b32.xlu0 %v3128, 120
    %v3221 = vpop.permute.xlu0 %3220
    %3222 = vrot.lane.b32.xlu0 %v3129, 120
    %v3223 = vpop.permute.xlu0 %3222
    %3224 = vrot.lane.b32.xlu0 %v3130, 120
    %v3225 = vpop.permute.xlu0 %3224
    %3226 = vrot.lane.b32.xlu0 %v3131, 120
    %v3227 = vpop.permute.xlu0 %3226
    %v3260 = vmax.f32 %v3100, %v3165
    %v3261 = vmax.f32 %v3101, %v3167
    %v3262 = vmax.f32 %v3102, %v3169
    %v3263 = vmax.f32 %v3103, %v3171
    %v3264 = vmax.f32 %v3104, %v3173
    %v3265 = vmax.f32 %v3105, %v3175
    %v3266 = vmax.f32 %v3106, %v3177
    %v3267 = vmax.f32 %v3107, %v3179
    %v3268 = vmax.f32 %v3108, %v3181
    %v3269 = vmax.f32 %v3109, %v3183
    %v3270 = vmax.f32 %v3110, %v3185
    %v3271 = vmax.f32 %v3111, %v3187
    %v3272 = vmax.f32 %v3112, %v3189
    %v3273 = vmax.f32 %v3113, %v3191
    %v3274 = vmax.f32 %v3114, %v3193
    %v3275 = vmax.f32 %v3115, %v3195
    %v3276 = vmax.f32 %v3116, %v3197
    %v3277 = vmax.f32 %v3117, %v3199
    %v3278 = vmax.f32 %v3118, %v3201
    %v3279 = vmax.f32 %v3119, %v3203
    %v3280 = vmax.f32 %v3120, %v3205
    %v3281 = vmax.f32 %v3121, %v3207
    %v3282 = vmax.f32 %v3122, %v3209
    %v3283 = vmax.f32 %v3123, %v3211
    %v3284 = vmax.f32 %v3124, %v3213
    %v3285 = vmax.f32 %v3125, %v3215
    %v3286 = vmax.f32 %v3126, %v3217
    %v3287 = vmax.f32 %v3127, %v3219
    %v3288 = vmax.f32 %v3128, %v3221
    %v3289 = vmax.f32 %v3129, %v3223
    %v3290 = vmax.f32 %v3130, %v3225
    %v3291 = vmax.f32 %v3131, %v3227
    %3324 = vrot.lane.b32.xlu0 %v3260, 112
    %v3325 = vpop.permute.xlu0 %3324
    %3326 = vrot.lane.b32.xlu0 %v3261, 112
    %v3327 = vpop.permute.xlu0 %3326
    %3328 = vrot.lane.b32.xlu0 %v3262, 112
    %v3329 = vpop.permute.xlu0 %3328
    %3330 = vrot.lane.b32.xlu0 %v3263, 112
    %v3331 = vpop.permute.xlu0 %3330
    %3332 = vrot.lane.b32.xlu0 %v3264, 112
    %v3333 = vpop.permute.xlu0 %3332
    %3334 = vrot.lane.b32.xlu0 %v3265, 112
    %v3335 = vpop.permute.xlu0 %3334
    %3336 = vrot.lane.b32.xlu0 %v3266, 112
    %v3337 = vpop.permute.xlu0 %3336
    %3338 = vrot.lane.b32.xlu0 %v3267, 112
    %v3339 = vpop.permute.xlu0 %3338
    %3340 = vrot.lane.b32.xlu0 %v3268, 112
    %v3341 = vpop.permute.xlu0 %3340
    %3342 = vrot.lane.b32.xlu0 %v3269, 112
    %v3343 = vpop.permute.xlu0 %3342
    %3344 = vrot.lane.b32.xlu0 %v3270, 112
    %v3345 = vpop.permute.xlu0 %3344
    %3346 = vrot.lane.b32.xlu0 %v3271, 112
    %v3347 = vpop.permute.xlu0 %3346
    %3348 = vrot.lane.b32.xlu0 %v3272, 112
    %v3349 = vpop.permute.xlu0 %3348
    %3350 = vrot.lane.b32.xlu0 %v3273, 112
    %v3351 = vpop.permute.xlu0 %3350
    %3352 = vrot.lane.b32.xlu0 %v3274, 112
    %v3353 = vpop.permute.xlu0 %3352
    %3354 = vrot.lane.b32.xlu0 %v3275, 112
    %v3355 = vpop.permute.xlu0 %3354
    %3356 = vrot.lane.b32.xlu0 %v3276, 112
    %v3357 = vpop.permute.xlu0 %3356
    %3358 = vrot.lane.b32.xlu0 %v3277, 112
    %v3359 = vpop.permute.xlu0 %3358
    %3360 = vrot.lane.b32.xlu0 %v3278, 112
    %v3361 = vpop.permute.xlu0 %3360
    %3362 = vrot.lane.b32.xlu0 %v3279, 112
    %v3363 = vpop.permute.xlu0 %3362
    %3364 = vrot.lane.b32.xlu0 %v3280, 112
    %v3365 = vpop.permute.xlu0 %3364
    %3366 = vrot.lane.b32.xlu0 %v3281, 112
    %v3367 = vpop.permute.xlu0 %3366
    %3368 = vrot.lane.b32.xlu0 %v3282, 112
    %v3369 = vpop.permute.xlu0 %3368
    %3370 = vrot.lane.b32.xlu0 %v3283, 112
    %v3371 = vpop.permute.xlu0 %3370
    %3372 = vrot.lane.b32.xlu0 %v3284, 112
    %v3373 = vpop.permute.xlu0 %3372
    %3374 = vrot.lane.b32.xlu0 %v3285, 112
    %v3375 = vpop.permute.xlu0 %3374
    %3376 = vrot.lane.b32.xlu0 %v3286, 112
    %v3377 = vpop.permute.xlu0 %3376
    %3378 = vrot.lane.b32.xlu0 %v3287, 112
    %v3379 = vpop.permute.xlu0 %3378
    %3380 = vrot.lane.b32.xlu0 %v3288, 112
    %v3381 = vpop.permute.xlu0 %3380
    %3382 = vrot.lane.b32.xlu0 %v3289, 112
    %v3383 = vpop.permute.xlu0 %3382
    %3384 = vrot.lane.b32.xlu0 %v3290, 112
    %v3385 = vpop.permute.xlu0 %3384
    %3386 = vrot.lane.b32.xlu0 %v3291, 112
    %v3387 = vpop.permute.xlu0 %3386
    %v3420 = vmax.f32 %v3260, %v3325
    %v3421 = vmax.f32 %v3261, %v3327
    %v3422 = vmax.f32 %v3262, %v3329
    %v3423 = vmax.f32 %v3263, %v3331
    %v3424 = vmax.f32 %v3264, %v3333
    %v3425 = vmax.f32 %v3265, %v3335
    %v3426 = vmax.f32 %v3266, %v3337
    %v3427 = vmax.f32 %v3267, %v3339
    %v3428 = vmax.f32 %v3268, %v3341
    %v3429 = vmax.f32 %v3269, %v3343
    %v3430 = vmax.f32 %v3270, %v3345
    %v3431 = vmax.f32 %v3271, %v3347
    %v3432 = vmax.f32 %v3272, %v3349
    %v3433 = vmax.f32 %v3273, %v3351
    %v3434 = vmax.f32 %v3274, %v3353
    %v3435 = vmax.f32 %v3275, %v3355
    %v3436 = vmax.f32 %v3276, %v3357
    %v3437 = vmax.f32 %v3277, %v3359
    %v3438 = vmax.f32 %v3278, %v3361
    %v3439 = vmax.f32 %v3279, %v3363
    %v3440 = vmax.f32 %v3280, %v3365
    %v3441 = vmax.f32 %v3281, %v3367
    %v3442 = vmax.f32 %v3282, %v3369
    %v3443 = vmax.f32 %v3283, %v3371
    %v3444 = vmax.f32 %v3284, %v3373
    %v3445 = vmax.f32 %v3285, %v3375
    %v3446 = vmax.f32 %v3286, %v3377
    %v3447 = vmax.f32 %v3287, %v3379
    %v3448 = vmax.f32 %v3288, %v3381
    %v3449 = vmax.f32 %v3289, %v3383
    %v3450 = vmax.f32 %v3290, %v3385
    %v3451 = vmax.f32 %v3291, %v3387
    %3484 = vrot.lane.b32.xlu0 %v3420, 96
    %v3485 = vpop.permute.xlu0 %3484
    %3486 = vrot.lane.b32.xlu0 %v3421, 96
    %v3487 = vpop.permute.xlu0 %3486
    %3488 = vrot.lane.b32.xlu0 %v3422, 96
    %v3489 = vpop.permute.xlu0 %3488
    %3490 = vrot.lane.b32.xlu0 %v3423, 96
    %v3491 = vpop.permute.xlu0 %3490
    %3492 = vrot.lane.b32.xlu0 %v3424, 96
    %v3493 = vpop.permute.xlu0 %3492
    %3494 = vrot.lane.b32.xlu0 %v3425, 96
    %v3495 = vpop.permute.xlu0 %3494
    %3496 = vrot.lane.b32.xlu0 %v3426, 96
    %v3497 = vpop.permute.xlu0 %3496
    %3498 = vrot.lane.b32.xlu0 %v3427, 96
    %v3499 = vpop.permute.xlu0 %3498
    %3500 = vrot.lane.b32.xlu0 %v3428, 96
    %v3501 = vpop.permute.xlu0 %3500
    %3502 = vrot.lane.b32.xlu0 %v3429, 96
    %v3503 = vpop.permute.xlu0 %3502
    %3504 = vrot.lane.b32.xlu0 %v3430, 96
    %v3505 = vpop.permute.xlu0 %3504
    %3506 = vrot.lane.b32.xlu0 %v3431, 96
    %v3507 = vpop.permute.xlu0 %3506
    %3508 = vrot.lane.b32.xlu0 %v3432, 96
    %v3509 = vpop.permute.xlu0 %3508
    %3510 = vrot.lane.b32.xlu0 %v3433, 96
    %v3511 = vpop.permute.xlu0 %3510
    %3512 = vrot.lane.b32.xlu0 %v3434, 96
    %v3513 = vpop.permute.xlu0 %3512
    %3514 = vrot.lane.b32.xlu0 %v3435, 96
    %v3515 = vpop.permute.xlu0 %3514
    %3516 = vrot.lane.b32.xlu0 %v3436, 96
    %v3517 = vpop.permute.xlu0 %3516
    %3518 = vrot.lane.b32.xlu0 %v3437, 96
    %v3519 = vpop.permute.xlu0 %3518
    %3520 = vrot.lane.b32.xlu0 %v3438, 96
    %v3521 = vpop.permute.xlu0 %3520
    %3522 = vrot.lane.b32.xlu0 %v3439, 96
    %v3523 = vpop.permute.xlu0 %3522
    %3524 = vrot.lane.b32.xlu0 %v3440, 96
    %v3525 = vpop.permute.xlu0 %3524
    %3526 = vrot.lane.b32.xlu0 %v3441, 96
    %v3527 = vpop.permute.xlu0 %3526
    %3528 = vrot.lane.b32.xlu0 %v3442, 96
    %v3529 = vpop.permute.xlu0 %3528
    %3530 = vrot.lane.b32.xlu0 %v3443, 96
    %v3531 = vpop.permute.xlu0 %3530
    %3532 = vrot.lane.b32.xlu0 %v3444, 96
    %v3533 = vpop.permute.xlu0 %3532
    %3534 = vrot.lane.b32.xlu0 %v3445, 96
    %v3535 = vpop.permute.xlu0 %3534
    %3536 = vrot.lane.b32.xlu0 %v3446, 96
    %v3537 = vpop.permute.xlu0 %3536
    %3538 = vrot.lane.b32.xlu0 %v3447, 96
    %v3539 = vpop.permute.xlu0 %3538
    %3540 = vrot.lane.b32.xlu0 %v3448, 96
    %v3541 = vpop.permute.xlu0 %3540
    %3542 = vrot.lane.b32.xlu0 %v3449, 96
    %v3543 = vpop.permute.xlu0 %3542
    %3544 = vrot.lane.b32.xlu0 %v3450, 96
    %v3545 = vpop.permute.xlu0 %3544
    %3546 = vrot.lane.b32.xlu0 %v3451, 96
    %v3547 = vpop.permute.xlu0 %3546
    %v3580 = vmax.f32 %v3420, %v3485
    %v3581 = vmax.f32 %v3421, %v3487
    %v3582 = vmax.f32 %v3422, %v3489
    %v3583 = vmax.f32 %v3423, %v3491
    %v3584 = vmax.f32 %v3424, %v3493
    %v3585 = vmax.f32 %v3425, %v3495
    %v3586 = vmax.f32 %v3426, %v3497
    %v3587 = vmax.f32 %v3427, %v3499
    %v3588 = vmax.f32 %v3428, %v3501
    %v3589 = vmax.f32 %v3429, %v3503
    %v3590 = vmax.f32 %v3430, %v3505
    %v3591 = vmax.f32 %v3431, %v3507
    %v3592 = vmax.f32 %v3432, %v3509
    %v3593 = vmax.f32 %v3433, %v3511
    %v3594 = vmax.f32 %v3434, %v3513
    %v3595 = vmax.f32 %v3435, %v3515
    %v3596 = vmax.f32 %v3436, %v3517
    %v3597 = vmax.f32 %v3437, %v3519
    %v3598 = vmax.f32 %v3438, %v3521
    %v3599 = vmax.f32 %v3439, %v3523
    %v3600 = vmax.f32 %v3440, %v3525
    %v3601 = vmax.f32 %v3441, %v3527
    %v3602 = vmax.f32 %v3442, %v3529
    %v3603 = vmax.f32 %v3443, %v3531
    %v3604 = vmax.f32 %v3444, %v3533
    %v3605 = vmax.f32 %v3445, %v3535
    %v3606 = vmax.f32 %v3446, %v3537
    %v3607 = vmax.f32 %v3447, %v3539
    %v3608 = vmax.f32 %v3448, %v3541
    %v3609 = vmax.f32 %v3449, %v3543
    %v3610 = vmax.f32 %v3450, %v3545
    %v3611 = vmax.f32 %v3451, %v3547
    %3644 = vrot.lane.b32.xlu0 %v3580, 64
    %v3645 = vpop.permute.xlu0 %3644
    %3646 = vrot.lane.b32.xlu0 %v3581, 64
    %v3647 = vpop.permute.xlu0 %3646
    %3648 = vrot.lane.b32.xlu0 %v3582, 64
    %v3649 = vpop.permute.xlu0 %3648
    %3650 = vrot.lane.b32.xlu0 %v3583, 64
    %v3651 = vpop.permute.xlu0 %3650
    %3652 = vrot.lane.b32.xlu0 %v3584, 64
    %v3653 = vpop.permute.xlu0 %3652
    %3654 = vrot.lane.b32.xlu0 %v3585, 64
    %v3655 = vpop.permute.xlu0 %3654
    %3656 = vrot.lane.b32.xlu0 %v3586, 64
    %v3657 = vpop.permute.xlu0 %3656
    %3658 = vrot.lane.b32.xlu0 %v3587, 64
    %v3659 = vpop.permute.xlu0 %3658
    %3660 = vrot.lane.b32.xlu0 %v3588, 64
    %v3661 = vpop.permute.xlu0 %3660
    %3662 = vrot.lane.b32.xlu0 %v3589, 64
    %v3663 = vpop.permute.xlu0 %3662
    %3664 = vrot.lane.b32.xlu0 %v3590, 64
    %v3665 = vpop.permute.xlu0 %3664
    %3666 = vrot.lane.b32.xlu0 %v3591, 64
    %v3667 = vpop.permute.xlu0 %3666
    %3668 = vrot.lane.b32.xlu0 %v3592, 64
    %v3669 = vpop.permute.xlu0 %3668
    %3670 = vrot.lane.b32.xlu0 %v3593, 64
    %v3671 = vpop.permute.xlu0 %3670
    %3672 = vrot.lane.b32.xlu0 %v3594, 64
    %v3673 = vpop.permute.xlu0 %3672
    %3674 = vrot.lane.b32.xlu0 %v3595, 64
    %v3675 = vpop.permute.xlu0 %3674
    %3676 = vrot.lane.b32.xlu0 %v3596, 64
    %v3677 = vpop.permute.xlu0 %3676
    %3678 = vrot.lane.b32.xlu0 %v3597, 64
    %v3679 = vpop.permute.xlu0 %3678
    %3680 = vrot.lane.b32.xlu0 %v3598, 64
    %v3681 = vpop.permute.xlu0 %3680
    %3682 = vrot.lane.b32.xlu0 %v3599, 64
    %v3683 = vpop.permute.xlu0 %3682
    %3684 = vrot.lane.b32.xlu0 %v3600, 64
    %v3685 = vpop.permute.xlu0 %3684
    %3686 = vrot.lane.b32.xlu0 %v3601, 64
    %v3687 = vpop.permute.xlu0 %3686
    %3688 = vrot.lane.b32.xlu0 %v3602, 64
    %v3689 = vpop.permute.xlu0 %3688
    %3690 = vrot.lane.b32.xlu0 %v3603, 64
    %v3691 = vpop.permute.xlu0 %3690
    %3692 = vrot.lane.b32.xlu0 %v3604, 64
    %v3693 = vpop.permute.xlu0 %3692
    %3694 = vrot.lane.b32.xlu0 %v3605, 64
    %v3695 = vpop.permute.xlu0 %3694
    %3696 = vrot.lane.b32.xlu0 %v3606, 64
    %v3697 = vpop.permute.xlu0 %3696
    %3698 = vrot.lane.b32.xlu0 %v3607, 64
    %v3699 = vpop.permute.xlu0 %3698
    %3700 = vrot.lane.b32.xlu0 %v3608, 64
    %v3701 = vpop.permute.xlu0 %3700
    %3702 = vrot.lane.b32.xlu0 %v3609, 64
    %v3703 = vpop.permute.xlu0 %3702
    %3704 = vrot.lane.b32.xlu0 %v3610, 64
    %v3705 = vpop.permute.xlu0 %3704
    %3706 = vrot.lane.b32.xlu0 %v3611, 64
    %v3707 = vpop.permute.xlu0 %3706
    %vm3740 = vcmask 523264
    %v3741 = vmax.f32 %v3580, %v3645
    %v3742 = vmax.f32 %v3581, %v3647
    %v3743 = vmax.f32 %v3582, %v3649
    %v3744 = vmax.f32 %v3583, %v3651
    %v3745 = vmax.f32 %v3584, %v3653
    %v3746 = vmax.f32 %v3585, %v3655
    %v3747 = vmax.f32 %v3586, %v3657
    %v3748 = vmax.f32 %v3587, %v3659
    %v3749 = vmax.f32 %v3588, %v3661
    %v3750 = vmax.f32 %v3589, %v3663
    %v3751 = vmax.f32 %v3590, %v3665
    %v3752 = vmax.f32 %v3591, %v3667
    %v3753 = vmax.f32 %v3592, %v3669
    %v3754 = vmax.f32 %v3593, %v3671
    %v3755 = vmax.f32 %v3594, %v3673
    %v3756 = vmax.f32 %v3595, %v3675
    %v3757 = vmax.f32 %v3596, %v3677
    %v3758 = vmax.f32 %v3597, %v3679
    %v3759 = vmax.f32 %v3598, %v3681
    %v3760 = vmax.f32 %v3599, %v3683
    %v3761 = vmax.f32 %v3600, %v3685
    %v3762 = vmax.f32 %v3601, %v3687
    %v3763 = vmax.f32 %v3602, %v3689
    %v3764 = vmax.f32 %v3603, %v3691
    %v3765 = vmax.f32 %v3604, %v3693
    %v3766 = vmax.f32 %v3605, %v3695
    %v3767 = vmax.f32 %v3606, %v3697
    %v3768 = vmax.f32 %v3607, %v3699
    %v3769 = vmax.f32 %v3608, %v3701
    %v3770 = vmax.f32 %v3609, %v3703
    %v3771 = vmax.f32 %v3610, %v3705
    %v3772 = vmax.f32 %v3611, %v3707
    %v3773 = vpack.c.bf16 %v3742, %v3741
    %v3774 = vpack.c.bf16 %v3744, %v3743
    %v3775 = vpack.c.bf16 %v3746, %v3745
    %v3776 = vpack.c.bf16 %v3748, %v3747
    %v3777 = vpack.c.bf16 %v3750, %v3749
    %v3778 = vpack.c.bf16 %v3752, %v3751
    %v3779 = vpack.c.bf16 %v3754, %v3753
    %v3780 = vpack.c.bf16 %v3756, %v3755
    %v3781 = vpack.c.bf16 %v3758, %v3757
    %v3782 = vpack.c.bf16 %v3760, %v3759
    %v3783 = vpack.c.bf16 %v3762, %v3761
    %v3784 = vpack.c.bf16 %v3764, %v3763
    %v3785 = vpack.c.bf16 %v3766, %v3765
    %v3786 = vpack.c.bf16 %v3768, %v3767
    %v3787 = vpack.c.bf16 %v3770, %v3769
    %v3788 = vpack.c.bf16 %v3772, %v3771
    %v3789 = vld [vmem:[%s11] sm:$0xff]
    %v3790 = vld [vmem:[%s11 + $0x8] sm:$0xff]
    %v3791 = vld [vmem:[%s11 + $0x10] sm:$0xff]
    %v3792 = vld [vmem:[%s11 + $0x18] sm:$0xff]
    %v3793 = vld [vmem:[%s11 + $0x20] sm:$0xff]
    %v3794 = vld [vmem:[%s11 + $0x28] sm:$0xff]
    %v3795 = vld [vmem:[%s11 + $0x30] sm:$0xff]
    %v3796 = vld [vmem:[%s11 + $0x38] sm:$0xff]
    %v3797 = vld [vmem:[%s11 + $0x40] sm:$0xff]
    %v3798 = vld [vmem:[%s11 + $0x48] sm:$0xff]
    %v3799 = vld [vmem:[%s11 + $0x50] sm:$0xff]
    %v3800 = vld [vmem:[%s11 + $0x58] sm:$0xff]
    %v3801 = vld [vmem:[%s11 + $0x60] sm:$0xff]
    %v3802 = vld [vmem:[%s11 + $0x68] sm:$0xff]
    %v3803 = vld [vmem:[%s11 + $0x70] sm:$0xff]
    %v3804 = vld [vmem:[%s11 + $0x78] sm:$0xff]
    %v3805 = vld [vmem:[%s11 + $0x80] sm:$0xff]
    %v3806 = vld [vmem:[%s11 + $0x88] sm:$0xff]
    %v3807 = vld [vmem:[%s11 + $0x90] sm:$0xff]
    %v3808 = vld [vmem:[%s11 + $0x98] sm:$0xff]
    %v3809 = vld [vmem:[%s11 + $0xa0] sm:$0xff]
    %v3810 = vld [vmem:[%s11 + $0xa8] sm:$0xff]
    %v3811 = vld [vmem:[%s11 + $0xb0] sm:$0xff]
    %v3812 = vld [vmem:[%s11 + $0xb8] sm:$0xff]
    %v3813 = vld [vmem:[%s11 + $0xc0] sm:$0xff]
    %v3814 = vld [vmem:[%s11 + $0xc8] sm:$0xff]
    %v3815 = vld [vmem:[%s11 + $0xd0] sm:$0xff]
    %v3816 = vld [vmem:[%s11 + $0xd8] sm:$0xff]
    %v3817 = vld [vmem:[%s11 + $0xe0] sm:$0xff]
    %v3818 = vld [vmem:[%s11 + $0xe8] sm:$0xff]
    %v3819 = vld [vmem:[%s11 + $0xf0] sm:$0xff]
    %v3820 = vld [vmem:[%s11 + $0xf8] sm:$0xff]
    %v3821 = vld [vmem:[%s12] sm:$0xff]
    %v3822 = vld [vmem:[%s12 + $0x8] sm:$0xff]
    %v3823 = vld [vmem:[%s12 + $0x10] sm:$0xff]
    %v3824 = vld [vmem:[%s12 + $0x18] sm:$0xff]
    %v3825 = vld [vmem:[%s12 + $0x20] sm:$0xff]
    %v3826 = vld [vmem:[%s12 + $0x28] sm:$0xff]
    %v3827 = vld [vmem:[%s12 + $0x30] sm:$0xff]
    %v3828 = vld [vmem:[%s12 + $0x38] sm:$0xff]
    %v3829 = vld [vmem:[%s12 + $0x40] sm:$0xff]
    %v3830 = vld [vmem:[%s12 + $0x48] sm:$0xff]
    %v3831 = vld [vmem:[%s12 + $0x50] sm:$0xff]
    %v3832 = vld [vmem:[%s12 + $0x58] sm:$0xff]
    %v3833 = vld [vmem:[%s12 + $0x60] sm:$0xff]
    %v3834 = vld [vmem:[%s12 + $0x68] sm:$0xff]
    %v3835 = vld [vmem:[%s12 + $0x70] sm:$0xff]
    %v3836 = vld [vmem:[%s12 + $0x78] sm:$0xff]
    %v3837 = vld [vmem:[%s12 + $0x80] sm:$0xff]
    %v3838 = vld [vmem:[%s12 + $0x88] sm:$0xff]
    %v3839 = vld [vmem:[%s12 + $0x90] sm:$0xff]
    %v3840 = vld [vmem:[%s12 + $0x98] sm:$0xff]
    %v3841 = vld [vmem:[%s12 + $0xa0] sm:$0xff]
    %v3842 = vld [vmem:[%s12 + $0xa8] sm:$0xff]
    %v3843 = vld [vmem:[%s12 + $0xb0] sm:$0xff]
    %v3844 = vld [vmem:[%s12 + $0xb8] sm:$0xff]
    %v3845 = vld [vmem:[%s12 + $0xc0] sm:$0xff]
    %v3846 = vld [vmem:[%s12 + $0xc8] sm:$0xff]
    %v3847 = vld [vmem:[%s12 + $0xd0] sm:$0xff]
    %v3848 = vld [vmem:[%s12 + $0xd8] sm:$0xff]
    %v3849 = vld [vmem:[%s12 + $0xe0] sm:$0xff]
    %v3850 = vld [vmem:[%s12 + $0xe8] sm:$0xff]
    %v3851 = vld [vmem:[%s12 + $0xf0] sm:$0xff]
    %v3852 = vld [vmem:[%s12 + $0xf8] sm:$0xff]
    %v3885 = vunpack.c.l.b16 %v3821
    %v3886 = vunpack.c.h.b16 %v3821
    %v3887 = vunpack.c.l.b16 %v3822
    %v3888 = vunpack.c.h.b16 %v3822
    %v3889 = vunpack.c.l.b16 %v3823
    %v3890 = vunpack.c.h.b16 %v3823
    %v3891 = vunpack.c.l.b16 %v3824
    %v3892 = vunpack.c.h.b16 %v3824
    %v3893 = vunpack.c.l.b16 %v3825
    %v3894 = vunpack.c.h.b16 %v3825
    %v3895 = vunpack.c.l.b16 %v3826
    %v3896 = vunpack.c.h.b16 %v3826
    %v3897 = vunpack.c.l.b16 %v3827
    %v3898 = vunpack.c.h.b16 %v3827
    %v3899 = vunpack.c.l.b16 %v3828
    %v3900 = vunpack.c.h.b16 %v3828
    %v3901 = vunpack.c.l.b16 %v3829
    %v3902 = vunpack.c.h.b16 %v3829
    %v3903 = vunpack.c.l.b16 %v3830
    %v3904 = vunpack.c.h.b16 %v3830
    %v3905 = vunpack.c.l.b16 %v3831
    %v3906 = vunpack.c.h.b16 %v3831
    %v3907 = vunpack.c.l.b16 %v3832
    %v3908 = vunpack.c.h.b16 %v3832
    %v3909 = vunpack.c.l.b16 %v3833
    %v3910 = vunpack.c.h.b16 %v3833
    %v3911 = vunpack.c.l.b16 %v3834
    %v3912 = vunpack.c.h.b16 %v3834
    %v3913 = vunpack.c.l.b16 %v3835
    %v3914 = vunpack.c.h.b16 %v3835
    %v3915 = vunpack.c.l.b16 %v3836
    %v3916 = vunpack.c.h.b16 %v3836
    %v3917 = vunpack.c.l.b16 %v3837
    %v3918 = vunpack.c.h.b16 %v3837
    %v3919 = vunpack.c.l.b16 %v3838
    %v3920 = vunpack.c.h.b16 %v3838
    %v3921 = vunpack.c.l.b16 %v3839
    %v3922 = vunpack.c.h.b16 %v3839
    %v3923 = vunpack.c.l.b16 %v3840
    %v3924 = vunpack.c.h.b16 %v3840
    %v3925 = vunpack.c.l.b16 %v3841
    %v3926 = vunpack.c.h.b16 %v3841
    %v3927 = vunpack.c.l.b16 %v3842
    %v3928 = vunpack.c.h.b16 %v3842
    %v3929 = vunpack.c.l.b16 %v3843
    %v3930 = vunpack.c.h.b16 %v3843
    %v3931 = vunpack.c.l.b16 %v3844
    %v3932 = vunpack.c.h.b16 %v3844
    %v3933 = vunpack.c.l.b16 %v3845
    %v3934 = vunpack.c.h.b16 %v3845
    %v3935 = vunpack.c.l.b16 %v3846
    %v3936 = vunpack.c.h.b16 %v3846
    %v3937 = vunpack.c.l.b16 %v3847
    %v3938 = vunpack.c.h.b16 %v3847
    %v3939 = vunpack.c.l.b16 %v3848
    %v3940 = vunpack.c.h.b16 %v3848
    %v3941 = vunpack.c.l.b16 %v3849
    %v3942 = vunpack.c.h.b16 %v3849
    %v3943 = vunpack.c.l.b16 %v3850
    %v3944 = vunpack.c.h.b16 %v3850
    %v3945 = vunpack.c.l.b16 %v3851
    %v3946 = vunpack.c.h.b16 %v3851
    %v3947 = vunpack.c.l.b16 %v3852
    %v3948 = vunpack.c.h.b16 %v3852
    %v3949 = vpack.c.b16 %v3887, %v3885
    %v3950 = vpack.c.b16 %v3888, %v3886
    %v3951 = vpack.c.b16 %v3891, %v3889
    %v3952 = vpack.c.b16 %v3892, %v3890
    %v3953 = vpack.c.b16 %v3895, %v3893
    %v3954 = vpack.c.b16 %v3896, %v3894
    %v3955 = vpack.c.b16 %v3899, %v3897
    %v3956 = vpack.c.b16 %v3900, %v3898
    %v3957 = vpack.c.b16 %v3903, %v3901
    %v3958 = vpack.c.b16 %v3904, %v3902
    %v3959 = vpack.c.b16 %v3907, %v3905
    %v3960 = vpack.c.b16 %v3908, %v3906
    %v3961 = vpack.c.b16 %v3911, %v3909
    %v3962 = vpack.c.b16 %v3912, %v3910
    %v3963 = vpack.c.b16 %v3915, %v3913
    %v3964 = vpack.c.b16 %v3916, %v3914
    %v3965 = vpack.c.b16 %v3919, %v3917
    %v3966 = vpack.c.b16 %v3920, %v3918
    %v3967 = vpack.c.b16 %v3923, %v3921
    %v3968 = vpack.c.b16 %v3924, %v3922
    %v3969 = vpack.c.b16 %v3927, %v3925
    %v3970 = vpack.c.b16 %v3928, %v3926
    %v3971 = vpack.c.b16 %v3931, %v3929
    %v3972 = vpack.c.b16 %v3932, %v3930
    %v3973 = vpack.c.b16 %v3935, %v3933
    %v3974 = vpack.c.b16 %v3936, %v3934
    %v3975 = vpack.c.b16 %v3939, %v3937
    %v3976 = vpack.c.b16 %v3940, %v3938
    %v3977 = vpack.c.b16 %v3943, %v3941
    %v3978 = vpack.c.b16 %v3944, %v3942
    %v3979 = vpack.c.b16 %v3947, %v3945
    %v3980 = vpack.c.b16 %v3948, %v3946
    %4013 = vmatpush.bf16.msra.mxu0 %v2241
    %4014 = vmatpush.bf16.msra.mxu0 %v2240
    %4015 = vmatpush.bf16.msra.mxu0 %v2239
    %4016 = vmatpush.bf16.msra.mxu0 %v2238
    %4017 = vmatpush.bf16.msra.mxu0 %v2237
    %4018 = vmatpush.bf16.msra.mxu0 %v2236
    %4019 = vmatpush.bf16.msra.mxu0 %v2235
    %4020 = vmatpush.bf16.msra.mxu0 %v2234
    %4021 = vmatmul.bf16.gmra.mxu0 %v3949
    %v4022 = vpop.f32.mrf.mxu0
    %v4023 = vadd.f32 0.0, %v4022
    %v4024 = vpop.f32.mrf.mxu0
    %v4025 = vadd.f32 0.0, %v4024
    %4026 = vmatmul.bf16.gmra.mxu0 %v3951
    %v4027 = vpop.f32.mrf.mxu0
    %v4028 = vadd.f32 0.0, %v4027
    %v4029 = vpop.f32.mrf.mxu0
    %v4030 = vadd.f32 0.0, %v4029
    %4031 = vmatmul.bf16.gmra.mxu0 %v3953
    %v4032 = vpop.f32.mrf.mxu0
    %v4033 = vadd.f32 0.0, %v4032
    %v4034 = vpop.f32.mrf.mxu0
    %v4035 = vadd.f32 0.0, %v4034
    %4036 = vmatmul.bf16.gmra.mxu0 %v3955
    %v4037 = vpop.f32.mrf.mxu0
    %v4038 = vadd.f32 0.0, %v4037
    %v4039 = vpop.f32.mrf.mxu0
    %v4040 = vadd.f32 0.0, %v4039
    %4041 = vmatmul.bf16.gmra.mxu0 %v3957
    %v4042 = vpop.f32.mrf.mxu0
    %v4043 = vadd.f32 0.0, %v4042
    %v4044 = vpop.f32.mrf.mxu0
    %v4045 = vadd.f32 0.0, %v4044
    %4046 = vmatmul.bf16.gmra.mxu0 %v3959
    %v4047 = vpop.f32.mrf.mxu0
    %v4048 = vadd.f32 0.0, %v4047
    %v4049 = vpop.f32.mrf.mxu0
    %v4050 = vadd.f32 0.0, %v4049
    %4051 = vmatmul.bf16.gmra.mxu0 %v3961
    %v4052 = vpop.f32.mrf.mxu0
    %v4053 = vadd.f32 0.0, %v4052
    %v4054 = vpop.f32.mrf.mxu0
    %v4055 = vadd.f32 0.0, %v4054
    %4056 = vmatmul.bf16.gmra.mxu0 %v3963
    %v4057 = vpop.f32.mrf.mxu0
    %v4058 = vadd.f32 0.0, %v4057
    %v4059 = vpop.f32.mrf.mxu0
    %v4060 = vadd.f32 0.0, %v4059
    %4061 = vmatmul.bf16.gmra.mxu0 %v3965
    %v4062 = vpop.f32.mrf.mxu0
    %v4063 = vadd.f32 0.0, %v4062
    %v4064 = vpop.f32.mrf.mxu0
    %v4065 = vadd.f32 0.0, %v4064
    %4066 = vmatmul.bf16.gmra.mxu0 %v3967
    %v4067 = vpop.f32.mrf.mxu0
    %v4068 = vadd.f32 0.0, %v4067
    %v4069 = vpop.f32.mrf.mxu0
    %v4070 = vadd.f32 0.0, %v4069
    %4071 = vmatmul.bf16.gmra.mxu0 %v3969
    %v4072 = vpop.f32.mrf.mxu0
    %v4073 = vadd.f32 0.0, %v4072
    %v4074 = vpop.f32.mrf.mxu0
    %v4075 = vadd.f32 0.0, %v4074
    %4076 = vmatmul.bf16.gmra.mxu0 %v3971
    %v4077 = vpop.f32.mrf.mxu0
    %v4078 = vadd.f32 0.0, %v4077
    %v4079 = vpop.f32.mrf.mxu0
    %v4080 = vadd.f32 0.0, %v4079
    %4081 = vmatmul.bf16.gmra.mxu0 %v3973
    %v4082 = vpop.f32.mrf.mxu0
    %v4083 = vadd.f32 0.0, %v4082
    %v4084 = vpop.f32.mrf.mxu0
    %v4085 = vadd.f32 0.0, %v4084
    %4086 = vmatmul.bf16.gmra.mxu0 %v3975
    %v4087 = vpop.f32.mrf.mxu0
    %v4088 = vadd.f32 0.0, %v4087
    %v4089 = vpop.f32.mrf.mxu0
    %v4090 = vadd.f32 0.0, %v4089
    %4091 = vmatmul.bf16.gmra.mxu0 %v3977
    %v4092 = vpop.f32.mrf.mxu0
    %v4093 = vadd.f32 0.0, %v4092
    %v4094 = vpop.f32.mrf.mxu0
    %v4095 = vadd.f32 0.0, %v4094
    %4096 = vmatmul.bf16.gmra.mxu0 %v3979
    %v4097 = vpop.f32.mrf.mxu0
    %v4098 = vadd.f32 0.0, %v4097
    %v4099 = vpop.f32.mrf.mxu0
    %v4100 = vadd.f32 0.0, %v4099
    %4101 = vdwg.mxu0
    %4102 = vmatpush.bf16.msra.mxu0 %v2249
    %4103 = vmatpush.bf16.msra.mxu0 %v2248
    %4104 = vmatpush.bf16.msra.mxu0 %v2247
    %4105 = vmatpush.bf16.msra.mxu0 %v2246
    %4106 = vmatpush.bf16.msra.mxu0 %v2245
    %4107 = vmatpush.bf16.msra.mxu0 %v2244
    %4108 = vmatpush.bf16.msra.mxu0 %v2243
    %4109 = vmatpush.bf16.msra.mxu0 %v2242
    %4110 = vmatmul.bf16.gmra.mxu0 %v3950
    %v4111 = vpop.f32.mrf.mxu0
    %v4112 = vadd.f32 %v4023, %v4111
    %v4113 = vpop.f32.mrf.mxu0
    %v4114 = vadd.f32 %v4025, %v4113
    %4115 = vmatmul.bf16.gmra.mxu0 %v3952
    %v4116 = vpop.f32.mrf.mxu0
    %v4117 = vadd.f32 %v4028, %v4116
    %v4118 = vpop.f32.mrf.mxu0
    %v4119 = vadd.f32 %v4030, %v4118
    %4120 = vmatmul.bf16.gmra.mxu0 %v3954
    %v4121 = vpop.f32.mrf.mxu0
    %v4122 = vadd.f32 %v4033, %v4121
    %v4123 = vpop.f32.mrf.mxu0
    %v4124 = vadd.f32 %v4035, %v4123
    %4125 = vmatmul.bf16.gmra.mxu0 %v3956
    %v4126 = vpop.f32.mrf.mxu0
    %v4127 = vadd.f32 %v4038, %v4126
    %v4128 = vpop.f32.mrf.mxu0
    %v4129 = vadd.f32 %v4040, %v4128
    %4130 = vmatmul.bf16.gmra.mxu0 %v3958
    %v4131 = vpop.f32.mrf.mxu0
    %v4132 = vadd.f32 %v4043, %v4131
    %v4133 = vpop.f32.mrf.mxu0
    %v4134 = vadd.f32 %v4045, %v4133
    %4135 = vmatmul.bf16.gmra.mxu0 %v3960
    %v4136 = vpop.f32.mrf.mxu0
    %v4137 = vadd.f32 %v4048, %v4136
    %v4138 = vpop.f32.mrf.mxu0
    %v4139 = vadd.f32 %v4050, %v4138
    %4140 = vmatmul.bf16.gmra.mxu0 %v3962
    %v4141 = vpop.f32.mrf.mxu0
    %v4142 = vadd.f32 %v4053, %v4141
    %v4143 = vpop.f32.mrf.mxu0
    %v4144 = vadd.f32 %v4055, %v4143
    %4145 = vmatmul.bf16.gmra.mxu0 %v3964
    %v4146 = vpop.f32.mrf.mxu0
    %v4147 = vadd.f32 %v4058, %v4146
    %v4148 = vpop.f32.mrf.mxu0
    %v4149 = vadd.f32 %v4060, %v4148
    %4150 = vmatmul.bf16.gmra.mxu0 %v3966
    %v4151 = vpop.f32.mrf.mxu0
    %v4152 = vadd.f32 %v4063, %v4151
    %v4153 = vpop.f32.mrf.mxu0
    %v4154 = vadd.f32 %v4065, %v4153
    %4155 = vmatmul.bf16.gmra.mxu0 %v3968
    %v4156 = vpop.f32.mrf.mxu0
    %v4157 = vadd.f32 %v4068, %v4156
    %v4158 = vpop.f32.mrf.mxu0
    %v4159 = vadd.f32 %v4070, %v4158
    %4160 = vmatmul.bf16.gmra.mxu0 %v3970
    %v4161 = vpop.f32.mrf.mxu0
    %v4162 = vadd.f32 %v4073, %v4161
    %v4163 = vpop.f32.mrf.mxu0
    %v4164 = vadd.f32 %v4075, %v4163
    %4165 = vmatmul.bf16.gmra.mxu0 %v3972
    %v4166 = vpop.f32.mrf.mxu0
    %v4167 = vadd.f32 %v4078, %v4166
    %v4168 = vpop.f32.mrf.mxu0
    %v4169 = vadd.f32 %v4080, %v4168
    %4170 = vmatmul.bf16.gmra.mxu0 %v3974
    %v4171 = vpop.f32.mrf.mxu0
    %v4172 = vadd.f32 %v4083, %v4171
    %v4173 = vpop.f32.mrf.mxu0
    %v4174 = vadd.f32 %v4085, %v4173
    %4175 = vmatmul.bf16.gmra.mxu0 %v3976
    %v4176 = vpop.f32.mrf.mxu0
    %v4177 = vadd.f32 %v4088, %v4176
    %v4178 = vpop.f32.mrf.mxu0
    %v4179 = vadd.f32 %v4090, %v4178
    %4180 = vmatmul.bf16.gmra.mxu0 %v3978
    %v4181 = vpop.f32.mrf.mxu0
    %v4182 = vadd.f32 %v4093, %v4181
    %v4183 = vpop.f32.mrf.mxu0
    %v4184 = vadd.f32 %v4095, %v4183
    %4185 = vmatmul.bf16.gmra.mxu0 %v3980
    %v4186 = vpop.f32.mrf.mxu0
    %v4187 = vadd.f32 %v4098, %v4186
    %v4188 = vpop.f32.mrf.mxu0
    %v4189 = vadd.f32 %v4100, %v4188
    %4190 = vdwg.mxu0
    %v4223 = vunpack.c.l.b16 %v3789
    %v4224 = vunpack.c.h.b16 %v3789
    %v4225 = vunpack.c.l.b16 %v3790
    %v4226 = vunpack.c.h.b16 %v3790
    %v4227 = vunpack.c.l.b16 %v3791
    %v4228 = vunpack.c.h.b16 %v3791
    %v4229 = vunpack.c.l.b16 %v3792
    %v4230 = vunpack.c.h.b16 %v3792
    %v4231 = vunpack.c.l.b16 %v3793
    %v4232 = vunpack.c.h.b16 %v3793
    %v4233 = vunpack.c.l.b16 %v3794
    %v4234 = vunpack.c.h.b16 %v3794
    %v4235 = vunpack.c.l.b16 %v3795
    %v4236 = vunpack.c.h.b16 %v3795
    %v4237 = vunpack.c.l.b16 %v3796
    %v4238 = vunpack.c.h.b16 %v3796
    %v4239 = vunpack.c.l.b16 %v3797
    %v4240 = vunpack.c.h.b16 %v3797
    %v4241 = vunpack.c.l.b16 %v3798
    %v4242 = vunpack.c.h.b16 %v3798
    %v4243 = vunpack.c.l.b16 %v3799
    %v4244 = vunpack.c.h.b16 %v3799
    %v4245 = vunpack.c.l.b16 %v3800
    %v4246 = vunpack.c.h.b16 %v3800
    %v4247 = vunpack.c.l.b16 %v3801
    %v4248 = vunpack.c.h.b16 %v3801
    %v4249 = vunpack.c.l.b16 %v3802
    %v4250 = vunpack.c.h.b16 %v3802
    %v4251 = vunpack.c.l.b16 %v3803
    %v4252 = vunpack.c.h.b16 %v3803
    %v4253 = vunpack.c.l.b16 %v3804
    %v4254 = vunpack.c.h.b16 %v3804
    %v4255 = vunpack.c.l.b16 %v3805
    %v4256 = vunpack.c.h.b16 %v3805
    %v4257 = vunpack.c.l.b16 %v3806
    %v4258 = vunpack.c.h.b16 %v3806
    %v4259 = vunpack.c.l.b16 %v3807
    %v4260 = vunpack.c.h.b16 %v3807
    %v4261 = vunpack.c.l.b16 %v3808
    %v4262 = vunpack.c.h.b16 %v3808
    %v4263 = vunpack.c.l.b16 %v3809
    %v4264 = vunpack.c.h.b16 %v3809
    %v4265 = vunpack.c.l.b16 %v3810
    %v4266 = vunpack.c.h.b16 %v3810
    %v4267 = vunpack.c.l.b16 %v3811
    %v4268 = vunpack.c.h.b16 %v3811
    %v4269 = vunpack.c.l.b16 %v3812
    %v4270 = vunpack.c.h.b16 %v3812
    %v4271 = vunpack.c.l.b16 %v3813
    %v4272 = vunpack.c.h.b16 %v3813
    %v4273 = vunpack.c.l.b16 %v3814
    %v4274 = vunpack.c.h.b16 %v3814
    %v4275 = vunpack.c.l.b16 %v3815
    %v4276 = vunpack.c.h.b16 %v3815
    %v4277 = vunpack.c.l.b16 %v3816
    %v4278 = vunpack.c.h.b16 %v3816
    %v4279 = vunpack.c.l.b16 %v3817
    %v4280 = vunpack.c.h.b16 %v3817
    %v4281 = vunpack.c.l.b16 %v3818
    %v4282 = vunpack.c.h.b16 %v3818
    %v4283 = vunpack.c.l.b16 %v3819
    %v4284 = vunpack.c.h.b16 %v3819
    %v4285 = vunpack.c.l.b16 %v3820
    %v4286 = vunpack.c.h.b16 %v3820
    %v4287 = vpack.c.b16 %v4225, %v4223
    %v4288 = vpack.c.b16 %v4226, %v4224
    %v4289 = vpack.c.b16 %v4229, %v4227
    %v4290 = vpack.c.b16 %v4230, %v4228
    %v4291 = vpack.c.b16 %v4233, %v4231
    %v4292 = vpack.c.b16 %v4234, %v4232
    %v4293 = vpack.c.b16 %v4237, %v4235
    %v4294 = vpack.c.b16 %v4238, %v4236
    %v4295 = vpack.c.b16 %v4241, %v4239
    %v4296 = vpack.c.b16 %v4242, %v4240
    %v4297 = vpack.c.b16 %v4245, %v4243
    %v4298 = vpack.c.b16 %v4246, %v4244
    %v4299 = vpack.c.b16 %v4249, %v4247
    %v4300 = vpack.c.b16 %v4250, %v4248
    %v4301 = vpack.c.b16 %v4253, %v4251
    %v4302 = vpack.c.b16 %v4254, %v4252
    %v4303 = vpack.c.b16 %v4257, %v4255
    %v4304 = vpack.c.b16 %v4258, %v4256
    %v4305 = vpack.c.b16 %v4261, %v4259
    %v4306 = vpack.c.b16 %v4262, %v4260
    %v4307 = vpack.c.b16 %v4265, %v4263
    %v4308 = vpack.c.b16 %v4266, %v4264
    %v4309 = vpack.c.b16 %v4269, %v4267
    %v4310 = vpack.c.b16 %v4270, %v4268
    %v4311 = vpack.c.b16 %v4273, %v4271
    %v4312 = vpack.c.b16 %v4274, %v4272
    %v4313 = vpack.c.b16 %v4277, %v4275
    %v4314 = vpack.c.b16 %v4278, %v4276
    %v4315 = vpack.c.b16 %v4281, %v4279
    %v4316 = vpack.c.b16 %v4282, %v4280
    %v4317 = vpack.c.b16 %v4285, %v4283
    %v4318 = vpack.c.b16 %v4286, %v4284
    %4351 = vmatpush.bf16.msra.mxu0 %v3780
    %4352 = vmatpush.bf16.msra.mxu0 %v3779
    %4353 = vmatpush.bf16.msra.mxu0 %v3778
    %4354 = vmatpush.bf16.msra.mxu0 %v3777
    %4355 = vmatpush.bf16.msra.mxu0 %v3776
    %4356 = vmatpush.bf16.msra.mxu0 %v3775
    %4357 = vmatpush.bf16.msra.mxu0 %v3774
    %4358 = vmatpush.bf16.msra.mxu0 %v3773
    %4359 = vmatmul.bf16.gmra.mxu0 %v4287
    %v4360 = vpop.f32.mrf.mxu0
    %v4361 = vadd.f32 %v4112, %v4360
    %v4362 = vpop.f32.mrf.mxu0
    %v4363 = vadd.f32 %v4114, %v4362
    %4364 = vmatmul.bf16.gmra.mxu0 %v4289
    %v4365 = vpop.f32.mrf.mxu0
    %v4366 = vadd.f32 %v4117, %v4365
    %v4367 = vpop.f32.mrf.mxu0
    %v4368 = vadd.f32 %v4119, %v4367
    %4369 = vmatmul.bf16.gmra.mxu0 %v4291
    %v4370 = vpop.f32.mrf.mxu0
    %v4371 = vadd.f32 %v4122, %v4370
    %v4372 = vpop.f32.mrf.mxu0
    %v4373 = vadd.f32 %v4124, %v4372
    %4374 = vmatmul.bf16.gmra.mxu0 %v4293
    %v4375 = vpop.f32.mrf.mxu0
    %v4376 = vadd.f32 %v4127, %v4375
    %v4377 = vpop.f32.mrf.mxu0
    %v4378 = vadd.f32 %v4129, %v4377
    %4379 = vmatmul.bf16.gmra.mxu0 %v4295
    %v4380 = vpop.f32.mrf.mxu0
    %v4381 = vadd.f32 %v4132, %v4380
    %v4382 = vpop.f32.mrf.mxu0
    %v4383 = vadd.f32 %v4134, %v4382
    %4384 = vmatmul.bf16.gmra.mxu0 %v4297
    %v4385 = vpop.f32.mrf.mxu0
    %v4386 = vadd.f32 %v4137, %v4385
    %v4387 = vpop.f32.mrf.mxu0
    %v4388 = vadd.f32 %v4139, %v4387
    %4389 = vmatmul.bf16.gmra.mxu0 %v4299
    %v4390 = vpop.f32.mrf.mxu0
    %v4391 = vadd.f32 %v4142, %v4390
    %v4392 = vpop.f32.mrf.mxu0
    %v4393 = vadd.f32 %v4144, %v4392
    %4394 = vmatmul.bf16.gmra.mxu0 %v4301
    %v4395 = vpop.f32.mrf.mxu0
    %v4396 = vadd.f32 %v4147, %v4395
    %v4397 = vpop.f32.mrf.mxu0
    %v4398 = vadd.f32 %v4149, %v4397
    %4399 = vmatmul.bf16.gmra.mxu0 %v4303
    %v4400 = vpop.f32.mrf.mxu0
    %v4401 = vadd.f32 %v4152, %v4400
    %v4402 = vpop.f32.mrf.mxu0
    %v4403 = vadd.f32 %v4154, %v4402
    %4404 = vmatmul.bf16.gmra.mxu0 %v4305
    %v4405 = vpop.f32.mrf.mxu0
    %v4406 = vadd.f32 %v4157, %v4405
    %v4407 = vpop.f32.mrf.mxu0
    %v4408 = vadd.f32 %v4159, %v4407
    %4409 = vmatmul.bf16.gmra.mxu0 %v4307
    %v4410 = vpop.f32.mrf.mxu0
    %v4411 = vadd.f32 %v4162, %v4410
    %v4412 = vpop.f32.mrf.mxu0
    %v4413 = vadd.f32 %v4164, %v4412
    %4414 = vmatmul.bf16.gmra.mxu0 %v4309
    %v4415 = vpop.f32.mrf.mxu0
    %v4416 = vadd.f32 %v4167, %v4415
    %v4417 = vpop.f32.mrf.mxu0
    %v4418 = vadd.f32 %v4169, %v4417
    %4419 = vmatmul.bf16.gmra.mxu0 %v4311
    %v4420 = vpop.f32.mrf.mxu0
    %v4421 = vadd.f32 %v4172, %v4420
    %v4422 = vpop.f32.mrf.mxu0
    %v4423 = vadd.f32 %v4174, %v4422
    %4424 = vmatmul.bf16.gmra.mxu0 %v4313
    %v4425 = vpop.f32.mrf.mxu0
    %v4426 = vadd.f32 %v4177, %v4425
    %v4427 = vpop.f32.mrf.mxu0
    %v4428 = vadd.f32 %v4179, %v4427
    %4429 = vmatmul.bf16.gmra.mxu0 %v4315
    %v4430 = vpop.f32.mrf.mxu0
    %v4431 = vadd.f32 %v4182, %v4430
    %v4432 = vpop.f32.mrf.mxu0
    %v4433 = vadd.f32 %v4184, %v4432
    %4434 = vmatmul.bf16.gmra.mxu0 %v4317
    %v4435 = vpop.f32.mrf.mxu0
    %v4436 = vadd.f32 %v4187, %v4435
    %v4437 = vpop.f32.mrf.mxu0
    %v4438 = vadd.f32 %v4189, %v4437
    %4439 = vdwg.mxu0
    %4440 = vmatpush.bf16.msra.mxu0 %v3788
    %4441 = vmatpush.bf16.msra.mxu0 %v3787
    %4442 = vmatpush.bf16.msra.mxu0 %v3786
    %4443 = vmatpush.bf16.msra.mxu0 %v3785
    %4444 = vmatpush.bf16.msra.mxu0 %v3784
    %4445 = vmatpush.bf16.msra.mxu0 %v3783
    %4446 = vmatpush.bf16.msra.mxu0 %v3782
    %4447 = vmatpush.bf16.msra.mxu0 %v3781
    %4448 = vmatmul.bf16.gmra.mxu0 %v4288
    %v4449 = vpop.f32.mrf.mxu0
    %v4450 = vadd.f32 %v4361, %v4449
    %v4451 = vpop.f32.mrf.mxu0
    %v4452 = vadd.f32 %v4363, %v4451
    %4453 = vmatmul.bf16.gmra.mxu0 %v4290
    %v4454 = vpop.f32.mrf.mxu0
    %v4455 = vadd.f32 %v4366, %v4454
    %v4456 = vpop.f32.mrf.mxu0
    %v4457 = vadd.f32 %v4368, %v4456
    %4458 = vmatmul.bf16.gmra.mxu0 %v4292
    %v4459 = vpop.f32.mrf.mxu0
    %v4460 = vadd.f32 %v4371, %v4459
    %v4461 = vpop.f32.mrf.mxu0
    %v4462 = vadd.f32 %v4373, %v4461
    %4463 = vmatmul.bf16.gmra.mxu0 %v4294
    %v4464 = vpop.f32.mrf.mxu0
    %v4465 = vadd.f32 %v4376, %v4464
    %v4466 = vpop.f32.mrf.mxu0
    %v4467 = vadd.f32 %v4378, %v4466
    %4468 = vmatmul.bf16.gmra.mxu0 %v4296
    %v4469 = vpop.f32.mrf.mxu0
    %v4470 = vadd.f32 %v4381, %v4469
    %v4471 = vpop.f32.mrf.mxu0
    %v4472 = vadd.f32 %v4383, %v4471
    %4473 = vmatmul.bf16.gmra.mxu0 %v4298
    %v4474 = vpop.f32.mrf.mxu0
    %v4475 = vadd.f32 %v4386, %v4474
    %v4476 = vpop.f32.mrf.mxu0
    %v4477 = vadd.f32 %v4388, %v4476
    %4478 = vmatmul.bf16.gmra.mxu0 %v4300
    %v4479 = vpop.f32.mrf.mxu0
    %v4480 = vadd.f32 %v4391, %v4479
    %v4481 = vpop.f32.mrf.mxu0
    %v4482 = vadd.f32 %v4393, %v4481
    %4483 = vmatmul.bf16.gmra.mxu0 %v4302
    %v4484 = vpop.f32.mrf.mxu0
    %v4485 = vadd.f32 %v4396, %v4484
    %v4486 = vpop.f32.mrf.mxu0
    %v4487 = vadd.f32 %v4398, %v4486
    %4488 = vmatmul.bf16.gmra.mxu0 %v4304
    %v4489 = vpop.f32.mrf.mxu0
    %v4490 = vadd.f32 %v4401, %v4489
    %v4491 = vpop.f32.mrf.mxu0
    %v4492 = vadd.f32 %v4403, %v4491
    %4493 = vmatmul.bf16.gmra.mxu0 %v4306
    %v4494 = vpop.f32.mrf.mxu0
    %v4495 = vadd.f32 %v4406, %v4494
    %v4496 = vpop.f32.mrf.mxu0
    %v4497 = vadd.f32 %v4408, %v4496
    %4498 = vmatmul.bf16.gmra.mxu0 %v4308
    %v4499 = vpop.f32.mrf.mxu0
    %v4500 = vadd.f32 %v4411, %v4499
    %v4501 = vpop.f32.mrf.mxu0
    %v4502 = vadd.f32 %v4413, %v4501
    %4503 = vmatmul.bf16.gmra.mxu0 %v4310
    %v4504 = vpop.f32.mrf.mxu0
    %v4505 = vadd.f32 %v4416, %v4504
    %v4506 = vpop.f32.mrf.mxu0
    %v4507 = vadd.f32 %v4418, %v4506
    %4508 = vmatmul.bf16.gmra.mxu0 %v4312
    %v4509 = vpop.f32.mrf.mxu0
    %v4510 = vadd.f32 %v4421, %v4509
    %v4511 = vpop.f32.mrf.mxu0
    %v4512 = vadd.f32 %v4423, %v4511
    %4513 = vmatmul.bf16.gmra.mxu0 %v4314
    %v4514 = vpop.f32.mrf.mxu0
    %v4515 = vadd.f32 %v4426, %v4514
    %v4516 = vpop.f32.mrf.mxu0
    %v4517 = vadd.f32 %v4428, %v4516
    %4518 = vmatmul.bf16.gmra.mxu0 %v4316
    %v4519 = vpop.f32.mrf.mxu0
    %v4520 = vadd.f32 %v4431, %v4519
    %v4521 = vpop.f32.mrf.mxu0
    %v4522 = vadd.f32 %v4433, %v4521
    %4523 = vmatmul.bf16.gmra.mxu0 %v4318
    %v4524 = vpop.f32.mrf.mxu0
    %v4525 = vadd.f32 %v4436, %v4524
    %v4526 = vpop.f32.mrf.mxu0
    %v4527 = vadd.f32 %v4438, %v4526
    %4528 = vdwg.mxu0
    %v4529 = vld [vmem:[%s13] sm:$0xff]
    %v4530 = vld [vmem:[%s13 + $0x8] sm:$0xff]
    %v4531 = vld [vmem:[%s13 + $0x10] sm:$0xff]
    %v4532 = vld [vmem:[%s13 + $0x18] sm:$0xff]
    %v4533 = vld [vmem:[%s13 + $0x20] sm:$0xff]
    %v4534 = vld [vmem:[%s13 + $0x28] sm:$0xff]
    %v4535 = vld [vmem:[%s13 + $0x30] sm:$0xff]
    %v4536 = vld [vmem:[%s13 + $0x38] sm:$0xff]
    %v4537 = vld [vmem:[%s13 + $0x40] sm:$0xff]
    %v4538 = vld [vmem:[%s13 + $0x48] sm:$0xff]
    %v4539 = vld [vmem:[%s13 + $0x50] sm:$0xff]
    %v4540 = vld [vmem:[%s13 + $0x58] sm:$0xff]
    %v4541 = vld [vmem:[%s13 + $0x60] sm:$0xff]
    %v4542 = vld [vmem:[%s13 + $0x68] sm:$0xff]
    %v4543 = vld [vmem:[%s13 + $0x70] sm:$0xff]
    %v4544 = vld [vmem:[%s13 + $0x78] sm:$0xff]
    %v4545 = vld [vmem:[%s13 + $0x80] sm:$0xff]
    %v4546 = vld [vmem:[%s13 + $0x88] sm:$0xff]
    %v4547 = vld [vmem:[%s13 + $0x90] sm:$0xff]
    %v4548 = vld [vmem:[%s13 + $0x98] sm:$0xff]
    %v4549 = vld [vmem:[%s13 + $0xa0] sm:$0xff]
    %v4550 = vld [vmem:[%s13 + $0xa8] sm:$0xff]
    %v4551 = vld [vmem:[%s13 + $0xb0] sm:$0xff]
    %v4552 = vld [vmem:[%s13 + $0xb8] sm:$0xff]
    %v4553 = vld [vmem:[%s13 + $0xc0] sm:$0xff]
    %v4554 = vld [vmem:[%s13 + $0xc8] sm:$0xff]
    %v4555 = vld [vmem:[%s13 + $0xd0] sm:$0xff]
    %v4556 = vld [vmem:[%s13 + $0xd8] sm:$0xff]
    %v4557 = vld [vmem:[%s13 + $0xe0] sm:$0xff]
    %v4558 = vld [vmem:[%s13 + $0xe8] sm:$0xff]
    %v4559 = vld [vmem:[%s13 + $0xf0] sm:$0xff]
    %v4560 = vld [vmem:[%s13 + $0xf8] sm:$0xff]
    %4562 = vset.pattern.permute.xlu0 0
    %4563 = vperm.xlu0 %4562, %v4529
    %v4564 = vpop.permute.xlu0 %4563
    %4567 = vset.pattern.permute.xlu0 0
    %4568 = vperm.xlu0 %4567, %v4530
    %v4569 = vpop.permute.xlu0 %4568
    %4572 = vset.pattern.permute.xlu0 0
    %4573 = vperm.xlu0 %4572, %v4531
    %v4574 = vpop.permute.xlu0 %4573
    %4577 = vset.pattern.permute.xlu0 0
    %4578 = vperm.xlu0 %4577, %v4532
    %v4579 = vpop.permute.xlu0 %4578
    %4582 = vset.pattern.permute.xlu0 0
    %4583 = vperm.xlu0 %4582, %v4533
    %v4584 = vpop.permute.xlu0 %4583
    %4587 = vset.pattern.permute.xlu0 0
    %4588 = vperm.xlu0 %4587, %v4534
    %v4589 = vpop.permute.xlu0 %4588
    %4592 = vset.pattern.permute.xlu0 0
    %4593 = vperm.xlu0 %4592, %v4535
    %v4594 = vpop.permute.xlu0 %4593
    %4597 = vset.pattern.permute.xlu0 0
    %4598 = vperm.xlu0 %4597, %v4536
    %v4599 = vpop.permute.xlu0 %4598
    %4602 = vset.pattern.permute.xlu0 0
    %4603 = vperm.xlu0 %4602, %v4537
    %v4604 = vpop.permute.xlu0 %4603
    %4607 = vset.pattern.permute.xlu0 0
    %4608 = vperm.xlu0 %4607, %v4538
    %v4609 = vpop.permute.xlu0 %4608
    %4612 = vset.pattern.permute.xlu0 0
    %4613 = vperm.xlu0 %4612, %v4539
    %v4614 = vpop.permute.xlu0 %4613
    %4617 = vset.pattern.permute.xlu0 0
    %4618 = vperm.xlu0 %4617, %v4540
    %v4619 = vpop.permute.xlu0 %4618
    %4622 = vset.pattern.permute.xlu0 0
    %4623 = vperm.xlu0 %4622, %v4541
    %v4624 = vpop.permute.xlu0 %4623
    %4627 = vset.pattern.permute.xlu0 0
    %4628 = vperm.xlu0 %4627, %v4542
    %v4629 = vpop.permute.xlu0 %4628
    %4632 = vset.pattern.permute.xlu0 0
    %4633 = vperm.xlu0 %4632, %v4543
    %v4634 = vpop.permute.xlu0 %4633
    %4637 = vset.pattern.permute.xlu0 0
    %4638 = vperm.xlu0 %4637, %v4544
    %v4639 = vpop.permute.xlu0 %4638
    %4642 = vset.pattern.permute.xlu0 0
    %4643 = vperm.xlu0 %4642, %v4545
    %v4644 = vpop.permute.xlu0 %4643
    %4647 = vset.pattern.permute.xlu0 0
    %4648 = vperm.xlu0 %4647, %v4546
    %v4649 = vpop.permute.xlu0 %4648
    %4652 = vset.pattern.permute.xlu0 0
    %4653 = vperm.xlu0 %4652, %v4547
    %v4654 = vpop.permute.xlu0 %4653
    %4657 = vset.pattern.permute.xlu0 0
    %4658 = vperm.xlu0 %4657, %v4548
    %v4659 = vpop.permute.xlu0 %4658
    %4662 = vset.pattern.permute.xlu0 0
    %4663 = vperm.xlu0 %4662, %v4549
    %v4664 = vpop.permute.xlu0 %4663
    %4667 = vset.pattern.permute.xlu0 0
    %4668 = vperm.xlu0 %4667, %v4550
    %v4669 = vpop.permute.xlu0 %4668
    %4672 = vset.pattern.permute.xlu0 0
    %4673 = vperm.xlu0 %4672, %v4551
    %v4674 = vpop.permute.xlu0 %4673
    %4677 = vset.pattern.permute.xlu0 0
    %4678 = vperm.xlu0 %4677, %v4552
    %v4679 = vpop.permute.xlu0 %4678
    %4682 = vset.pattern.permute.xlu0 0
    %4683 = vperm.xlu0 %4682, %v4553
    %v4684 = vpop.permute.xlu0 %4683
    %4687 = vset.pattern.permute.xlu0 0
    %4688 = vperm.xlu0 %4687, %v4554
    %v4689 = vpop.permute.xlu0 %4688
    %4692 = vset.pattern.permute.xlu0 0
    %4693 = vperm.xlu0 %4692, %v4555
    %v4694 = vpop.permute.xlu0 %4693
    %4697 = vset.pattern.permute.xlu0 0
    %4698 = vperm.xlu0 %4697, %v4556
    %v4699 = vpop.permute.xlu0 %4698
    %4702 = vset.pattern.permute.xlu0 0
    %4703 = vperm.xlu0 %4702, %v4557
    %v4704 = vpop.permute.xlu0 %4703
    %4707 = vset.pattern.permute.xlu0 0
    %4708 = vperm.xlu0 %4707, %v4558
    %v4709 = vpop.permute.xlu0 %4708
    %4712 = vset.pattern.permute.xlu0 0
    %4713 = vperm.xlu0 %4712, %v4559
    %v4714 = vpop.permute.xlu0 %4713
    %4717 = vset.pattern.permute.xlu0 0
    %4718 = vperm.xlu0 %4717, %v4560
    %v4719 = vpop.permute.xlu0 %4718
    %v4721 = vadd.f32 %v4450, %v4564
    %v4722 = vadd.f32 %v4452, %v4569
    %v4723 = vadd.f32 %v4455, %v4574
    %v4724 = vadd.f32 %v4457, %v4579
    %v4725 = vadd.f32 %v4460, %v4584
    %v4726 = vadd.f32 %v4462, %v4589
    %v4727 = vadd.f32 %v4465, %v4594
    %v4728 = vadd.f32 %v4467, %v4599
    %v4729 = vadd.f32 %v4470, %v4604
    %v4730 = vadd.f32 %v4472, %v4609
    %v4731 = vadd.f32 %v4475, %v4614
    %v4732 = vadd.f32 %v4477, %v4619
    %v4733 = vadd.f32 %v4480, %v4624
    %v4734 = vadd.f32 %v4482, %v4629
    %v4735 = vadd.f32 %v4485, %v4634
    %v4736 = vadd.f32 %v4487, %v4639
    %v4737 = vadd.f32 %v4490, %v4644
    %v4738 = vadd.f32 %v4492, %v4649
    %v4739 = vadd.f32 %v4495, %v4654
    %v4740 = vadd.f32 %v4497, %v4659
    %v4741 = vadd.f32 %v4500, %v4664
    %v4742 = vadd.f32 %v4502, %v4669
    %v4743 = vadd.f32 %v4505, %v4674
    %v4744 = vadd.f32 %v4507, %v4679
    %v4745 = vadd.f32 %v4510, %v4684
    %v4746 = vadd.f32 %v4512, %v4689
    %v4747 = vadd.f32 %v4515, %v4694
    %v4748 = vadd.f32 %v4517, %v4699
    %v4749 = vadd.f32 %v4520, %v4704
    %v4750 = vadd.f32 %v4522, %v4709
    %v4751 = vadd.f32 %v4525, %v4714
    %v4752 = vadd.f32 %v4527, %v4719
    %v4753 = vmax.f32 %v4721, 0.0
    %v4754 = vmax.f32 %v4722, 0.0
    %v4755 = vmax.f32 %v4723, 0.0
    %v4756 = vmax.f32 %v4724, 0.0
    %v4757 = vmax.f32 %v4725, 0.0
    %v4758 = vmax.f32 %v4726, 0.0
    %v4759 = vmax.f32 %v4727, 0.0
    %v4760 = vmax.f32 %v4728, 0.0
    %v4761 = vmax.f32 %v4729, 0.0
    %v4762 = vmax.f32 %v4730, 0.0
    %v4763 = vmax.f32 %v4731, 0.0
    %v4764 = vmax.f32 %v4732, 0.0
    %v4765 = vmax.f32 %v4733, 0.0
    %v4766 = vmax.f32 %v4734, 0.0
    %v4767 = vmax.f32 %v4735, 0.0
    %v4768 = vmax.f32 %v4736, 0.0
    %v4769 = vmax.f32 %v4737, 0.0
    %v4770 = vmax.f32 %v4738, 0.0
    %v4771 = vmax.f32 %v4739, 0.0
    %v4772 = vmax.f32 %v4740, 0.0
    %v4773 = vmax.f32 %v4741, 0.0
    %v4774 = vmax.f32 %v4742, 0.0
    %v4775 = vmax.f32 %v4743, 0.0
    %v4776 = vmax.f32 %v4744, 0.0
    %v4777 = vmax.f32 %v4745, 0.0
    %v4778 = vmax.f32 %v4746, 0.0
    %v4779 = vmax.f32 %v4747, 0.0
    %v4780 = vmax.f32 %v4748, 0.0
    %v4781 = vmax.f32 %v4749, 0.0
    %v4782 = vmax.f32 %v4750, 0.0
    %v4783 = vmax.f32 %v4751, 0.0
    %v4784 = vmax.f32 %v4752, 0.0
    %v4785 = vpack.c.bf16 %v4754, %v4753
    %v4786 = vpack.c.bf16 %v4756, %v4755
    %v4787 = vpack.c.bf16 %v4758, %v4757
    %v4788 = vpack.c.bf16 %v4760, %v4759
    %v4789 = vpack.c.bf16 %v4762, %v4761
    %v4790 = vpack.c.bf16 %v4764, %v4763
    %v4791 = vpack.c.bf16 %v4766, %v4765
    %v4792 = vpack.c.bf16 %v4768, %v4767
    %v4793 = vpack.c.bf16 %v4770, %v4769
    %v4794 = vpack.c.bf16 %v4772, %v4771
    %v4795 = vpack.c.bf16 %v4774, %v4773
    %v4796 = vpack.c.bf16 %v4776, %v4775
    %v4797 = vpack.c.bf16 %v4778, %v4777
    %v4798 = vpack.c.bf16 %v4780, %v4779
    %v4799 = vpack.c.bf16 %v4782, %v4781
    %v4800 = vpack.c.bf16 %v4784, %v4783
    %v4801 = vld [vmem:[%s14] sm:$0xff]
    %v4802 = vld [vmem:[%s14 + $0x8] sm:$0xff]
    %v4803 = vld [vmem:[%s14 + $0x10] sm:$0xff]
    %v4804 = vld [vmem:[%s14 + $0x18] sm:$0xff]
    %v4805 = vld [vmem:[%s14 + $0x20] sm:$0xff]
    %v4806 = vld [vmem:[%s14 + $0x28] sm:$0xff]
    %v4807 = vld [vmem:[%s14 + $0x30] sm:$0xff]
    %v4808 = vld [vmem:[%s14 + $0x38] sm:$0xff]
    %v4809 = vld [vmem:[%s15] sm:$0xff]
    %v4810 = vld [vmem:[%s15 + $0x8] sm:$0xff]
    %v4811 = vld [vmem:[%s15 + $0x10] sm:$0xff]
    %v4812 = vld [vmem:[%s15 + $0x18] sm:$0xff]
    %v4813 = vld [vmem:[%s15 + $0x20] sm:$0xff]
    %v4814 = vld [vmem:[%s15 + $0x28] sm:$0xff]
    %v4815 = vld [vmem:[%s15 + $0x30] sm:$0xff]
    %v4816 = vld [vmem:[%s15 + $0x38] sm:$0xff]
    %4818 = vset.pattern.permute.xlu0 0
    %4819 = vperm.xlu0 %4818, %v4809
    %v4820 = vpop.permute.xlu0 %4819
    %4823 = vset.pattern.permute.xlu0 0
    %4824 = vperm.xlu0 %4823, %v4810
    %v4825 = vpop.permute.xlu0 %4824
    %4828 = vset.pattern.permute.xlu0 0
    %4829 = vperm.xlu0 %4828, %v4811
    %v4830 = vpop.permute.xlu0 %4829
    %4833 = vset.pattern.permute.xlu0 0
    %4834 = vperm.xlu0 %4833, %v4812
    %v4835 = vpop.permute.xlu0 %4834
    %4838 = vset.pattern.permute.xlu0 0
    %4839 = vperm.xlu0 %4838, %v4813
    %v4840 = vpop.permute.xlu0 %4839
    %4843 = vset.pattern.permute.xlu0 0
    %4844 = vperm.xlu0 %4843, %v4814
    %v4845 = vpop.permute.xlu0 %4844
    %4848 = vset.pattern.permute.xlu0 0
    %4849 = vperm.xlu0 %4848, %v4815
    %v4850 = vpop.permute.xlu0 %4849
    %4853 = vset.pattern.permute.xlu0 0
    %4854 = vperm.xlu0 %4853, %v4816
    %v4855 = vpop.permute.xlu0 %4854
    %v4865 = vunpack.c.l.b16 %v4801
    %v4866 = vunpack.c.h.b16 %v4801
    %v4867 = vunpack.c.l.b16 %v4802
    %v4868 = vunpack.c.h.b16 %v4802
    %v4869 = vunpack.c.l.b16 %v4803
    %v4870 = vunpack.c.h.b16 %v4803
    %v4871 = vunpack.c.l.b16 %v4804
    %v4872 = vunpack.c.h.b16 %v4804
    %v4873 = vunpack.c.l.b16 %v4805
    %v4874 = vunpack.c.h.b16 %v4805
    %v4875 = vunpack.c.l.b16 %v4806
    %v4876 = vunpack.c.h.b16 %v4806
    %v4877 = vunpack.c.l.b16 %v4807
    %v4878 = vunpack.c.h.b16 %v4807
    %v4879 = vunpack.c.l.b16 %v4808
    %v4880 = vunpack.c.h.b16 %v4808
    %v4881 = vpack.c.b16 %v4867, %v4865
    %v4882 = vpack.c.b16 %v4868, %v4866
    %v4883 = vpack.c.b16 %v4871, %v4869
    %v4884 = vpack.c.b16 %v4872, %v4870
    %v4885 = vpack.c.b16 %v4875, %v4873
    %v4886 = vpack.c.b16 %v4876, %v4874
    %v4887 = vpack.c.b16 %v4879, %v4877
    %v4888 = vpack.c.b16 %v4880, %v4878
    %4897 = vmatpush.bf16.msra.mxu0 %v4792
    %4898 = vmatpush.bf16.msra.mxu0 %v4791
    %4899 = vmatpush.bf16.msra.mxu0 %v4790
    %4900 = vmatpush.bf16.msra.mxu0 %v4789
    %4901 = vmatpush.bf16.msra.mxu0 %v4788
    %4902 = vmatpush.bf16.msra.mxu0 %v4787
    %4903 = vmatpush.bf16.msra.mxu0 %v4786
    %4904 = vmatpush.bf16.msra.mxu0 %v4785
    %4905 = vmatmul.bf16.gmra.mxu0 %v4881
    %v4906 = vpop.f32.mrf.mxu0
    %v4907 = vadd.f32 %v4820, %v4906
    %v4908 = vpop.f32.mrf.mxu0
    %v4909 = vadd.f32 %v4825, %v4908
    %4910 = vmatmul.bf16.gmra.mxu0 %v4883
    %v4911 = vpop.f32.mrf.mxu0
    %v4912 = vadd.f32 %v4830, %v4911
    %v4913 = vpop.f32.mrf.mxu0
    %v4914 = vadd.f32 %v4835, %v4913
    %4915 = vmatmul.bf16.gmra.mxu0 %v4885
    %v4916 = vpop.f32.mrf.mxu0
    %v4917 = vadd.f32 %v4840, %v4916
    %v4918 = vpop.f32.mrf.mxu0
    %v4919 = vadd.f32 %v4845, %v4918
    %4920 = vmatmul.bf16.gmra.mxu0 %v4887
    %v4921 = vpop.f32.mrf.mxu0
    %v4922 = vadd.f32 %v4850, %v4921
    %v4923 = vpop.f32.mrf.mxu0
    %v4924 = vadd.f32 %v4855, %v4923
    %4925 = vdwg.mxu0
    %4926 = vmatpush.bf16.msra.mxu0 %v4800
    %4927 = vmatpush.bf16.msra.mxu0 %v4799
    %4928 = vmatpush.bf16.msra.mxu0 %v4798
    %4929 = vmatpush.bf16.msra.mxu0 %v4797
    %4930 = vmatpush.bf16.msra.mxu0 %v4796
    %4931 = vmatpush.bf16.msra.mxu0 %v4795
    %4932 = vmatpush.bf16.msra.mxu0 %v4794
    %4933 = vmatpush.bf16.msra.mxu0 %v4793
    %4934 = vmatmul.bf16.gmra.mxu0 %v4882
    %v4935 = vpop.f32.mrf.mxu0
    %v4936 = vadd.f32 %v4907, %v4935
    %v4937 = vpop.f32.mrf.mxu0
    %v4938 = vadd.f32 %v4909, %v4937
    %4939 = vmatmul.bf16.gmra.mxu0 %v4884
    %v4940 = vpop.f32.mrf.mxu0
    %v4941 = vadd.f32 %v4912, %v4940
    %v4942 = vpop.f32.mrf.mxu0
    %v4943 = vadd.f32 %v4914, %v4942
    %4944 = vmatmul.bf16.gmra.mxu0 %v4886
    %v4945 = vpop.f32.mrf.mxu0
    %v4946 = vadd.f32 %v4917, %v4945
    %v4947 = vpop.f32.mrf.mxu0
    %v4948 = vadd.f32 %v4919, %v4947
    %4949 = vmatmul.bf16.gmra.mxu0 %v4888
    %v4950 = vpop.f32.mrf.mxu0
    %v4951 = vadd.f32 %v4922, %v4950
    %v4952 = vpop.f32.mrf.mxu0
    %v4953 = vadd.f32 %v4924, %v4952
    %4954 = vdwg.mxu0
    %v4955 = vmax.f32 %v4936, 0.0
    %v4956 = vmax.f32 %v4938, 0.0
    %v4957 = vmax.f32 %v4941, 0.0
    %v4958 = vmax.f32 %v4943, 0.0
    %v4959 = vmax.f32 %v4946, 0.0
    %v4960 = vmax.f32 %v4948, 0.0
    %v4961 = vmax.f32 %v4951, 0.0
    %v4962 = vmax.f32 %v4953, 0.0
    %v4963 = vpack.c.bf16 %v4956, %v4955
    %v4964 = vpack.c.bf16 %v4958, %v4957
    %v4965 = vpack.c.bf16 %v4960, %v4959
    %v4966 = vpack.c.bf16 %v4962, %v4961
    %v4967 = vld [vmem:[%s16] sm:$0x1]
    %v4968 = vld [vmem:[%s17] sm:$0x3]
    %4970 = vset.pattern.permute.xlu0 0
    %4971 = vperm.xlu0 %4970, %v4968
    %v4972 = vpop.permute.xlu0 %4971
    %v4975 = vsel %vm3740, %v4967, 0
    %4977 = vmatpush.bf16.msra.mxu0 0
    %4978 = vmatpush.bf16.msra.mxu0 0
    %4979 = vmatpush.bf16.msra.mxu0 0
    %4980 = vmatpush.bf16.msra.mxu0 0
    %4981 = vmatpush.bf16.msra.mxu0 %v4966
    %4982 = vmatpush.bf16.msra.mxu0 %v4965
    %4983 = vmatpush.bf16.msra.mxu0 %v4964
    %4984 = vmatpush.bf16.msra.mxu0 %v4963
    %4985 = vmatmul.bf16.gmra.mxu0 %v4975
    %v4986 = vpop.f32.mrf.mxu0
    %v4987 = vadd.f32 %v4972, %v4986
    %v4988 = vpop.f32.mrf.mxu0
    %4989 = vdwg.mxu0
    %4990 = vst [vmem:[#allocation2] sm:$0x3] %v4987
    // Predicated region
    $region74: #{tpu_custom_call.1} parent=1 // pred_check
      _
    $region75: #{tpu_custom_call.1} parent=1 // pred_check_branch
      %4992 = sbr.rel (0) target = $region77
    $region76: #{tpu_custom_call.1} parent=1 // pred_region
      %4994 = vsyncadd [#allocation3], 0
      %s4996 = sshll.u32 [#allocation2], 4
      %s4997 = int_to_ptr.vmem [resolvable:$true] %s4996
      %s4998 = sshll.u32 %s18, 4
      %s4999 = int_to_ptr.hbm [resolvable:$true] %s4998
      %5001 = dma.vmem_to_hbm [thread:$0]  %s4997, 32, %s4999, [#allocation3]
    $region77: #{tpu_custom_call.1} parent=1 // pred_fallthru
      _
    // Predicated region
    $region78: #{tpu_custom_call.1} parent=1 // pred_check
      _
    $region79: #{tpu_custom_call.1} parent=1 // pred_check_branch
      %5003 = sbr.rel (0) target = $region81
    $region80: #{tpu_custom_call.1} parent=1 // pred_region
      %5005 = dma.done [#allocation3], 32
    $region81: #{tpu_custom_call.1} parent=1 // pred_fallthru
      _
    %5006 = vsyncpa [#allocation3], 1

</llo_original>
